<compile_context>
chip_gen: v7x
topology: tpu7x:2x2x1
jax: 0.10.0
libtpu: 0.0.40
codegen_flags: <defaults>
</compile_context>

<pallas_src>
import numpy as np
import jax
import jax.numpy as jnp
from jax import lax
from jax.experimental import pallas as pl
from jax.experimental.pallas import tpu as pltpu

# ---------------------------------------------------------------------------
# static geometry (the fc1 16*5*5 view forces a 3x32x32 input)
# ---------------------------------------------------------------------------
_K = 5                      # conv kernel size
_BL = 128                   # batch tile on the lane axis

_H = 32
_RW0 = _H * 3               # 96   input row width (w, ci flattened, NHWC order)
_NX = _H * _RW0             # 3072 input feature rows per example

_WO1 = 28                   # conv1 output height/width
_K1 = _K * _RW0             # 480  conv1 Toeplitz contraction (5 input rows)
_RW1 = 6 * _WO1             # 168  conv1 output row width (row = co*28 + wo)
_NC1 = _WO1 * _RW1          # 4704 conv1 output rows
_NP1 = (_WO1 - 1) * _RW1    # 4536 pool1 (un-compacted) rows

_WO2 = 10                   # conv2 output height/width
_K2 = 9 * _RW1              # 1512 conv2 Toeplitz contraction (spans 4 pooled-row strides + 1 row)
_RW2 = 16 * _WO2            # 160  conv2 output row width (row = co*10 + qo)
_NC2 = _WO2 * _RW2          # 1600 conv2 output rows
_NP2 = (_WO2 - 1) * _RW2    # 1440 pool2 (un-compacted) rows


def _lenet_kernel(x_ref, w1_ref, b1_ref, w2_ref, b2_ref,
                  wf1_ref, bf1_ref, wf2_ref, bf2_ref, wf3_ref, bf3_ref,
                  o_ref, c1_ref, p1_ref, c2_ref, p2_ref):
    f32 = jnp.float32
    bf16 = jnp.bfloat16

    # ---- conv1 + relu: one (168,480)@(480,128) matmul per output image row ----------------
    def conv1_row(ho, carry):
        src = x_ref[pl.ds(pl.multiple_of(ho * _RW0, 32), _K1), :]            # (480, B) bf16
        acc = jnp.dot(w1_ref[...], src, preferred_element_type=f32)          # (168, B) f32
        c1_ref[pl.ds(pl.multiple_of(ho * _RW1, 8), _RW1), :] = jnp.maximum(acc + b1_ref[...], 0.0)
        return carry
    lax.fori_loop(0, _WO1, conv1_row, 0)

    # zero the 8 scratch pad rows that the last pool1 chunk reads (keeps everything finite;
    # the derived pooled entry is never consumed by a nonzero conv2 weight anyway)
    c1_ref[pl.ds(_NC1, 8), :] = jnp.zeros((8, _BL), f32)

    # ---- maxpool 2x2/2: elementwise max of 4 row-shifted slabs, one chunk per image row ---
    def pool1_chunk(i, carry):
        r0 = pl.multiple_of(i * _RW1, 8)
        m = jnp.maximum(c1_ref[pl.ds(r0, _RW1), :], c1_ref[pl.ds(r0 + 1, _RW1), :])
        m = jnp.maximum(m, c1_ref[pl.ds(r0 + _RW1, _RW1), :])
        m = jnp.maximum(m, c1_ref[pl.ds(r0 + _RW1 + 1, _RW1), :])
        p1_ref[pl.ds(r0, _RW1), :] = m.astype(bf16)
        return carry
    lax.fori_loop(0, _NP1 // _RW1, pool1_chunk, 0)

    # ---- conv2 + relu: one (160,1512)@(1512,128) matmul per output row --------------------
    # (reads the un-compacted pool1 slab; invalid slab entries hit zero columns of w2)
    def conv2_row(po, carry):
        src = p1_ref[pl.ds(pl.multiple_of(po * 2 * _RW1, 16), _K2), :]        # (1512, B) bf16
        acc = jnp.dot(w2_ref[...], src, preferred_element_type=f32)           # (160, B) f32
        c2_ref[pl.ds(pl.multiple_of(po * _RW2, 32), _RW2), :] = jnp.maximum(acc + b2_ref[...], 0.0)
        return carry
    lax.fori_loop(0, _WO2, conv2_row, 0)

    c2_ref[pl.ds(_NC2, 8), :] = jnp.zeros((8, _BL), f32)

    # ---- maxpool 2x2/2 ---------------------------------------------------------------------
    def pool2_chunk(i, carry):
        r0 = pl.multiple_of(i * _RW2, 32)
        m = jnp.maximum(c2_ref[pl.ds(r0, _RW2), :], c2_ref[pl.ds(r0 + 1, _RW2), :])
        m = jnp.maximum(m, c2_ref[pl.ds(r0 + _RW2, _RW2), :])
        m = jnp.maximum(m, c2_ref[pl.ds(r0 + _RW2 + 1, _RW2), :])
        p2_ref[pl.ds(r0, _RW2), :] = m.astype(bf16)
        return carry
    lax.fori_loop(0, _NP2 // _RW2, pool2_chunk, 0)

    # ---- fused fc head: (120,1440)@(1440,B) -> relu -> (84,120) -> relu -> (10,84) ---------
    h = jnp.dot(wf1_ref[...], p2_ref[...], preferred_element_type=f32) + bf1_ref[...]
    h = jnp.maximum(h, 0.0)
    h = jnp.dot(wf2_ref[...], h.astype(bf16), preferred_element_type=f32) + bf2_ref[...]
    h = jnp.maximum(h, 0.0)
    o_ref[...] = jnp.dot(wf3_ref[...], h.astype(bf16), preferred_element_type=f32) + bf3_ref[...]


def prepare_params(p):
    """One-time re-layout of PyTorch-layout params into kernel-ready (bf16) matmul weights.

    Conv weights become row-Toeplitz matrices (zeros outside the 5x5 window); fc1 absorbs both
    torch's (C,H,W) flatten order and the addressing of valid entries inside the un-compacted
    pooled slab.  Biases stay f32 column vectors broadcast over the batch lanes.
    """
    w1 = np.asarray(p["conv1_w"], np.float32)      # (6, 3, 5, 5)
    w2 = np.asarray(p["conv2_w"], np.float32)      # (16, 6, 5, 5)
    f1 = np.asarray(p["fc1_w"], np.float32)        # (120, 400)

    # conv1: output row g = co*28 + wo ; contraction k = kh*96 + (wo+kw)*3 + ci
    W1 = np.zeros((_RW1, _K1), np.float32)
    wo = np.arange(_WO1)
    for co in range(6):
        for ci in range(3):
            for kh in range(_K):
                for kw in range(_K):
                    W1[co * _WO1 + wo, kh * _RW0 + (wo + kw) * 3 + ci] = w1[co, ci, kh, kw]

    # conv2 reads the un-compacted pool1 slab: pooled (ci, p, q) lives at slab row
    # 2*p*168 + ci*28 + 2*q.  output row g = co*10 + qo ; contraction k = 2*kh*168 + ci*28 + 2*(qo+kw)
    W2 = np.zeros((_RW2, _K2), np.float32)
    qo = np.arange(_WO2)
    for co in range(16):
        for ci in range(6):
            for kh in range(_K):
                for kw in range(_K):
                    W2[co * _WO2 + qo, 2 * kh * _RW1 + ci * _WO1 + 2 * (qo + kw)] = w2[co, ci, kh, kw]

    # fc1 reads the un-compacted pool2 slab: pooled (c, p, q) lives at row 2*p*160 + c*10 + 2*q;
    # torch's x.view(-1, 400) feature order is (c, p, q).
    WF1 = np.zeros((120, _NP2), np.float32)
    c, pp, qq = np.meshgrid(np.arange(16), np.arange(5), np.arange(5), indexing="ij")
    src = (c * 25 + pp * 5 + qq).ravel()
    dst = (2 * pp * _RW2 + c * _WO2 + 2 * qq).ravel()
    WF1[:, dst] = f1[:, src]

    bf16, f32 = jnp.bfloat16, jnp.float32
    col = lambda a: jnp.asarray(np.asarray(a, np.float32).reshape(-1, 1), f32)
    return {
        "w1": jnp.asarray(W1, bf16),
        "b1": col(np.repeat(np.asarray(p["conv1_b"], np.float32), _WO1)),
        "w2": jnp.asarray(W2, bf16),
        "b2": col(np.repeat(np.asarray(p["conv2_b"], np.float32), _WO2)),
        "wf1": jnp.asarray(WF1, bf16),
        "bf1": col(p["fc1_b"]),
        "wf2": jnp.asarray(np.asarray(p["fc2_w"], np.float32), bf16),
        "bf2": col(p["fc2_b"]),
        "wf3": jnp.asarray(np.asarray(p["fc3_w"], np.float32), bf16),
        "bf3": col(p["fc3_b"]),
    }


def model_forward(x_nchw, kp):
    """Reproduces Model.forward.  x: (B, 3, 32, 32) float32 -> (B, 10) float32."""
    B, C, H, W = x_nchw.shape
    assert (C, H, W) == (3, 32, 32), "LeNet head requires 3x32x32 input"
    G = (B + _BL - 1) // _BL
    Bp = G * _BL

    # layout glue (outside the kernel): NCHW -> NHWC-flattened, pad the batch to the lane tile,
    # put the batch tile on the trailing (lane) axis -> one contiguous (3072, 128) block per step.
    x_rows = jnp.transpose(x_nchw, (0, 2, 3, 1)).reshape(B, _NX).astype(jnp.float32)
    x_rows = jnp.pad(x_rows, ((0, Bp - B), (0, 0)))
    x_lanes = jnp.transpose(x_rows.reshape(G, _BL, _NX), (0, 2, 1)).astype(jnp.bfloat16)

    const = lambda g: (0, 0)
    out = pl.pallas_call(
        _lenet_kernel,
        out_shape=jax.ShapeDtypeStruct((G, 10, _BL), jnp.float32),
        grid=(G,),
        in_specs=[
            pl.BlockSpec((None, _NX, _BL), lambda g: (g, 0, 0)),   # per-tile input slab (bf16)
            pl.BlockSpec((_RW1, _K1), const),                      # conv1 Toeplitz weight
            pl.BlockSpec((_RW1, 1), const),                        # conv1 bias (per output row)
            pl.BlockSpec((_RW2, _K2), const),                      # conv2 Toeplitz weight
            pl.BlockSpec((_RW2, 1), const),                        # conv2 bias
            pl.BlockSpec((120, _NP2), const),                      # fc1 weight (pool2-addressed)
            pl.BlockSpec((120, 1), const),                         # fc1 bias
            pl.BlockSpec((84, 120), const),                        # fc2 weight
            pl.BlockSpec((84, 1), const),                          # fc2 bias
            pl.BlockSpec((10, 84), const),                         # fc3 weight
            pl.BlockSpec((10, 1), const),                          # fc3 bias
        ],
        out_specs=pl.BlockSpec((None, 10, _BL), lambda g: (g, 0, 0)),
        scratch_shapes=[
            pltpu.VMEM((_NC1 + 8, _BL), jnp.float32),    # conv1 output slab (+8 pad rows)
            pltpu.VMEM((_NP1, _BL), jnp.bfloat16),       # pool1 slab (un-compacted)
            pltpu.VMEM((_NC2 + 8, _BL), jnp.float32),    # conv2 output slab (+8 pad rows)
            pltpu.VMEM((_NP2, _BL), jnp.bfloat16),       # pool2 slab (un-compacted)
        ],
        compiler_params=pltpu.CompilerParams(
            dimension_semantics=("parallel",),
            vmem_limit_bytes=32 * 1024 * 1024,
        ),
    )(x_lanes, kp["w1"], kp["b1"], kp["w2"], kp["b2"],
      kp["wf1"], kp["bf1"], kp["wf2"], kp["bf2"], kp["wf3"], kp["bf3"])

    logits = jnp.transpose(out, (0, 2, 1)).reshape(Bp, 10)
    return logits[:B]


def init_params(key):
    ks = jax.random.split(key, 10)

    def dense(k, shape, fan_in):
        return jax.random.normal(k, shape, jnp.float32) / jnp.sqrt(jnp.float32(fan_in))

    return {
        "conv1_w": dense(ks[0], (6, 3, 5, 5), 3 * 5 * 5),
        "conv1_b": dense(ks[1], (6,), 3 * 5 * 5),
        "conv2_w": dense(ks[2], (16, 6, 5, 5), 6 * 5 * 5),
        "conv2_b": dense(ks[3], (16,), 6 * 5 * 5),
        "fc1_w": dense(ks[4], (120, 400), 400),
        "fc1_b": dense(ks[5], (120,), 400),
        "fc2_w": dense(ks[6], (84, 120), 120),
        "fc2_b": dense(ks[7], (84,), 120),
        "fc3_w": dense(ks[8], (10, 84), 84),
        "fc3_b": dense(ks[9], (10,), 84),
    }


def _reference_forward(x_nchw, p):
    """Pure-XLA reference (same math as the PyTorch Model), used only for the self-check."""
    hi = jax.lax.Precision.HIGHEST
    x = jnp.transpose(x_nchw, (0, 2, 3, 1))

    def conv(x, w, b):
        y = jax.lax.conv_general_dilated(
            x, jnp.transpose(w, (2, 3, 1, 0)), (1, 1), "VALID",
            dimension_numbers=("NHWC", "HWIO", "NHWC"), precision=hi)
        return jax.nn.relu(y + b)

    def pool(x):
        B, H, W, C = x.shape
        return x.reshape(B, H // 2, 2, W // 2, 2, C).max(axis=(2, 4))

    x = pool(conv(x, p["conv1_w"], p["conv1_b"]))
    x = pool(conv(x, p["conv2_w"], p["conv2_b"]))
    x = jnp.transpose(x, (0, 3, 1, 2)).reshape(x.shape[0], 16 * 5 * 5)
    x = jax.nn.relu(jnp.dot(x, p["fc1_w"].T, precision=hi) + p["fc1_b"])
    x = jax.nn.relu(jnp.dot(x, p["fc2_w"].T, precision=hi) + p["fc2_b"])
    return jnp.dot(x, p["fc3_w"].T, precision=hi) + p["fc3_b"]


if __name__ == "__main__":
    key = jax.random.PRNGKey(0)
    k_x, k_p = jax.random.split(key)
    # batch=2, CIFAR-sized input (the 16*5*5 fc1 view forces 3x32x32)
    x = jax.random.normal(k_x, (2, 3, 32, 32), jnp.float32)
    params = init_params(k_p)
    kparams = prepare_params(params)          # one-time weight re-layout, outside the hot path

    out = jax.block_until_ready(jax.jit(model_forward)(x, kparams))

    assert out.shape == (2, 10), out.shape
    assert bool(jnp.all(jnp.isfinite(out)))

    ref = _reference_forward(x, params)
    max_err = float(jnp.max(jnp.abs(out - ref)))
    # bf16 MXU operands (per perf review) with f32 accumulation: abs error stays well below this.
    assert max_err < 1e-1, f"mismatch vs XLA reference: max |diff| = {max_err}"

    print("KERNEL_OK")
</pallas_src>

<mosaic_0001>
module attributes {stable_mosaic.version = 11 : i64} {
  func.func @_lenet_kernel(%arg0: i32, %arg1: memref<1x3072x128xbf16, #tpu.memory_space<vmem>>, %arg2: memref<168x480xbf16, #tpu.memory_space<vmem>>, %arg3: memref<168x1xf32, #tpu.memory_space<vmem>>, %arg4: memref<160x1512xbf16, #tpu.memory_space<vmem>>, %arg5: memref<160x1xf32, #tpu.memory_space<vmem>>, %arg6: memref<120x1440xbf16, #tpu.memory_space<vmem>>, %arg7: memref<120x1xf32, #tpu.memory_space<vmem>>, %arg8: memref<84x120xbf16, #tpu.memory_space<vmem>>, %arg9: memref<84x1xf32, #tpu.memory_space<vmem>>, %arg10: memref<10x84xbf16, #tpu.memory_space<vmem>>, %arg11: memref<10x1xf32, #tpu.memory_space<vmem>>, %arg12: memref<1x10x128xf32, #tpu.memory_space<vmem>>, %arg13: memref<4712x128xf32, #tpu.memory_space<vmem>>, %arg14: memref<4536x128xbf16, #tpu.memory_space<vmem>>, %arg15: memref<1608x128xf32, #tpu.memory_space<vmem>>, %arg16: memref<1440x128xbf16, #tpu.memory_space<vmem>>) attributes {dimension_semantics = [#tpu.dimension_semantics<parallel>], iteration_bounds = array<i64: 1>, scalar_prefetch = 0 : i64, scratch_operands = 4 : i64, tpu.core_type = #tpu.core_type<tc>, window_params = [{transform_indices = @transform_0, window_bounds = array<i64: 1, 3072, 128>}, {pipeline_mode = #tpu.pipeline_mode<synchronous>, transform_indices = @transform_1, window_bounds = array<i64: 168, 480>}, {pipeline_mode = #tpu.pipeline_mode<synchronous>, transform_indices = @transform_2, window_bounds = array<i64: 168, 1>}, {pipeline_mode = #tpu.pipeline_mode<synchronous>, transform_indices = @transform_3, window_bounds = array<i64: 160, 1512>}, {pipeline_mode = #tpu.pipeline_mode<synchronous>, transform_indices = @transform_4, window_bounds = array<i64: 160, 1>}, {pipeline_mode = #tpu.pipeline_mode<synchronous>, transform_indices = @transform_5, window_bounds = array<i64: 120, 1440>}, {pipeline_mode = #tpu.pipeline_mode<synchronous>, transform_indices = @transform_6, window_bounds = array<i64: 120, 1>}, {pipeline_mode = #tpu.pipeline_mode<synchronous>, transform_indices = @transform_7, window_bounds = array<i64: 84, 120>}, {pipeline_mode = #tpu.pipeline_mode<synchronous>, transform_indices = @transform_8, window_bounds = array<i64: 84, 1>}, {pipeline_mode = #tpu.pipeline_mode<synchronous>, transform_indices = @transform_9, window_bounds = array<i64: 10, 84>}, {pipeline_mode = #tpu.pipeline_mode<synchronous>, transform_indices = @transform_10, window_bounds = array<i64: 10, 1>}, {transform_indices = @transform_11, window_bounds = array<i64: 1, 10, 128>}]} {
    %c0_i32 = arith.constant 0 : i32
    %c28_i32 = arith.constant 28 : i32
    %0 = arith.addi %c0_i32, %c28_i32 : i32
    %c1_i32 = arith.constant 1 : i32
    scf.for %arg17 = %c0_i32 to %0 step %c1_i32  : i32 {
      %c96_i32 = arith.constant 96 : i32
      %33 = arith.muli %arg17, %c96_i32 : i32
      %34 = tpu.assume_multiple %33, 32 : i32
      %c0_34 = arith.constant 0 : index
      %35 = arith.index_cast %34 : i32 to index
      %c0_35 = arith.constant 0 : index
      %36 = vector.load %arg1[%c0_34, %35, %c0_35] : memref<1x3072x128xbf16, #tpu.memory_space<vmem>>, vector<1x480x128xbf16>
      %37 = vector.shape_cast %36 : vector<1x480x128xbf16> to vector<480x128xbf16>
      %c0_36 = arith.constant 0 : index
      %c0_37 = arith.constant 0 : index
      %38 = vector.load %arg2[%c0_36, %c0_37] : memref<168x480xbf16, #tpu.memory_space<vmem>>, vector<168x480xbf16>
      %cst_38 = arith.constant dense<0.000000e+00> : vector<168x128xf32>
      %39 = tpu.matmul %38, %37, %cst_38 {dimension_numbers = #tpu.dot_dimension_numbers<[1], [0], [0], [1], [0, 0, 1, 1], [], []>} : vector<168x480xbf16>, vector<480x128xbf16>, vector<168x128xf32> -> vector<168x128xf32>
      %c0_39 = arith.constant 0 : index
      %c0_40 = arith.constant 0 : index
      %40 = vector.load %arg3[%c0_39, %c0_40] : memref<168x1xf32, #tpu.memory_space<vmem>>, vector<168x1xf32>
      %41 = vector.broadcast %40 : vector<168x1xf32> to vector<168x128xf32>
      %42 = arith.addf %39, %41 : vector<168x128xf32>
      %cst_41 = arith.constant 0.000000e+00 : f32
      %43 = vector.broadcast %cst_41 : f32 to vector<168x128xf32>
      %44 = arith.maximumf %42, %43 : vector<168x128xf32>
      %c168_i32 = arith.constant 168 : i32
      %45 = arith.muli %arg17, %c168_i32 : i32
      %46 = tpu.assume_multiple %45, 8 : i32
      %47 = arith.index_cast %46 : i32 to index
      %c0_42 = arith.constant 0 : index
      %48 = vector.load %arg13[%47, %c0_42] : memref<4712x128xf32, #tpu.memory_space<vmem>>, vector<168x128xf32>
      tpu.vector_store %arg13[%47, %c0_42], %44 {strides = array<i32>} : memref<4712x128xf32, #tpu.memory_space<vmem>>, vector<168x128xf32>,
    }
    %c28_i32_0 = arith.constant 28 : i32
    %cst = arith.constant 0.000000e+00 : f32
    %1 = vector.broadcast %cst : f32 to vector<8x128xf32>
    %c4704 = arith.constant 4704 : index
    %c0 = arith.constant 0 : index
    %2 = vector.load %arg13[%c4704, %c0] : memref<4712x128xf32, #tpu.memory_space<vmem>>, vector<8x128xf32>
    tpu.vector_store %arg13[%c4704, %c0], %1 {strides = array<i32>} : memref<4712x128xf32, #tpu.memory_space<vmem>>, vector<8x128xf32>,
    %c0_i32_1 = arith.constant 0 : i32
    %c27_i32 = arith.constant 27 : i32
    %3 = arith.addi %c0_i32_1, %c27_i32 : i32
    %c1_i32_2 = arith.constant 1 : i32
    scf.for %arg17 = %c0_i32_1 to %3 step %c1_i32_2  : i32 {
      %c168_i32 = arith.constant 168 : i32
      %33 = arith.muli %arg17, %c168_i32 : i32
      %34 = tpu.assume_multiple %33, 8 : i32
      %35 = arith.index_cast %34 : i32 to index
      %c0_34 = arith.constant 0 : index
      %36 = vector.load %arg13[%35, %c0_34] : memref<4712x128xf32, #tpu.memory_space<vmem>>, vector<168x128xf32>
      %c1_i32_35 = arith.constant 1 : i32
      %37 = arith.addi %34, %c1_i32_35 : i32
      %38 = arith.index_cast %37 : i32 to index
      %c0_36 = arith.constant 0 : index
      %39 = vector.load %arg13[%38, %c0_36] : memref<4712x128xf32, #tpu.memory_space<vmem>>, vector<168x128xf32>
      %40 = arith.maximumf %36, %39 : vector<168x128xf32>
      %c168_i32_37 = arith.constant 168 : i32
      %41 = arith.addi %34, %c168_i32_37 : i32
      %42 = arith.index_cast %41 : i32 to index
      %c0_38 = arith.constant 0 : index
      %43 = vector.load %arg13[%42, %c0_38] : memref<4712x128xf32, #tpu.memory_space<vmem>>, vector<168x128xf32>
      %44 = arith.maximumf %40, %43 : vector<168x128xf32>
      %c168_i32_39 = arith.constant 168 : i32
      %45 = arith.addi %34, %c168_i32_39 : i32
      %c1_i32_40 = arith.constant 1 : i32
      %46 = arith.addi %45, %c1_i32_40 : i32
      %47 = arith.index_cast %46 : i32 to index
      %c0_41 = arith.constant 0 : index
      %48 = vector.load %arg13[%47, %c0_41] : memref<4712x128xf32, #tpu.memory_space<vmem>>, vector<168x128xf32>
      %49 = arith.maximumf %44, %48 : vector<168x128xf32>
      %50 = arith.truncf %49 : vector<168x128xf32> to vector<168x128xbf16>
      %51 = arith.index_cast %34 : i32 to index
      %c0_42 = arith.constant 0 : index
      %52 = vector.load %arg14[%51, %c0_42] : memref<4536x128xbf16, #tpu.memory_space<vmem>>, vector<168x128xbf16>
      tpu.vector_store %arg14[%51, %c0_42], %50 {strides = array<i32>} : memref<4536x128xbf16, #tpu.memory_space<vmem>>, vector<168x128xbf16>,
    }
    %c27_i32_3 = arith.constant 27 : i32
    %c0_i32_4 = arith.constant 0 : i32
    %c10_i32 = arith.constant 10 : i32
    %4 = arith.addi %c0_i32_4, %c10_i32 : i32
    %c1_i32_5 = arith.constant 1 : i32
    scf.for %arg17 = %c0_i32_4 to %4 step %c1_i32_5  : i32 {
      %c2_i32 = arith.constant 2 : i32
      %33 = arith.muli %arg17, %c2_i32 : i32
      %c168_i32 = arith.constant 168 : i32
      %34 = arith.muli %33, %c168_i32 : i32
      %35 = tpu.assume_multiple %34, 16 : i32
      %36 = arith.index_cast %35 : i32 to index
      %c0_34 = arith.constant 0 : index
      %37 = vector.load %arg14[%36, %c0_34] : memref<4536x128xbf16, #tpu.memory_space<vmem>>, vector<1512x128xbf16>
      %c0_35 = arith.constant 0 : index
      %c0_36 = arith.constant 0 : index
      %38 = vector.load %arg4[%c0_35, %c0_36] : memref<160x1512xbf16, #tpu.memory_space<vmem>>, vector<160x1512xbf16>
      %cst_37 = arith.constant dense<0.000000e+00> : vector<160x128xf32>
      %39 = tpu.matmul %38, %37, %cst_37 {dimension_numbers = #tpu.dot_dimension_numbers<[1], [0], [0], [1], [0, 0, 1, 1], [], []>} : vector<160x1512xbf16>, vector<1512x128xbf16>, vector<160x128xf32> -> vector<160x128xf32>
      %c0_38 = arith.constant 0 : index
      %c0_39 = arith.constant 0 : index
      %40 = vector.load %arg5[%c0_38, %c0_39] : memref<160x1xf32, #tpu.memory_space<vmem>>, vector<160x1xf32>
      %41 = vector.broadcast %40 : vector<160x1xf32> to vector<160x128xf32>
      %42 = arith.addf %39, %41 : vector<160x128xf32>
      %cst_40 = arith.constant 0.000000e+00 : f32
      %43 = vector.broadcast %cst_40 : f32 to vector<160x128xf32>
      %44 = arith.maximumf %42, %43 : vector<160x128xf32>
      %c160_i32 = arith.constant 160 : i32
      %45 = arith.muli %arg17, %c160_i32 : i32
      %46 = tpu.assume_multiple %45, 32 : i32
      %47 = arith.index_cast %46 : i32 to index
      %c0_41 = arith.constant 0 : index
      %48 = vector.load %arg15[%47, %c0_41] : memref<1608x128xf32, #tpu.memory_space<vmem>>, vector<160x128xf32>
      tpu.vector_store %arg15[%47, %c0_41], %44 {strides = array<i32>} : memref<1608x128xf32, #tpu.memory_space<vmem>>, vector<160x128xf32>,
    }
    %c10_i32_6 = arith.constant 10 : i32
    %cst_7 = arith.constant 0.000000e+00 : f32
    %5 = vector.broadcast %cst_7 : f32 to vector<8x128xf32>
    %c1600 = arith.constant 1600 : index
    %c0_8 = arith.constant 0 : index
    %6 = vector.load %arg15[%c1600, %c0_8] : memref<1608x128xf32, #tpu.memory_space<vmem>>, vector<8x128xf32>
    tpu.vector_store %arg15[%c1600, %c0_8], %5 {strides = array<i32>} : memref<1608x128xf32, #tpu.memory_space<vmem>>, vector<8x128xf32>,
    %c0_i32_9 = arith.constant 0 : i32
    %c9_i32 = arith.constant 9 : i32
    %7 = arith.addi %c0_i32_9, %c9_i32 : i32
    %c1_i32_10 = arith.constant 1 : i32
    scf.for %arg17 = %c0_i32_9 to %7 step %c1_i32_10  : i32 {
      %c160_i32 = arith.constant 160 : i32
      %33 = arith.muli %arg17, %c160_i32 : i32
      %34 = tpu.assume_multiple %33, 32 : i32
      %35 = arith.index_cast %34 : i32 to index
      %c0_34 = arith.constant 0 : index
      %36 = vector.load %arg15[%35, %c0_34] : memref<1608x128xf32, #tpu.memory_space<vmem>>, vector<160x128xf32>
      %c1_i32_35 = arith.constant 1 : i32
      %37 = arith.addi %34, %c1_i32_35 : i32
      %38 = arith.index_cast %37 : i32 to index
      %c0_36 = arith.constant 0 : index
      %39 = vector.load %arg15[%38, %c0_36] : memref<1608x128xf32, #tpu.memory_space<vmem>>, vector<160x128xf32>
      %40 = arith.maximumf %36, %39 : vector<160x128xf32>
      %c160_i32_37 = arith.constant 160 : i32
      %41 = arith.addi %34, %c160_i32_37 : i32
      %42 = arith.index_cast %41 : i32 to index
      %c0_38 = arith.constant 0 : index
      %43 = vector.load %arg15[%42, %c0_38] : memref<1608x128xf32, #tpu.memory_space<vmem>>, vector<160x128xf32>
      %44 = arith.maximumf %40, %43 : vector<160x128xf32>
      %c160_i32_39 = arith.constant 160 : i32
      %45 = arith.addi %34, %c160_i32_39 : i32
      %c1_i32_40 = arith.constant 1 : i32
      %46 = arith.addi %45, %c1_i32_40 : i32
      %47 = arith.index_cast %46 : i32 to index
      %c0_41 = arith.constant 0 : index
      %48 = vector.load %arg15[%47, %c0_41] : memref<1608x128xf32, #tpu.memory_space<vmem>>, vector<160x128xf32>
      %49 = arith.maximumf %44, %48 : vector<160x128xf32>
      %50 = arith.truncf %49 : vector<160x128xf32> to vector<160x128xbf16>
      %51 = arith.index_cast %34 : i32 to index
      %c0_42 = arith.constant 0 : index
      %52 = vector.load %arg16[%51, %c0_42] : memref<1440x128xbf16, #tpu.memory_space<vmem>>, vector<160x128xbf16>
      tpu.vector_store %arg16[%51, %c0_42], %50 {strides = array<i32>} : memref<1440x128xbf16, #tpu.memory_space<vmem>>, vector<160x128xbf16>,
    }
    %c9_i32_11 = arith.constant 9 : i32
    %c0_12 = arith.constant 0 : index
    %c0_13 = arith.constant 0 : index
    %8 = vector.load %arg6[%c0_12, %c0_13] : memref<120x1440xbf16, #tpu.memory_space<vmem>>, vector<120x1440xbf16>
    %c0_14 = arith.constant 0 : index
    %c0_15 = arith.constant 0 : index
    %9 = vector.load %arg16[%c0_14, %c0_15] : memref<1440x128xbf16, #tpu.memory_space<vmem>>, vector<1440x128xbf16>
    %cst_16 = arith.constant dense<0.000000e+00> : vector<120x128xf32>
    %10 = tpu.matmul %8, %9, %cst_16 {dimension_numbers = #tpu.dot_dimension_numbers<[1], [0], [0], [1], [0, 0, 1, 1], [], []>} : vector<120x1440xbf16>, vector<1440x128xbf16>, vector<120x128xf32> -> vector<120x128xf32>
    %c0_17 = arith.constant 0 : index
    %c0_18 = arith.constant 0 : index
    %11 = vector.load %arg7[%c0_17, %c0_18] : memref<120x1xf32, #tpu.memory_space<vmem>>, vector<120x1xf32>
    %12 = vector.broadcast %11 : vector<120x1xf32> to vector<120x128xf32>
    %13 = arith.addf %10, %12 : vector<120x128xf32>
    %cst_19 = arith.constant 0.000000e+00 : f32
    %14 = vector.broadcast %cst_19 : f32 to vector<120x128xf32>
    %15 = arith.maximumf %13, %14 : vector<120x128xf32>
    %c0_20 = arith.constant 0 : index
    %c0_21 = arith.constant 0 : index
    %16 = vector.load %arg8[%c0_20, %c0_21] : memref<84x120xbf16, #tpu.memory_space<vmem>>, vector<84x120xbf16>
    %17 = arith.truncf %15 : vector<120x128xf32> to vector<120x128xbf16>
    %cst_22 = arith.constant dense<0.000000e+00> : vector<84x128xf32>
    %18 = tpu.matmul %16, %17, %cst_22 {dimension_numbers = #tpu.dot_dimension_numbers<[1], [0], [0], [1], [0, 0, 1, 1], [], []>} : vector<84x120xbf16>, vector<120x128xbf16>, vector<84x128xf32> -> vector<84x128xf32>
    %c0_23 = arith.constant 0 : index
    %c0_24 = arith.constant 0 : index
    %19 = vector.load %arg9[%c0_23, %c0_24] : memref<84x1xf32, #tpu.memory_space<vmem>>, vector<84x1xf32>
    %20 = vector.broadcast %19 : vector<84x1xf32> to vector<84x128xf32>
    %21 = arith.addf %18, %20 : vector<84x128xf32>
    %cst_25 = arith.constant 0.000000e+00 : f32
    %22 = vector.broadcast %cst_25 : f32 to vector<84x128xf32>
    %23 = arith.maximumf %21, %22 : vector<84x128xf32>
    %c0_26 = arith.constant 0 : index
    %c0_27 = arith.constant 0 : index
    %24 = vector.load %arg10[%c0_26, %c0_27] : memref<10x84xbf16, #tpu.memory_space<vmem>>, vector<10x84xbf16>
    %25 = arith.truncf %23 : vector<84x128xf32> to vector<84x128xbf16>
    %cst_28 = arith.constant dense<0.000000e+00> : vector<10x128xf32>
    %26 = tpu.matmul %24, %25, %cst_28 {dimension_numbers = #tpu.dot_dimension_numbers<[1], [0], [0], [1], [0, 0, 1, 1], [], []>} : vector<10x84xbf16>, vector<84x128xbf16>, vector<10x128xf32> -> vector<10x128xf32>
    %c0_29 = arith.constant 0 : index
    %c0_30 = arith.constant 0 : index
    %27 = vector.load %arg11[%c0_29, %c0_30] : memref<10x1xf32, #tpu.memory_space<vmem>>, vector<10x1xf32>
    %28 = vector.broadcast %27 : vector<10x1xf32> to vector<10x128xf32>
    %29 = arith.addf %26, %28 : vector<10x128xf32>
    %c0_31 = arith.constant 0 : index
    %c0_32 = arith.constant 0 : index
    %c0_33 = arith.constant 0 : index
    %30 = vector.load %arg12[%c0_31, %c0_32, %c0_33] : memref<1x10x128xf32, #tpu.memory_space<vmem>>, vector<1x10x128xf32>
    %31 = vector.shape_cast %30 : vector<1x10x128xf32> to vector<10x128xf32>
    %32 = vector.shape_cast %29 : vector<10x128xf32> to vector<1x10x128xf32>
    tpu.vector_store %arg12[%c0_31, %c0_32, %c0_33], %32 {strides = array<i32>} : memref<1x10x128xf32, #tpu.memory_space<vmem>>, vector<1x10x128xf32>,
    return
  }
  func.func @transform_0(%arg0: i32) -> (i32, i32, i32) {
    %c0_i32 = arith.constant 0 : i32
    %c0_i32_0 = arith.constant 0 : i32
    %c0_i32_1 = arith.constant 0 : i32
    return %arg0, %c0_i32, %c0_i32_0 : i32, i32, i32
  }
  func.func @transform_1(%arg0: i32) -> (i32, i32) {
    %c0_i32 = arith.constant 0 : i32
    %c0_i32_0 = arith.constant 0 : i32
    %c0_i32_1 = arith.constant 0 : i32
    return %c0_i32, %c0_i32_0 : i32, i32
  }
  func.func @transform_2(%arg0: i32) -> (i32, i32) {
    %c0_i32 = arith.constant 0 : i32
    %c0_i32_0 = arith.constant 0 : i32
    %c0_i32_1 = arith.constant 0 : i32
    return %c0_i32, %c0_i32_0 : i32, i32
  }
  func.func @transform_3(%arg0: i32) -> (i32, i32) {
    %c0_i32 = arith.constant 0 : i32
    %c0_i32_0 = arith.constant 0 : i32
    %c0_i32_1 = arith.constant 0 : i32
    return %c0_i32, %c0_i32_0 : i32, i32
  }
  func.func @transform_4(%arg0: i32) -> (i32, i32) {
    %c0_i32 = arith.constant 0 : i32
    %c0_i32_0 = arith.constant 0 : i32
    %c0_i32_1 = arith.constant 0 : i32
    return %c0_i32, %c0_i32_0 : i32, i32
  }
  func.func @transform_5(%arg0: i32) -> (i32, i32) {
    %c0_i32 = arith.constant 0 : i32
    %c0_i32_0 = arith.constant 0 : i32
    %c0_i32_1 = arith.constant 0 : i32
    return %c0_i32, %c0_i32_0 : i32, i32
  }
  func.func @transform_6(%arg0: i32) -> (i32, i32) {
    %c0_i32 = arith.constant 0 : i32
    %c0_i32_0 = arith.constant 0 : i32
    %c0_i32_1 = arith.constant 0 : i32
    return %c0_i32, %c0_i32_0 : i32, i32
  }
  func.func @transform_7(%arg0: i32) -> (i32, i32) {
    %c0_i32 = arith.constant 0 : i32
    %c0_i32_0 = arith.constant 0 : i32
    %c0_i32_1 = arith.constant 0 : i32
    return %c0_i32, %c0_i32_0 : i32, i32
  }
  func.func @transform_8(%arg0: i32) -> (i32, i32) {
    %c0_i32 = arith.constant 0 : i32
    %c0_i32_0 = arith.constant 0 : i32
    %c0_i32_1 = arith.constant 0 : i32
    return %c0_i32, %c0_i32_0 : i32, i32
  }
  func.func @transform_9(%arg0: i32) -> (i32, i32) {
    %c0_i32 = arith.constant 0 : i32
    %c0_i32_0 = arith.constant 0 : i32
    %c0_i32_1 = arith.constant 0 : i32
    return %c0_i32, %c0_i32_0 : i32, i32
  }
  func.func @transform_10(%arg0: i32) -> (i32, i32) {
    %c0_i32 = arith.constant 0 : i32
    %c0_i32_0 = arith.constant 0 : i32
    %c0_i32_1 = arith.constant 0 : i32
    return %c0_i32, %c0_i32_0 : i32, i32
  }
  func.func @transform_11(%arg0: i32) -> (i32, i32, i32) {
    %c0_i32 = arith.constant 0 : i32
    %c0_i32_0 = arith.constant 0 : i32
    %c0_i32_1 = arith.constant 0 : i32
    return %arg0, %c0_i32, %c0_i32_0 : i32, i32, i32
  }
}

</mosaic_0001>

<llo_original>
// kernel: model_forward.1
$region0: #{model_forward.1}
  #allocation0 [shape = 'u32[]', space=smem, size = 0x4, offset = 0x4, fixed_abs, tag = 'smem constant byte address 0x4 - core index']
  #allocation1 [shape = 'u32[144,128]{1,0:T(1,128)}', space=vmem, size = 0x12000, scoped, tag = 'internal scratch']
  #allocation2 [shape = 'f32[4712,128]{1,0:T(8,128)}', space=vmem, size = 0x24d000, scoped, tag = 'scratch operand']
  #allocation3 [shape = 'bf16[4536,128]{1,0:T(8,128)(2,1)}', space=vmem, size = 0x11b800, scoped, tag = 'scratch operand']
  #allocation4 [shape = 'f32[1608,128]{1,0:T(8,128)}', space=vmem, size = 0xc9000, scoped, tag = 'scratch operand']
  #allocation5 [shape = 'bf16[1440,128]{1,0:T(16,128)(2,1)}', space=vmem, size = 0x5a000, scoped, tag = 'scratch operand']
  %s0 = inlined_call_operand.vmem [shape: bf16[1,3072,128], index: 0, kind: input, shape index: {}]
  %s1 = inlined_call_operand.vmem [shape: bf16[168,480], index: 1, kind: input, shape index: {}]
  %s2 = inlined_call_operand.vmem [shape: f32[168,1], index: 2, kind: input, shape index: {}]
  %s3 = inlined_call_operand.vmem [shape: bf16[160,1512], index: 3, kind: input, shape index: {}]
  %s4 = inlined_call_operand.vmem [shape: f32[160,1], index: 4, kind: input, shape index: {}]
  %s5 = inlined_call_operand.vmem [shape: bf16[120,1440], index: 5, kind: input, shape index: {}]
  %s6 = inlined_call_operand.vmem [shape: f32[120,1], index: 6, kind: input, shape index: {}]
  %s7 = inlined_call_operand.vmem [shape: bf16[84,120], index: 7, kind: input, shape index: {}]
  %s8 = inlined_call_operand.vmem [shape: f32[84,1], index: 8, kind: input, shape index: {}]
  %s9 = inlined_call_operand.vmem [shape: bf16[10,84], index: 9, kind: input, shape index: {}]
  %s10 = inlined_call_operand.vmem [shape: f32[10,1], index: 10, kind: input, shape index: {}]
  %s11 = inlined_call_operand.vmem [shape: f32[1,10,128], index: 11, kind: output, shape index: {}]
  %s12 = sld [smem:[#allocation0]]
  $region82: #{model_forward.1} parent=0
    _
  %s14 = ssub.s32 1, %s12
  %s15 = scalar_select 0, %s14, %s12
  // Predicated region
  $region2: #{model_forward.1} parent=0 // pred_check
    _
  $region3: #{model_forward.1} parent=0 // pred_check_branch
    %17 = sbr.rel (0) target = $region5
  $region4: #{model_forward.1} parent=0 // pred_region
    _
  $region5: #{model_forward.1} parent=0 // pred_fallthru
    _
  // Predicated region
  $region6: #{model_forward.1} parent=0 // pred_check
    _
  $region7: #{model_forward.1} parent=0 // pred_check_branch
    %19 = sbr.rel (0) target = $region9
  $region8: #{model_forward.1} parent=0 // pred_region
    _
  $region9: #{model_forward.1} parent=0 // pred_fallthru
    _
  // Predicated region
  $region10: #{model_forward.1} parent=0 // pred_check
    _
  $region11: #{model_forward.1} parent=0 // pred_check_branch
    %21 = sbr.rel (0) target = $region13
  $region12: #{model_forward.1} parent=0 // pred_region
    _
  $region13: #{model_forward.1} parent=0 // pred_fallthru
    _
  // Predicated region
  $region14: #{model_forward.1} parent=0 // pred_check
    _
  $region15: #{model_forward.1} parent=0 // pred_check_branch
    %23 = sbr.rel (0) target = $region17
  $region16: #{model_forward.1} parent=0 // pred_region
    _
  $region17: #{model_forward.1} parent=0 // pred_fallthru
    _
  // Predicated region
  $region18: #{model_forward.1} parent=0 // pred_check
    _
  $region19: #{model_forward.1} parent=0 // pred_check_branch
    %25 = sbr.rel (0) target = $region21
  $region20: #{model_forward.1} parent=0 // pred_region
    _
  $region21: #{model_forward.1} parent=0 // pred_fallthru
    _
  // Predicated region
  $region22: #{model_forward.1} parent=0 // pred_check
    _
  $region23: #{model_forward.1} parent=0 // pred_check_branch
    %27 = sbr.rel (0) target = $region25
  $region24: #{model_forward.1} parent=0 // pred_region
    _
  $region25: #{model_forward.1} parent=0 // pred_fallthru
    _
  // Predicated region
  $region26: #{model_forward.1} parent=0 // pred_check
    _
  $region27: #{model_forward.1} parent=0 // pred_check_branch
    %29 = sbr.rel (0) target = $region29
  $region28: #{model_forward.1} parent=0 // pred_region
    _
  $region29: #{model_forward.1} parent=0 // pred_fallthru
    _
  // Predicated region
  $region30: #{model_forward.1} parent=0 // pred_check
    _
  $region31: #{model_forward.1} parent=0 // pred_check_branch
    %31 = sbr.rel (0) target = $region33
  $region32: #{model_forward.1} parent=0 // pred_region
    _
  $region33: #{model_forward.1} parent=0 // pred_fallthru
    _
  // Predicated region
  $region34: #{model_forward.1} parent=0 // pred_check
    _
  $region35: #{model_forward.1} parent=0 // pred_check_branch
    %33 = sbr.rel (0) target = $region37
  $region36: #{model_forward.1} parent=0 // pred_region
    _
  $region37: #{model_forward.1} parent=0 // pred_fallthru
    _
  // Predicated region
  $region38: #{model_forward.1} parent=0 // pred_check
    _
  $region39: #{model_forward.1} parent=0 // pred_check_branch
    %35 = sbr.rel (0) target = $region41
  $region40: #{model_forward.1} parent=0 // pred_region
    _
  $region41: #{model_forward.1} parent=0 // pred_fallthru
    _
  // Predicated region
  $region42: #{model_forward.1} parent=0 // pred_check
    _
  $region43: #{model_forward.1} parent=0 // pred_check_branch
    %37 = sbr.rel (0) target = $region45
  $region44: #{model_forward.1} parent=0 // pred_region
    _
  $region45: #{model_forward.1} parent=0 // pred_fallthru
    _
  loop: start=0, step=1, limit=28
  $region46: #{model_forward.1} parent=0 // loop_pre_header
    _
  $region47: #{model_forward.1} parent=0 // loop_header
    %s40 = sphi 0, %s44
    %p41 = scmp.ge.s32.totalorder %s40, 28
  $region48: #{model_forward.1} parent=0 // loop_header_branch
    %43 = sbr.rel (%p41) target = $region52
  $region49: #{model_forward.1} parent=0 // loop_body
    %s45 = smul.u32 %s40, 96
    %s46 = sshra.s32 %s45, 3
    %s47 = sand.u32 %s45, 7
    %s48 = smul.addr %s46, 4
    %s49 = scalar_lea.vmem %s0, %s48
    %v50 = vld [vmem:[%s49] sm:$0xf]
    %v51 = vld [vmem:[%s49 + $0x4] sm:$0xf]
    %v52 = vld [vmem:[%s49 + $0x8] sm:$0xf]
    %v53 = vld [vmem:[%s49 + $0xc] sm:$0xf]
    %v54 = vld [vmem:[%s49 + $0x10] sm:$0xf]
    %v55 = vld [vmem:[%s49 + $0x14] sm:$0xf]
    %v56 = vld [vmem:[%s49 + $0x18] sm:$0xf]
    %v57 = vld [vmem:[%s49 + $0x1c] sm:$0xf]
    %v58 = vld [vmem:[%s49 + $0x20] sm:$0xf]
    %v59 = vld [vmem:[%s49 + $0x24] sm:$0xf]
    %v60 = vld [vmem:[%s49 + $0x28] sm:$0xf]
    %v61 = vld [vmem:[%s49 + $0x2c] sm:$0xf]
    %v62 = vld [vmem:[%s49 + $0x30] sm:$0xf]
    %v63 = vld [vmem:[%s49 + $0x34] sm:$0xf]
    %v64 = vld [vmem:[%s49 + $0x38] sm:$0xf]
    %v65 = vld [vmem:[%s49 + $0x3c] sm:$0xf]
    %v66 = vld [vmem:[%s49 + $0x40] sm:$0xf]
    %v67 = vld [vmem:[%s49 + $0x44] sm:$0xf]
    %v68 = vld [vmem:[%s49 + $0x48] sm:$0xf]
    %v69 = vld [vmem:[%s49 + $0x4c] sm:$0xf]
    %v70 = vld [vmem:[%s49 + $0x50] sm:$0xf]
    %v71 = vld [vmem:[%s49 + $0x54] sm:$0xf]
    %v72 = vld [vmem:[%s49 + $0x58] sm:$0xf]
    %v73 = vld [vmem:[%s49 + $0x5c] sm:$0xf]
    %v74 = vld [vmem:[%s49 + $0x60] sm:$0xf]
    %v75 = vld [vmem:[%s49 + $0x64] sm:$0xf]
    %v76 = vld [vmem:[%s49 + $0x68] sm:$0xf]
    %v77 = vld [vmem:[%s49 + $0x6c] sm:$0xf]
    %v78 = vld [vmem:[%s49 + $0x70] sm:$0xf]
    %v79 = vld [vmem:[%s49 + $0x74] sm:$0xf]
    %v80 = vld [vmem:[%s49 + $0x78] sm:$0xf]
    %v81 = vld [vmem:[%s49 + $0x7c] sm:$0xf]
    %v82 = vld [vmem:[%s49 + $0x80] sm:$0xf]
    %v83 = vld [vmem:[%s49 + $0x84] sm:$0xf]
    %v84 = vld [vmem:[%s49 + $0x88] sm:$0xf]
    %v85 = vld [vmem:[%s49 + $0x8c] sm:$0xf]
    %v86 = vld [vmem:[%s49 + $0x90] sm:$0xf]
    %v87 = vld [vmem:[%s49 + $0x94] sm:$0xf]
    %v88 = vld [vmem:[%s49 + $0x98] sm:$0xf]
    %v89 = vld [vmem:[%s49 + $0x9c] sm:$0xf]
    %v90 = vld [vmem:[%s49 + $0xa0] sm:$0xf]
    %v91 = vld [vmem:[%s49 + $0xa4] sm:$0xf]
    %v92 = vld [vmem:[%s49 + $0xa8] sm:$0xf]
    %v93 = vld [vmem:[%s49 + $0xac] sm:$0xf]
    %v94 = vld [vmem:[%s49 + $0xb0] sm:$0xf]
    %v95 = vld [vmem:[%s49 + $0xb4] sm:$0xf]
    %v96 = vld [vmem:[%s49 + $0xb8] sm:$0xf]
    %v97 = vld [vmem:[%s49 + $0xbc] sm:$0xf]
    %v98 = vld [vmem:[%s49 + $0xc0] sm:$0xf]
    %v99 = vld [vmem:[%s49 + $0xc4] sm:$0xf]
    %v100 = vld [vmem:[%s49 + $0xc8] sm:$0xf]
    %v101 = vld [vmem:[%s49 + $0xcc] sm:$0xf]
    %v102 = vld [vmem:[%s49 + $0xd0] sm:$0xf]
    %v103 = vld [vmem:[%s49 + $0xd4] sm:$0xf]
    %v104 = vld [vmem:[%s49 + $0xd8] sm:$0xf]
    %v105 = vld [vmem:[%s49 + $0xdc] sm:$0xf]
    %v106 = vld [vmem:[%s49 + $0xe0] sm:$0xf]
    %v107 = vld [vmem:[%s49 + $0xe4] sm:$0xf]
    %v108 = vld [vmem:[%s49 + $0xe8] sm:$0xf]
    %v109 = vld [vmem:[%s49 + $0xec] sm:$0xf]
    %v110 = vld [vmem:[%s1] sm:$0xff]
    %v111 = vld [vmem:[%s1 + $0x8] sm:$0xff]
    %v112 = vld [vmem:[%s1 + $0x10] sm:$0xff]
    %v113 = vld [vmem:[%s1 + $0x18] sm:$0xff]
    %v114 = vld [vmem:[%s1 + $0x20] sm:$0xff]
    %v115 = vld [vmem:[%s1 + $0x28] sm:$0xff]
    %v116 = vld [vmem:[%s1 + $0x30] sm:$0xff]
    %v117 = vld [vmem:[%s1 + $0x38] sm:$0xff]
    %v118 = vld [vmem:[%s1 + $0x40] sm:$0xff]
    %v119 = vld [vmem:[%s1 + $0x48] sm:$0xff]
    %v120 = vld [vmem:[%s1 + $0x50] sm:$0xff]
    %v121 = vld [vmem:[%s1 + $0x58] sm:$0xff]
    %v122 = vld [vmem:[%s1 + $0x60] sm:$0xff]
    %v123 = vld [vmem:[%s1 + $0x68] sm:$0xff]
    %v124 = vld [vmem:[%s1 + $0x70] sm:$0xff]
    %v125 = vld [vmem:[%s1 + $0x78] sm:$0xff]
    %v126 = vld [vmem:[%s1 + $0x80] sm:$0xff]
    %v127 = vld [vmem:[%s1 + $0x88] sm:$0xff]
    %v128 = vld [vmem:[%s1 + $0x90] sm:$0xff]
    %v129 = vld [vmem:[%s1 + $0x98] sm:$0xff]
    %v130 = vld [vmem:[%s1 + $0xa0] sm:$0xff]
    %v131 = vld [vmem:[%s1 + $0xa8] sm:$0xff]
    %v132 = vld [vmem:[%s1 + $0xb0] sm:$0xff]
    %v133 = vld [vmem:[%s1 + $0xb8] sm:$0xff]
    %v134 = vld [vmem:[%s1 + $0xc0] sm:$0xff]
    %v135 = vld [vmem:[%s1 + $0xc8] sm:$0xff]
    %v136 = vld [vmem:[%s1 + $0xd0] sm:$0xff]
    %v137 = vld [vmem:[%s1 + $0xd8] sm:$0xff]
    %v138 = vld [vmem:[%s1 + $0xe0] sm:$0xff]
    %v139 = vld [vmem:[%s1 + $0xe8] sm:$0xff]
    %v140 = vld [vmem:[%s1 + $0xf0] sm:$0xff]
    %v141 = vld [vmem:[%s1 + $0xf8] sm:$0xff]
    %v142 = vld [vmem:[%s1 + $0x100] sm:$0xff]
    %v143 = vld [vmem:[%s1 + $0x108] sm:$0xff]
    %v144 = vld [vmem:[%s1 + $0x110] sm:$0xff]
    %v145 = vld [vmem:[%s1 + $0x118] sm:$0xff]
    %v146 = vld [vmem:[%s1 + $0x120] sm:$0xff]
    %v147 = vld [vmem:[%s1 + $0x128] sm:$0xff]
    %v148 = vld [vmem:[%s1 + $0x130] sm:$0xff]
    %v149 = vld [vmem:[%s1 + $0x138] sm:$0xff]
    %v150 = vld [vmem:[%s1 + $0x140] sm:$0xff]
    %v151 = vld [vmem:[%s1 + $0x148] sm:$0xff]
    %v152 = vld [vmem:[%s2] sm:$0xff]
    %v153 = vld [vmem:[%s2 + $0x8] sm:$0xff]
    %v154 = vld [vmem:[%s2 + $0x10] sm:$0xff]
    %v155 = vld [vmem:[%s2 + $0x18] sm:$0xff]
    %v156 = vld [vmem:[%s2 + $0x20] sm:$0xff]
    %v157 = vld [vmem:[%s2 + $0x28] sm:$0xff]
    %v158 = vld [vmem:[%s2 + $0x30] sm:$0xff]
    %v159 = vld [vmem:[%s2 + $0x38] sm:$0xff]
    %v160 = vld [vmem:[%s2 + $0x40] sm:$0xff]
    %v161 = vld [vmem:[%s2 + $0x48] sm:$0xff]
    %v162 = vld [vmem:[%s2 + $0x50] sm:$0xff]
    %v163 = vld [vmem:[%s2 + $0x58] sm:$0xff]
    %v164 = vld [vmem:[%s2 + $0x60] sm:$0xff]
    %v165 = vld [vmem:[%s2 + $0x68] sm:$0xff]
    %v166 = vld [vmem:[%s2 + $0x70] sm:$0xff]
    %v167 = vld [vmem:[%s2 + $0x78] sm:$0xff]
    %v168 = vld [vmem:[%s2 + $0x80] sm:$0xff]
    %v169 = vld [vmem:[%s2 + $0x88] sm:$0xff]
    %v170 = vld [vmem:[%s2 + $0x90] sm:$0xff]
    %v171 = vld [vmem:[%s2 + $0x98] sm:$0xff]
    %v172 = vld [vmem:[%s2 + $0xa0] sm:$0xff]
    %174 = vset.pattern.permute.xlu0 0
    %175 = vperm.xlu0 %174, %v152
    %v176 = vpop.permute.xlu0 %175
    %179 = vset.pattern.permute.xlu0 0
    %180 = vperm.xlu0 %179, %v153
    %v181 = vpop.permute.xlu0 %180
    %184 = vset.pattern.permute.xlu0 0
    %185 = vperm.xlu0 %184, %v154
    %v186 = vpop.permute.xlu0 %185
    %189 = vset.pattern.permute.xlu0 0
    %190 = vperm.xlu0 %189, %v155
    %v191 = vpop.permute.xlu0 %190
    %194 = vset.pattern.permute.xlu0 0
    %195 = vperm.xlu0 %194, %v156
    %v196 = vpop.permute.xlu0 %195
    %199 = vset.pattern.permute.xlu0 0
    %200 = vperm.xlu0 %199, %v157
    %v201 = vpop.permute.xlu0 %200
    %204 = vset.pattern.permute.xlu0 0
    %205 = vperm.xlu0 %204, %v158
    %v206 = vpop.permute.xlu0 %205
    %209 = vset.pattern.permute.xlu0 0
    %210 = vperm.xlu0 %209, %v159
    %v211 = vpop.permute.xlu0 %210
    %214 = vset.pattern.permute.xlu0 0
    %215 = vperm.xlu0 %214, %v160
    %v216 = vpop.permute.xlu0 %215
    %219 = vset.pattern.permute.xlu0 0
    %220 = vperm.xlu0 %219, %v161
    %v221 = vpop.permute.xlu0 %220
    %224 = vset.pattern.permute.xlu0 0
    %225 = vperm.xlu0 %224, %v162
    %v226 = vpop.permute.xlu0 %225
    %229 = vset.pattern.permute.xlu0 0
    %230 = vperm.xlu0 %229, %v163
    %v231 = vpop.permute.xlu0 %230
    %234 = vset.pattern.permute.xlu0 0
    %235 = vperm.xlu0 %234, %v164
    %v236 = vpop.permute.xlu0 %235
    %239 = vset.pattern.permute.xlu0 0
    %240 = vperm.xlu0 %239, %v165
    %v241 = vpop.permute.xlu0 %240
    %244 = vset.pattern.permute.xlu0 0
    %245 = vperm.xlu0 %244, %v166
    %v246 = vpop.permute.xlu0 %245
    %249 = vset.pattern.permute.xlu0 0
    %250 = vperm.xlu0 %249, %v167
    %v251 = vpop.permute.xlu0 %250
    %254 = vset.pattern.permute.xlu0 0
    %255 = vperm.xlu0 %254, %v168
    %v256 = vpop.permute.xlu0 %255
    %259 = vset.pattern.permute.xlu0 0
    %260 = vperm.xlu0 %259, %v169
    %v261 = vpop.permute.xlu0 %260
    %264 = vset.pattern.permute.xlu0 0
    %265 = vperm.xlu0 %264, %v170
    %v266 = vpop.permute.xlu0 %265
    %269 = vset.pattern.permute.xlu0 0
    %270 = vperm.xlu0 %269, %v171
    %v271 = vpop.permute.xlu0 %270
    %274 = vset.pattern.permute.xlu0 0
    %275 = vperm.xlu0 %274, %v172
    %v276 = vpop.permute.xlu0 %275
    %v320 = vunpack.c.l.b16 %v110
    %v321 = vunpack.c.h.b16 %v110
    %v322 = vunpack.c.l.b16 %v111
    %v323 = vunpack.c.h.b16 %v111
    %v324 = vunpack.c.l.b16 %v112
    %v325 = vunpack.c.h.b16 %v112
    %v326 = vunpack.c.l.b16 %v113
    %v327 = vunpack.c.h.b16 %v113
    %v328 = vunpack.c.l.b16 %v114
    %v329 = vunpack.c.h.b16 %v114
    %v330 = vunpack.c.l.b16 %v115
    %v331 = vunpack.c.h.b16 %v115
    %v332 = vunpack.c.l.b16 %v116
    %v333 = vunpack.c.h.b16 %v116
    %v334 = vunpack.c.l.b16 %v117
    %v335 = vunpack.c.h.b16 %v117
    %v336 = vunpack.c.l.b16 %v118
    %v337 = vunpack.c.h.b16 %v118
    %v338 = vunpack.c.l.b16 %v119
    %v339 = vunpack.c.h.b16 %v119
    %v340 = vunpack.c.l.b16 %v120
    %v341 = vunpack.c.h.b16 %v120
    %v342 = vunpack.c.l.b16 %v121
    %v343 = vunpack.c.h.b16 %v121
    %v344 = vunpack.c.l.b16 %v122
    %v345 = vunpack.c.h.b16 %v122
    %v346 = vunpack.c.l.b16 %v123
    %v347 = vunpack.c.h.b16 %v123
    %v348 = vunpack.c.l.b16 %v124
    %v349 = vunpack.c.h.b16 %v124
    %v350 = vunpack.c.l.b16 %v125
    %v351 = vunpack.c.h.b16 %v125
    %v352 = vunpack.c.l.b16 %v126
    %v353 = vunpack.c.h.b16 %v126
    %v354 = vunpack.c.l.b16 %v127
    %v355 = vunpack.c.h.b16 %v127
    %v356 = vunpack.c.l.b16 %v128
    %v357 = vunpack.c.h.b16 %v128
    %v358 = vunpack.c.l.b16 %v129
    %v359 = vunpack.c.h.b16 %v129
    %v360 = vunpack.c.l.b16 %v130
    %v361 = vunpack.c.h.b16 %v130
    %v362 = vunpack.c.l.b16 %v131
    %v363 = vunpack.c.h.b16 %v131
    %v364 = vunpack.c.l.b16 %v132
    %v365 = vunpack.c.h.b16 %v132
    %v366 = vunpack.c.l.b16 %v133
    %v367 = vunpack.c.h.b16 %v133
    %v368 = vunpack.c.l.b16 %v134
    %v369 = vunpack.c.h.b16 %v134
    %v370 = vunpack.c.l.b16 %v135
    %v371 = vunpack.c.h.b16 %v135
    %v372 = vunpack.c.l.b16 %v136
    %v373 = vunpack.c.h.b16 %v136
    %v374 = vunpack.c.l.b16 %v137
    %v375 = vunpack.c.h.b16 %v137
    %v376 = vunpack.c.l.b16 %v138
    %v377 = vunpack.c.h.b16 %v138
    %v378 = vunpack.c.l.b16 %v139
    %v379 = vunpack.c.h.b16 %v139
    %v380 = vunpack.c.l.b16 %v140
    %v381 = vunpack.c.h.b16 %v140
    %v382 = vunpack.c.l.b16 %v141
    %v383 = vunpack.c.h.b16 %v141
    %v384 = vunpack.c.l.b16 %v142
    %v385 = vunpack.c.h.b16 %v142
    %v386 = vunpack.c.l.b16 %v143
    %v387 = vunpack.c.h.b16 %v143
    %v388 = vunpack.c.l.b16 %v144
    %v389 = vunpack.c.h.b16 %v144
    %v390 = vunpack.c.l.b16 %v145
    %v391 = vunpack.c.h.b16 %v145
    %v392 = vunpack.c.l.b16 %v146
    %v393 = vunpack.c.h.b16 %v146
    %v394 = vunpack.c.l.b16 %v147
    %v395 = vunpack.c.h.b16 %v147
    %v396 = vunpack.c.l.b16 %v148
    %v397 = vunpack.c.h.b16 %v148
    %v398 = vunpack.c.l.b16 %v149
    %v399 = vunpack.c.h.b16 %v149
    %v400 = vunpack.c.l.b16 %v150
    %v401 = vunpack.c.h.b16 %v150
    %v402 = vunpack.c.l.b16 %v151
    %v403 = vunpack.c.h.b16 %v151
    %v404 = vpack.c.b16 %v324, %v320
    %v405 = vpack.c.b16 %v325, %v321
    %v406 = vpack.c.b16 %v326, %v322
    %v407 = vpack.c.b16 %v327, %v323
    %v408 = vpack.c.b16 %v332, %v328
    %v409 = vpack.c.b16 %v333, %v329
    %v410 = vpack.c.b16 %v334, %v330
    %v411 = vpack.c.b16 %v335, %v331
    %v412 = vpack.c.b16 %v340, %v336
    %v413 = vpack.c.b16 %v341, %v337
    %v414 = vpack.c.b16 %v342, %v338
    %v415 = vpack.c.b16 %v343, %v339
    %v416 = vpack.c.b16 %v348, %v344
    %v417 = vpack.c.b16 %v349, %v345
    %v418 = vpack.c.b16 %v350, %v346
    %v419 = vpack.c.b16 %v351, %v347
    %v420 = vpack.c.b16 %v356, %v352
    %v421 = vpack.c.b16 %v357, %v353
    %v422 = vpack.c.b16 %v358, %v354
    %v423 = vpack.c.b16 %v359, %v355
    %v424 = vpack.c.b16 %v364, %v360
    %v425 = vpack.c.b16 %v365, %v361
    %v426 = vpack.c.b16 %v366, %v362
    %v427 = vpack.c.b16 %v367, %v363
    %v428 = vpack.c.b16 %v372, %v368
    %v429 = vpack.c.b16 %v373, %v369
    %v430 = vpack.c.b16 %v374, %v370
    %v431 = vpack.c.b16 %v375, %v371
    %v432 = vpack.c.b16 %v380, %v376
    %v433 = vpack.c.b16 %v381, %v377
    %v434 = vpack.c.b16 %v382, %v378
    %v435 = vpack.c.b16 %v383, %v379
    %v436 = vpack.c.b16 %v388, %v384
    %v437 = vpack.c.b16 %v389, %v385
    %v438 = vpack.c.b16 %v390, %v386
    %v439 = vpack.c.b16 %v391, %v387
    %v440 = vpack.c.b16 %v396, %v392
    %v441 = vpack.c.b16 %v397, %v393
    %v442 = vpack.c.b16 %v398, %v394
    %v443 = vpack.c.b16 %v399, %v395
    %v444 = vpack.c.b16 %v400, %v400
    %v445 = vpack.c.b16 %v401, %v401
    %v446 = vpack.c.b16 %v402, %v402
    %v447 = vpack.c.b16 %v403, %v403
    %v541 = vunpack.c.l.b16 %v50
    %v542 = vunpack.c.l.b16 %v51
    %v543 = vunpack.c.l.b16 %v52
    %v544 = vunpack.c.l.b16 %v53
    %v545 = vunpack.c.l.b16 %v54
    %v546 = vunpack.c.l.b16 %v55
    %v547 = vunpack.c.l.b16 %v56
    %v548 = vunpack.c.l.b16 %v57
    %v549 = vunpack.c.l.b16 %v58
    %v550 = vunpack.c.l.b16 %v59
    %v551 = vunpack.c.l.b16 %v60
    %v552 = vunpack.c.l.b16 %v61
    %v553 = vunpack.c.l.b16 %v62
    %v554 = vunpack.c.l.b16 %v63
    %v555 = vunpack.c.l.b16 %v64
    %v556 = vunpack.c.l.b16 %v65
    %v557 = vunpack.c.l.b16 %v66
    %v558 = vunpack.c.l.b16 %v67
    %v559 = vunpack.c.l.b16 %v68
    %v560 = vunpack.c.l.b16 %v69
    %v561 = vunpack.c.l.b16 %v70
    %v562 = vunpack.c.l.b16 %v71
    %v563 = vunpack.c.l.b16 %v72
    %v564 = vunpack.c.l.b16 %v73
    %v565 = vunpack.c.l.b16 %v74
    %v566 = vunpack.c.l.b16 %v75
    %v567 = vunpack.c.l.b16 %v76
    %v568 = vunpack.c.l.b16 %v77
    %v569 = vunpack.c.l.b16 %v78
    %v570 = vunpack.c.l.b16 %v79
    %v571 = vunpack.c.l.b16 %v80
    %v572 = vunpack.c.l.b16 %v81
    %v573 = vunpack.c.l.b16 %v82
    %v574 = vunpack.c.l.b16 %v83
    %v575 = vunpack.c.l.b16 %v84
    %v576 = vunpack.c.l.b16 %v85
    %v577 = vunpack.c.l.b16 %v86
    %v578 = vunpack.c.l.b16 %v87
    %v579 = vunpack.c.l.b16 %v88
    %v580 = vunpack.c.l.b16 %v89
    %v581 = vunpack.c.l.b16 %v90
    %v582 = vunpack.c.l.b16 %v91
    %v583 = vunpack.c.l.b16 %v92
    %v584 = vunpack.c.l.b16 %v93
    %v585 = vunpack.c.l.b16 %v94
    %v586 = vunpack.c.l.b16 %v95
    %v587 = vunpack.c.l.b16 %v96
    %v588 = vunpack.c.l.b16 %v97
    %v589 = vunpack.c.l.b16 %v98
    %v590 = vunpack.c.l.b16 %v99
    %v591 = vunpack.c.l.b16 %v100
    %v592 = vunpack.c.l.b16 %v101
    %v593 = vunpack.c.l.b16 %v102
    %v594 = vunpack.c.l.b16 %v103
    %v595 = vunpack.c.l.b16 %v104
    %v596 = vunpack.c.l.b16 %v105
    %v597 = vunpack.c.l.b16 %v106
    %v598 = vunpack.c.l.b16 %v107
    %v599 = vunpack.c.l.b16 %v108
    %v600 = vunpack.c.l.b16 %v109
    %v601 = vpack.c.b16 %v542, %v541
    %v602 = vpack.c.b16 %v544, %v543
    %v603 = vpack.c.b16 %v546, %v545
    %v604 = vpack.c.b16 %v548, %v547
    %v605 = vpack.c.b16 %v550, %v549
    %v606 = vpack.c.b16 %v552, %v551
    %v607 = vpack.c.b16 %v554, %v553
    %v608 = vpack.c.b16 %v556, %v555
    %v609 = vpack.c.b16 %v558, %v557
    %v610 = vpack.c.b16 %v560, %v559
    %v611 = vpack.c.b16 %v562, %v561
    %v612 = vpack.c.b16 %v564, %v563
    %v613 = vpack.c.b16 %v566, %v565
    %v614 = vpack.c.b16 %v568, %v567
    %v615 = vpack.c.b16 %v570, %v569
    %v616 = vpack.c.b16 %v572, %v571
    %v617 = vpack.c.b16 %v574, %v573
    %v618 = vpack.c.b16 %v576, %v575
    %v619 = vpack.c.b16 %v578, %v577
    %v620 = vpack.c.b16 %v580, %v579
    %v621 = vpack.c.b16 %v582, %v581
    %v622 = vpack.c.b16 %v584, %v583
    %v623 = vpack.c.b16 %v586, %v585
    %v624 = vpack.c.b16 %v588, %v587
    %v625 = vpack.c.b16 %v590, %v589
    %v626 = vpack.c.b16 %v592, %v591
    %v627 = vpack.c.b16 %v594, %v593
    %v628 = vpack.c.b16 %v596, %v595
    %v629 = vpack.c.b16 %v598, %v597
    %v630 = vpack.c.b16 %v600, %v599
    %vm661 = vcmask 785408
    %v663 = vsel %vm661, %v407, 0
    %v666 = vsel %vm661, %v411, 0
    %v669 = vsel %vm661, %v415, 0
    %v672 = vsel %vm661, %v419, 0
    %v675 = vsel %vm661, %v423, 0
    %v678 = vsel %vm661, %v427, 0
    %v681 = vsel %vm661, %v431, 0
    %v684 = vsel %vm661, %v435, 0
    %v687 = vsel %vm661, %v439, 0
    %v690 = vsel %vm661, %v443, 0
    %v693 = vsel %vm661, %v447, 0
    %695 = vmatprep.subr.bf16.mxu0 0
    %696 = vmatpush1.bf16.msra.mxu0 %v601
    %697 = vmatprep.subr.bf16.mxu0 0
    %698 = vmatpush1.bf16.msra.mxu0 %v602
    %699 = vmatprep.subr.bf16.mxu0 0
    %700 = vmatpush1.bf16.msra.mxu0 %v603
    %701 = vmatprep.subr.bf16.mxu0 0
    %702 = vmatpush1.bf16.msra.mxu0 %v604
    %703 = vmatprep.subr.bf16.mxu0 0
    %704 = vmatpush1.bf16.msra.mxu0 %v605
    %705 = vmatprep.subr.bf16.mxu0 0
    %706 = vmatpush1.bf16.msra.mxu0 %v606
    %707 = vmatprep.subr.bf16.mxu0 0
    %708 = vmatpush1.bf16.msra.mxu0 %v607
    %709 = vmatprep.subr.bf16.mxu0 0
    %710 = vmatpush1.bf16.msra.mxu0 %v608
    %711 = vmatprep.subr.bf16.mxu0 0
    %712 = vmatpush1.bf16.msra.mxu0 %v609
    %713 = vmatprep.subr.bf16.mxu0 0
    %714 = vmatpush1.bf16.msra.mxu0 %v610
    %715 = vmatprep.subr.bf16.mxu0 0
    %716 = vmatpush1.bf16.msra.mxu0 %v611
    %717 = vmatprep.subr.bf16.mxu0 0
    %718 = vmatpush1.bf16.msra.mxu0 %v612
    %719 = vmatprep.subr.bf16.mxu0 0
    %720 = vmatpush1.bf16.msra.mxu0 %v613
    %721 = vmatprep.subr.bf16.mxu0 0
    %722 = vmatpush1.bf16.msra.mxu0 %v614
    %723 = vmatprep.subr.bf16.mxu0 0
    %724 = vmatpush1.bf16.msra.mxu0 %v615
    %725 = vmatprep.subr.bf16.mxu0 0
    %726 = vmatpush1.bf16.msra.mxu0 %v616
    %727 = vmatprep.mubr.bf16.mxu0 %v405
    %728 = vmatmul.mubr.bf16.gmra.mrb[0].mxu0 %v404
    %v729 = vpop.f32.mrb[0].mxu0
    %v730 = vadd.f32 %v176, %v729
    %v731 = vpop.f32.mrb[0].mxu0
    %v732 = vpop.f32.mrb[0].mxu0
    %v733 = vadd.f32 %v181, %v732
    %v734 = vpop.f32.mrb[0].mxu0
    %735 = vmatprep.mubr.bf16.mxu0 %v409
    %736 = vmatmul.mubr.bf16.gmra.mrb[0].mxu0 %v408
    %v737 = vpop.f32.mrb[0].mxu0
    %v738 = vadd.f32 %v186, %v737
    %v739 = vpop.f32.mrb[0].mxu0
    %v740 = vpop.f32.mrb[0].mxu0
    %v741 = vadd.f32 %v191, %v740
    %v742 = vpop.f32.mrb[0].mxu0
    %743 = vmatprep.mubr.bf16.mxu0 %v413
    %744 = vmatmul.mubr.bf16.gmra.mrb[0].mxu0 %v412
    %v745 = vpop.f32.mrb[0].mxu0
    %v746 = vadd.f32 %v196, %v745
    %v747 = vpop.f32.mrb[0].mxu0
    %v748 = vpop.f32.mrb[0].mxu0
    %v749 = vadd.f32 %v201, %v748
    %v750 = vpop.f32.mrb[0].mxu0
    %751 = vmatprep.mubr.bf16.mxu0 %v417
    %752 = vmatmul.mubr.bf16.gmra.mrb[0].mxu0 %v416
    %v753 = vpop.f32.mrb[0].mxu0
    %v754 = vadd.f32 %v206, %v753
    %v755 = vpop.f32.mrb[0].mxu0
    %v756 = vpop.f32.mrb[0].mxu0
    %v757 = vadd.f32 %v211, %v756
    %v758 = vpop.f32.mrb[0].mxu0
    %759 = vmatprep.mubr.bf16.mxu0 %v421
    %760 = vmatmul.mubr.bf16.gmra.mrb[0].mxu0 %v420
    %v761 = vpop.f32.mrb[0].mxu0
    %v762 = vadd.f32 %v216, %v761
    %v763 = vpop.f32.mrb[0].mxu0
    %v764 = vpop.f32.mrb[0].mxu0
    %v765 = vadd.f32 %v221, %v764
    %v766 = vpop.f32.mrb[0].mxu0
    %767 = vmatprep.mubr.bf16.mxu0 %v425
    %768 = vmatmul.mubr.bf16.gmra.mrb[0].mxu0 %v424
    %v769 = vpop.f32.mrb[0].mxu0
    %v770 = vadd.f32 %v226, %v769
    %v771 = vpop.f32.mrb[0].mxu0
    %v772 = vpop.f32.mrb[0].mxu0
    %v773 = vadd.f32 %v231, %v772
    %v774 = vpop.f32.mrb[0].mxu0
    %775 = vmatprep.mubr.bf16.mxu0 %v429
    %776 = vmatmul.mubr.bf16.gmra.mrb[0].mxu0 %v428
    %v777 = vpop.f32.mrb[0].mxu0
    %v778 = vadd.f32 %v236, %v777
    %v779 = vpop.f32.mrb[0].mxu0
    %v780 = vpop.f32.mrb[0].mxu0
    %v781 = vadd.f32 %v241, %v780
    %v782 = vpop.f32.mrb[0].mxu0
    %783 = vmatprep.mubr.bf16.mxu0 %v433
    %784 = vmatmul.mubr.bf16.gmra.mrb[0].mxu0 %v432
    %v785 = vpop.f32.mrb[0].mxu0
    %v786 = vadd.f32 %v246, %v785
    %v787 = vpop.f32.mrb[0].mxu0
    %v788 = vpop.f32.mrb[0].mxu0
    %v789 = vadd.f32 %v251, %v788
    %v790 = vpop.f32.mrb[0].mxu0
    %791 = vmatprep.mubr.bf16.mxu0 %v437
    %792 = vmatmul.mubr.bf16.gmra.mrb[0].mxu0 %v436
    %v793 = vpop.f32.mrb[0].mxu0
    %v794 = vadd.f32 %v256, %v793
    %v795 = vpop.f32.mrb[0].mxu0
    %v796 = vpop.f32.mrb[0].mxu0
    %v797 = vadd.f32 %v261, %v796
    %v798 = vpop.f32.mrb[0].mxu0
    %799 = vmatprep.mubr.bf16.mxu0 %v441
    %800 = vmatmul.mubr.bf16.gmra.mrb[0].mxu0 %v440
    %v801 = vpop.f32.mrb[0].mxu0
    %v802 = vadd.f32 %v266, %v801
    %v803 = vpop.f32.mrb[0].mxu0
    %v804 = vpop.f32.mrb[0].mxu0
    %v805 = vadd.f32 %v271, %v804
    %v806 = vpop.f32.mrb[0].mxu0
    %807 = vmatprep.mubr.bf16.mxu0 %v445
    %808 = vmatmul.mubr.bf16.gmra.mrb[0].mxu0 %v444
    %v809 = vpop.f32.mrb[0].mxu0
    %v810 = vadd.f32 %v276, %v809
    %v811 = vpop.f32.mrb[0].mxu0
    %v812 = vpop.f32.mrb[0].mxu0
    %v813 = vpop.f32.mrb[0].mxu0
    %814 = vdwg.mxu0
    %815 = vmatprep.subr.bf16.mxu0 0
    %816 = vmatpush1.bf16.msra.mxu0 %v617
    %817 = vmatprep.subr.bf16.mxu0 0
    %818 = vmatpush1.bf16.msra.mxu0 %v618
    %819 = vmatprep.subr.bf16.mxu0 0
    %820 = vmatpush1.bf16.msra.mxu0 %v619
    %821 = vmatprep.subr.bf16.mxu0 0
    %822 = vmatpush1.bf16.msra.mxu0 %v620
    %823 = vmatprep.subr.bf16.mxu0 0
    %824 = vmatpush1.bf16.msra.mxu0 %v621
    %825 = vmatprep.subr.bf16.mxu0 0
    %826 = vmatpush1.bf16.msra.mxu0 %v622
    %827 = vmatprep.subr.bf16.mxu0 0
    %828 = vmatpush1.bf16.msra.mxu0 %v623
    %829 = vmatprep.subr.bf16.mxu0 0
    %830 = vmatpush1.bf16.msra.mxu0 %v624
    %831 = vmatprep.subr.bf16.mxu0 0
    %832 = vmatpush1.bf16.msra.mxu0 %v625
    %833 = vmatprep.subr.bf16.mxu0 0
    %834 = vmatpush1.bf16.msra.mxu0 %v626
    %835 = vmatprep.subr.bf16.mxu0 0
    %836 = vmatpush1.bf16.msra.mxu0 %v627
    %837 = vmatprep.subr.bf16.mxu0 0
    %838 = vmatpush1.bf16.msra.mxu0 %v628
    %839 = vmatprep.subr.bf16.mxu0 0
    %840 = vmatpush1.bf16.msra.mxu0 %v629
    %841 = vmatprep.subr.bf16.mxu0 0
    %842 = vmatpush1.bf16.msra.mxu0 %v630
    %843 = vmatprep.subr.bf16.mxu0 0
    %844 = vmatpush1.bf16.msra.mxu0 0
    %845 = vmatprep.subr.bf16.mxu0 0
    %846 = vmatpush1.bf16.msra.mxu0 0
    %847 = vmatprep.mubr.bf16.mxu0 %v663
    %848 = vmatmul.mubr.bf16.gmra.mrb[0].mxu0 %v406
    %v849 = vpop.f32.mrb[0].mxu0
    %v850 = vadd.f32 %v730, %v849
    %v851 = vpop.f32.mrb[0].mxu0
    %v852 = vpop.f32.mrb[0].mxu0
    %v853 = vadd.f32 %v733, %v852
    %v854 = vpop.f32.mrb[0].mxu0
    %855 = vmatprep.mubr.bf16.mxu0 %v666
    %856 = vmatmul.mubr.bf16.gmra.mrb[0].mxu0 %v410
    %v857 = vpop.f32.mrb[0].mxu0
    %v858 = vadd.f32 %v738, %v857
    %v859 = vpop.f32.mrb[0].mxu0
    %v860 = vpop.f32.mrb[0].mxu0
    %v861 = vadd.f32 %v741, %v860
    %v862 = vpop.f32.mrb[0].mxu0
    %863 = vmatprep.mubr.bf16.mxu0 %v669
    %864 = vmatmul.mubr.bf16.gmra.mrb[0].mxu0 %v414
    %v865 = vpop.f32.mrb[0].mxu0
    %v866 = vadd.f32 %v746, %v865
    %v867 = vpop.f32.mrb[0].mxu0
    %v868 = vpop.f32.mrb[0].mxu0
    %v869 = vadd.f32 %v749, %v868
    %v870 = vpop.f32.mrb[0].mxu0
    %871 = vmatprep.mubr.bf16.mxu0 %v672
    %872 = vmatmul.mubr.bf16.gmra.mrb[0].mxu0 %v418
    %v873 = vpop.f32.mrb[0].mxu0
    %v874 = vadd.f32 %v754, %v873
    %v875 = vpop.f32.mrb[0].mxu0
    %v876 = vpop.f32.mrb[0].mxu0
    %v877 = vadd.f32 %v757, %v876
    %v878 = vpop.f32.mrb[0].mxu0
    %879 = vmatprep.mubr.bf16.mxu0 %v675
    %880 = vmatmul.mubr.bf16.gmra.mrb[0].mxu0 %v422
    %v881 = vpop.f32.mrb[0].mxu0
    %v882 = vadd.f32 %v762, %v881
    %v883 = vpop.f32.mrb[0].mxu0
    %v884 = vpop.f32.mrb[0].mxu0
    %v885 = vadd.f32 %v765, %v884
    %v886 = vpop.f32.mrb[0].mxu0
    %887 = vmatprep.mubr.bf16.mxu0 %v678
    %888 = vmatmul.mubr.bf16.gmra.mrb[0].mxu0 %v426
    %v889 = vpop.f32.mrb[0].mxu0
    %v890 = vadd.f32 %v770, %v889
    %v891 = vpop.f32.mrb[0].mxu0
    %v892 = vpop.f32.mrb[0].mxu0
    %v893 = vadd.f32 %v773, %v892
    %v894 = vpop.f32.mrb[0].mxu0
    %895 = vmatprep.mubr.bf16.mxu0 %v681
    %896 = vmatmul.mubr.bf16.gmra.mrb[0].mxu0 %v430
    %v897 = vpop.f32.mrb[0].mxu0
    %v898 = vadd.f32 %v778, %v897
    %v899 = vpop.f32.mrb[0].mxu0
    %v900 = vpop.f32.mrb[0].mxu0
    %v901 = vadd.f32 %v781, %v900
    %v902 = vpop.f32.mrb[0].mxu0
    %903 = vmatprep.mubr.bf16.mxu0 %v684
    %904 = vmatmul.mubr.bf16.gmra.mrb[0].mxu0 %v434
    %v905 = vpop.f32.mrb[0].mxu0
    %v906 = vadd.f32 %v786, %v905
    %v907 = vpop.f32.mrb[0].mxu0
    %v908 = vpop.f32.mrb[0].mxu0
    %v909 = vadd.f32 %v789, %v908
    %v910 = vpop.f32.mrb[0].mxu0
    %911 = vmatprep.mubr.bf16.mxu0 %v687
    %912 = vmatmul.mubr.bf16.gmra.mrb[0].mxu0 %v438
    %v913 = vpop.f32.mrb[0].mxu0
    %v914 = vadd.f32 %v794, %v913
    %v915 = vpop.f32.mrb[0].mxu0
    %v916 = vpop.f32.mrb[0].mxu0
    %v917 = vadd.f32 %v797, %v916
    %v918 = vpop.f32.mrb[0].mxu0
    %919 = vmatprep.mubr.bf16.mxu0 %v690
    %920 = vmatmul.mubr.bf16.gmra.mrb[0].mxu0 %v442
    %v921 = vpop.f32.mrb[0].mxu0
    %v922 = vadd.f32 %v802, %v921
    %v923 = vpop.f32.mrb[0].mxu0
    %v924 = vpop.f32.mrb[0].mxu0
    %v925 = vadd.f32 %v805, %v924
    %v926 = vpop.f32.mrb[0].mxu0
    %927 = vmatprep.mubr.bf16.mxu0 %v693
    %928 = vmatmul.mubr.bf16.gmra.mrb[0].mxu0 %v446
    %v929 = vpop.f32.mrb[0].mxu0
    %v930 = vadd.f32 %v810, %v929
    %v931 = vpop.f32.mrb[0].mxu0
    %v932 = vpop.f32.mrb[0].mxu0
    %v933 = vpop.f32.mrb[0].mxu0
    %934 = vdwg.mxu0
    %v935 = vmax.f32 %v850, 0.0
    %v936 = vmax.f32 %v853, 0.0
    %v937 = vmax.f32 %v858, 0.0
    %v938 = vmax.f32 %v861, 0.0
    %v939 = vmax.f32 %v866, 0.0
    %v940 = vmax.f32 %v869, 0.0
    %v941 = vmax.f32 %v874, 0.0
    %v942 = vmax.f32 %v877, 0.0
    %v943 = vmax.f32 %v882, 0.0
    %v944 = vmax.f32 %v885, 0.0
    %v945 = vmax.f32 %v890, 0.0
    %v946 = vmax.f32 %v893, 0.0
    %v947 = vmax.f32 %v898, 0.0
    %v948 = vmax.f32 %v901, 0.0
    %v949 = vmax.f32 %v906, 0.0
    %v950 = vmax.f32 %v909, 0.0
    %v951 = vmax.f32 %v914, 0.0
    %v952 = vmax.f32 %v917, 0.0
    %v953 = vmax.f32 %v922, 0.0
    %v954 = vmax.f32 %v925, 0.0
    %v955 = vmax.f32 %v930, 0.0
    %s956 = smul.u32 %s40, 168
    %s957 = scalar_lea.vmem [#allocation2], %s956
    %958 = vst [vmem:[%s957] sm:$0xff] %v935
    %959 = vst [vmem:[%s957 + $0x8] sm:$0xff] %v936
    %960 = vst [vmem:[%s957 + $0x10] sm:$0xff] %v937
    %961 = vst [vmem:[%s957 + $0x18] sm:$0xff] %v938
    %962 = vst [vmem:[%s957 + $0x20] sm:$0xff] %v939
    %963 = vst [vmem:[%s957 + $0x28] sm:$0xff] %v940
    %964 = vst [vmem:[%s957 + $0x30] sm:$0xff] %v941
    %965 = vst [vmem:[%s957 + $0x38] sm:$0xff] %v942
    %966 = vst [vmem:[%s957 + $0x40] sm:$0xff] %v943
    %967 = vst [vmem:[%s957 + $0x48] sm:$0xff] %v944
    %968 = vst [vmem:[%s957 + $0x50] sm:$0xff] %v945
    %969 = vst [vmem:[%s957 + $0x58] sm:$0xff] %v946
    %970 = vst [vmem:[%s957 + $0x60] sm:$0xff] %v947
    %971 = vst [vmem:[%s957 + $0x68] sm:$0xff] %v948
    %972 = vst [vmem:[%s957 + $0x70] sm:$0xff] %v949
    %973 = vst [vmem:[%s957 + $0x78] sm:$0xff] %v950
    %974 = vst [vmem:[%s957 + $0x80] sm:$0xff] %v951
    %975 = vst [vmem:[%s957 + $0x88] sm:$0xff] %v952
    %976 = vst [vmem:[%s957 + $0x90] sm:$0xff] %v953
    %977 = vst [vmem:[%s957 + $0x98] sm:$0xff] %v954
    %978 = vst [vmem:[%s957 + $0xa0] sm:$0xff] %v955
  $region50: #{model_forward.1} parent=0 // loop_footer
    %s44 = sadd.s32 1, %s40
  $region51: #{model_forward.1} parent=0 // loop_footer_branch
    %39 = sbr.rel target = $region47
  $region52: #{model_forward.1} parent=0 // loop_exit
    _
  %979 = vst [vmem:[#allocation2 + $0x1260] sm:$0xff] 0.0
  loop: start=0, step=1, limit=27
  $region53: #{model_forward.1} parent=0 // loop_pre_header
    _
  $region54: #{model_forward.1} parent=0 // loop_header
    %s981 = sphi 0, %s985
    %p982 = scmp.ge.s32.totalorder %s981, 27
  $region55: #{model_forward.1} parent=0 // loop_header_branch
    %984 = sbr.rel (%p982) target = $region59
  $region56: #{model_forward.1} parent=0 // loop_body
    %s986 = smul.u32 %s981, 168
    %s987 = scalar_lea.vmem [#allocation2], %s986
    %v988 = vld [vmem:[%s987] sm:$0xff]
    %v989 = vld [vmem:[%s987 + $0x8] sm:$0xff]
    %v990 = vld [vmem:[%s987 + $0x10] sm:$0xff]
    %v991 = vld [vmem:[%s987 + $0x18] sm:$0xff]
    %v992 = vld [vmem:[%s987 + $0x20] sm:$0xff]
    %v993 = vld [vmem:[%s987 + $0x28] sm:$0xff]
    %v994 = vld [vmem:[%s987 + $0x30] sm:$0xff]
    %v995 = vld [vmem:[%s987 + $0x38] sm:$0xff]
    %v996 = vld [vmem:[%s987 + $0x40] sm:$0xff]
    %v997 = vld [vmem:[%s987 + $0x48] sm:$0xff]
    %v998 = vld [vmem:[%s987 + $0x50] sm:$0xff]
    %v999 = vld [vmem:[%s987 + $0x58] sm:$0xff]
    %v1000 = vld [vmem:[%s987 + $0x60] sm:$0xff]
    %v1001 = vld [vmem:[%s987 + $0x68] sm:$0xff]
    %v1002 = vld [vmem:[%s987 + $0x70] sm:$0xff]
    %v1003 = vld [vmem:[%s987 + $0x78] sm:$0xff]
    %v1004 = vld [vmem:[%s987 + $0x80] sm:$0xff]
    %v1005 = vld [vmem:[%s987 + $0x88] sm:$0xff]
    %v1006 = vld [vmem:[%s987 + $0x90] sm:$0xff]
    %v1007 = vld [vmem:[%s987 + $0x98] sm:$0xff]
    %v1008 = vld [vmem:[%s987 + $0xa0] sm:$0xff]
    %s1009 = sadd.s32 %s986, 1
    %s1010 = scalar_lea.vmem [#allocation2], %s1009
    %v1011 = vld [vmem:[%s1010] sm:$0xff]
    %v1012 = vld [vmem:[%s1010 + $0x8] sm:$0xff]
    %v1013 = vld [vmem:[%s1010 + $0x10] sm:$0xff]
    %v1014 = vld [vmem:[%s1010 + $0x18] sm:$0xff]
    %v1015 = vld [vmem:[%s1010 + $0x20] sm:$0xff]
    %v1016 = vld [vmem:[%s1010 + $0x28] sm:$0xff]
    %v1017 = vld [vmem:[%s1010 + $0x30] sm:$0xff]
    %v1018 = vld [vmem:[%s1010 + $0x38] sm:$0xff]
    %v1019 = vld [vmem:[%s1010 + $0x40] sm:$0xff]
    %v1020 = vld [vmem:[%s1010 + $0x48] sm:$0xff]
    %v1021 = vld [vmem:[%s1010 + $0x50] sm:$0xff]
    %v1022 = vld [vmem:[%s1010 + $0x58] sm:$0xff]
    %v1023 = vld [vmem:[%s1010 + $0x60] sm:$0xff]
    %v1024 = vld [vmem:[%s1010 + $0x68] sm:$0xff]
    %v1025 = vld [vmem:[%s1010 + $0x70] sm:$0xff]
    %v1026 = vld [vmem:[%s1010 + $0x78] sm:$0xff]
    %v1027 = vld [vmem:[%s1010 + $0x80] sm:$0xff]
    %v1028 = vld [vmem:[%s1010 + $0x88] sm:$0xff]
    %v1029 = vld [vmem:[%s1010 + $0x90] sm:$0xff]
    %v1030 = vld [vmem:[%s1010 + $0x98] sm:$0xff]
    %v1031 = vld [vmem:[%s1010 + $0xa0] sm:$0xff]
    %v1032 = vmax.f32 %v988, %v1011
    %v1033 = vmax.f32 %v989, %v1012
    %v1034 = vmax.f32 %v990, %v1013
    %v1035 = vmax.f32 %v991, %v1014
    %v1036 = vmax.f32 %v992, %v1015
    %v1037 = vmax.f32 %v993, %v1016
    %v1038 = vmax.f32 %v994, %v1017
    %v1039 = vmax.f32 %v995, %v1018
    %v1040 = vmax.f32 %v996, %v1019
    %v1041 = vmax.f32 %v997, %v1020
    %v1042 = vmax.f32 %v998, %v1021
    %v1043 = vmax.f32 %v999, %v1022
    %v1044 = vmax.f32 %v1000, %v1023
    %v1045 = vmax.f32 %v1001, %v1024
    %v1046 = vmax.f32 %v1002, %v1025
    %v1047 = vmax.f32 %v1003, %v1026
    %v1048 = vmax.f32 %v1004, %v1027
    %v1049 = vmax.f32 %v1005, %v1028
    %v1050 = vmax.f32 %v1006, %v1029
    %v1051 = vmax.f32 %v1007, %v1030
    %v1052 = vmax.f32 %v1008, %v1031
    %s1053 = sadd.s32 %s986, 168
    %s1054 = scalar_lea.vmem [#allocation2], %s1053
    %v1055 = vld [vmem:[%s1054] sm:$0xff]
    %v1056 = vld [vmem:[%s1054 + $0x8] sm:$0xff]
    %v1057 = vld [vmem:[%s1054 + $0x10] sm:$0xff]
    %v1058 = vld [vmem:[%s1054 + $0x18] sm:$0xff]
    %v1059 = vld [vmem:[%s1054 + $0x20] sm:$0xff]
    %v1060 = vld [vmem:[%s1054 + $0x28] sm:$0xff]
    %v1061 = vld [vmem:[%s1054 + $0x30] sm:$0xff]
    %v1062 = vld [vmem:[%s1054 + $0x38] sm:$0xff]
    %v1063 = vld [vmem:[%s1054 + $0x40] sm:$0xff]
    %v1064 = vld [vmem:[%s1054 + $0x48] sm:$0xff]
    %v1065 = vld [vmem:[%s1054 + $0x50] sm:$0xff]
    %v1066 = vld [vmem:[%s1054 + $0x58] sm:$0xff]
    %v1067 = vld [vmem:[%s1054 + $0x60] sm:$0xff]
    %v1068 = vld [vmem:[%s1054 + $0x68] sm:$0xff]
    %v1069 = vld [vmem:[%s1054 + $0x70] sm:$0xff]
    %v1070 = vld [vmem:[%s1054 + $0x78] sm:$0xff]
    %v1071 = vld [vmem:[%s1054 + $0x80] sm:$0xff]
    %v1072 = vld [vmem:[%s1054 + $0x88] sm:$0xff]
    %v1073 = vld [vmem:[%s1054 + $0x90] sm:$0xff]
    %v1074 = vld [vmem:[%s1054 + $0x98] sm:$0xff]
    %v1075 = vld [vmem:[%s1054 + $0xa0] sm:$0xff]
    %v1076 = vmax.f32 %v1032, %v1055
    %v1077 = vmax.f32 %v1033, %v1056
    %v1078 = vmax.f32 %v1034, %v1057
    %v1079 = vmax.f32 %v1035, %v1058
    %v1080 = vmax.f32 %v1036, %v1059
    %v1081 = vmax.f32 %v1037, %v1060
    %v1082 = vmax.f32 %v1038, %v1061
    %v1083 = vmax.f32 %v1039, %v1062
    %v1084 = vmax.f32 %v1040, %v1063
    %v1085 = vmax.f32 %v1041, %v1064
    %v1086 = vmax.f32 %v1042, %v1065
    %v1087 = vmax.f32 %v1043, %v1066
    %v1088 = vmax.f32 %v1044, %v1067
    %v1089 = vmax.f32 %v1045, %v1068
    %v1090 = vmax.f32 %v1046, %v1069
    %v1091 = vmax.f32 %v1047, %v1070
    %v1092 = vmax.f32 %v1048, %v1071
    %v1093 = vmax.f32 %v1049, %v1072
    %v1094 = vmax.f32 %v1050, %v1073
    %v1095 = vmax.f32 %v1051, %v1074
    %v1096 = vmax.f32 %v1052, %v1075
    %s1097 = sadd.s32 %s986, 169
    %s1098 = scalar_lea.vmem [#allocation2], %s1097
    %v1099 = vld [vmem:[%s1098] sm:$0xff]
    %v1100 = vld [vmem:[%s1098 + $0x8] sm:$0xff]
    %v1101 = vld [vmem:[%s1098 + $0x10] sm:$0xff]
    %v1102 = vld [vmem:[%s1098 + $0x18] sm:$0xff]
    %v1103 = vld [vmem:[%s1098 + $0x20] sm:$0xff]
    %v1104 = vld [vmem:[%s1098 + $0x28] sm:$0xff]
    %v1105 = vld [vmem:[%s1098 + $0x30] sm:$0xff]
    %v1106 = vld [vmem:[%s1098 + $0x38] sm:$0xff]
    %v1107 = vld [vmem:[%s1098 + $0x40] sm:$0xff]
    %v1108 = vld [vmem:[%s1098 + $0x48] sm:$0xff]
    %v1109 = vld [vmem:[%s1098 + $0x50] sm:$0xff]
    %v1110 = vld [vmem:[%s1098 + $0x58] sm:$0xff]
    %v1111 = vld [vmem:[%s1098 + $0x60] sm:$0xff]
    %v1112 = vld [vmem:[%s1098 + $0x68] sm:$0xff]
    %v1113 = vld [vmem:[%s1098 + $0x70] sm:$0xff]
    %v1114 = vld [vmem:[%s1098 + $0x78] sm:$0xff]
    %v1115 = vld [vmem:[%s1098 + $0x80] sm:$0xff]
    %v1116 = vld [vmem:[%s1098 + $0x88] sm:$0xff]
    %v1117 = vld [vmem:[%s1098 + $0x90] sm:$0xff]
    %v1118 = vld [vmem:[%s1098 + $0x98] sm:$0xff]
    %v1119 = vld [vmem:[%s1098 + $0xa0] sm:$0xff]
    %v1120 = vmax.f32 %v1076, %v1099
    %v1121 = vmax.f32 %v1077, %v1100
    %v1122 = vmax.f32 %v1078, %v1101
    %v1123 = vmax.f32 %v1079, %v1102
    %v1124 = vmax.f32 %v1080, %v1103
    %v1125 = vmax.f32 %v1081, %v1104
    %v1126 = vmax.f32 %v1082, %v1105
    %v1127 = vmax.f32 %v1083, %v1106
    %v1128 = vmax.f32 %v1084, %v1107
    %v1129 = vmax.f32 %v1085, %v1108
    %v1130 = vmax.f32 %v1086, %v1109
    %v1131 = vmax.f32 %v1087, %v1110
    %v1132 = vmax.f32 %v1088, %v1111
    %v1133 = vmax.f32 %v1089, %v1112
    %v1134 = vmax.f32 %v1090, %v1113
    %v1135 = vmax.f32 %v1091, %v1114
    %v1136 = vmax.f32 %v1092, %v1115
    %v1137 = vmax.f32 %v1093, %v1116
    %v1138 = vmax.f32 %v1094, %v1117
    %v1139 = vmax.f32 %v1095, %v1118
    %v1140 = vmax.f32 %v1096, %v1119
    %v1141 = vpack.c.bf16 %v1121, %v1120
    %v1142 = vpack.c.bf16 %v1123, %v1122
    %v1143 = vpack.c.bf16 %v1125, %v1124
    %v1144 = vpack.c.bf16 %v1127, %v1126
    %v1145 = vpack.c.bf16 %v1129, %v1128
    %v1146 = vpack.c.bf16 %v1131, %v1130
    %v1147 = vpack.c.bf16 %v1133, %v1132
    %v1148 = vpack.c.bf16 %v1135, %v1134
    %v1149 = vpack.c.bf16 %v1137, %v1136
    %v1150 = vpack.c.bf16 %v1139, %v1138
    %v1151 = vpack.c.bf16 %v1140, %v1140
    %v1163 = vunpack.c.l.b16 %v1141
    %v1164 = vunpack.c.h.b16 %v1141
    %v1165 = vunpack.c.l.b16 %v1142
    %v1166 = vunpack.c.h.b16 %v1142
    %v1167 = vunpack.c.l.b16 %v1143
    %v1168 = vunpack.c.h.b16 %v1143
    %v1169 = vunpack.c.l.b16 %v1144
    %v1170 = vunpack.c.h.b16 %v1144
    %v1171 = vunpack.c.l.b16 %v1145
    %v1172 = vunpack.c.h.b16 %v1145
    %v1173 = vunpack.c.l.b16 %v1146
    %v1174 = vunpack.c.h.b16 %v1146
    %v1175 = vunpack.c.l.b16 %v1147
    %v1176 = vunpack.c.h.b16 %v1147
    %v1177 = vunpack.c.l.b16 %v1148
    %v1178 = vunpack.c.h.b16 %v1148
    %v1179 = vunpack.c.l.b16 %v1149
    %v1180 = vunpack.c.h.b16 %v1149
    %v1181 = vunpack.c.l.b16 %v1150
    %v1182 = vunpack.c.h.b16 %v1150
    %v1183 = vunpack.c.l.b16 %v1151
    %v1184 = vpack.c.b16 %v1163, %v1163
    %v1185 = vpack.c.b16 %v1164, %v1164
    %v1186 = vpack.c.b16 %v1165, %v1165
    %v1187 = vpack.c.b16 %v1166, %v1166
    %v1188 = vpack.c.b16 %v1167, %v1167
    %v1189 = vpack.c.b16 %v1168, %v1168
    %v1190 = vpack.c.b16 %v1169, %v1169
    %v1191 = vpack.c.b16 %v1170, %v1170
    %v1192 = vpack.c.b16 %v1171, %v1171
    %v1193 = vpack.c.b16 %v1172, %v1172
    %v1194 = vpack.c.b16 %v1173, %v1173
    %v1195 = vpack.c.b16 %v1174, %v1174
    %v1196 = vpack.c.b16 %v1175, %v1175
    %v1197 = vpack.c.b16 %v1176, %v1176
    %v1198 = vpack.c.b16 %v1177, %v1177
    %v1199 = vpack.c.b16 %v1178, %v1178
    %v1200 = vpack.c.b16 %v1179, %v1179
    %v1201 = vpack.c.b16 %v1180, %v1180
    %v1202 = vpack.c.b16 %v1181, %v1181
    %v1203 = vpack.c.b16 %v1182, %v1182
    %v1204 = vpack.c.b16 %v1183, %v1183
    %s1226 = sshra.s32 %s986, 3
    %s1227 = sand.u32 %s986, 7
    %s1228 = smul.addr %s1226, 4
    %s1229 = scalar_lea.vmem [#allocation3], %s1228
    %1230 = vst [vmem:[%s1229] sm:$0xf] %v1184
    %1231 = vst [vmem:[%s1229 + $0x4] sm:$0xf] %v1185
    %1232 = vst [vmem:[%s1229 + $0x8] sm:$0xf] %v1186
    %1233 = vst [vmem:[%s1229 + $0xc] sm:$0xf] %v1187
    %1234 = vst [vmem:[%s1229 + $0x10] sm:$0xf] %v1188
    %1235 = vst [vmem:[%s1229 + $0x14] sm:$0xf] %v1189
    %1236 = vst [vmem:[%s1229 + $0x18] sm:$0xf] %v1190
    %1237 = vst [vmem:[%s1229 + $0x1c] sm:$0xf] %v1191
    %1238 = vst [vmem:[%s1229 + $0x20] sm:$0xf] %v1192
    %1239 = vst [vmem:[%s1229 + $0x24] sm:$0xf] %v1193
    %1240 = vst [vmem:[%s1229 + $0x28] sm:$0xf] %v1194
    %1241 = vst [vmem:[%s1229 + $0x2c] sm:$0xf] %v1195
    %1242 = vst [vmem:[%s1229 + $0x30] sm:$0xf] %v1196
    %1243 = vst [vmem:[%s1229 + $0x34] sm:$0xf] %v1197
    %1244 = vst [vmem:[%s1229 + $0x38] sm:$0xf] %v1198
    %1245 = vst [vmem:[%s1229 + $0x3c] sm:$0xf] %v1199
    %1246 = vst [vmem:[%s1229 + $0x40] sm:$0xf] %v1200
    %1247 = vst [vmem:[%s1229 + $0x44] sm:$0xf] %v1201
    %1248 = vst [vmem:[%s1229 + $0x48] sm:$0xf] %v1202
    %1249 = vst [vmem:[%s1229 + $0x4c] sm:$0xf] %v1203
    %1250 = vst [vmem:[%s1229 + $0x50] sm:$0xf] %v1204
  $region57: #{model_forward.1} parent=0 // loop_footer
    %s985 = sadd.s32 1, %s981
  $region58: #{model_forward.1} parent=0 // loop_footer_branch
    %980 = sbr.rel target = $region54
  $region59: #{model_forward.1} parent=0 // loop_exit
    _
  loop: start=0, step=1, limit=10
  $region60: #{model_forward.1} parent=0 // loop_pre_header
    _
  $region61: #{model_forward.1} parent=0 // loop_header
    %s1252 = sphi 0, %s1256
    %p1253 = scmp.ge.s32.totalorder %s1252, 10
  $region62: #{model_forward.1} parent=0 // loop_header_branch
    %1255 = sbr.rel (%p1253) target = $region66
  $region63: #{model_forward.1} parent=0 // loop_body
    %s1257 = smul.u32 %s1252, 336
    %s1258 = sshra.s32 %s1257, 3
    %s1259 = sand.u32 %s1257, 7
    %s1260 = smul.addr %s1258, 4
    %s1261 = scalar_lea.vmem [#allocation3], %s1260
    %v1262 = vld [vmem:[%s1261] sm:$0xf]
    %v1263 = vld [vmem:[%s1261 + $0x4] sm:$0xf]
    %v1264 = vld [vmem:[%s1261 + $0x8] sm:$0xf]
    %v1265 = vld [vmem:[%s1261 + $0xc] sm:$0xf]
    %v1266 = vld [vmem:[%s1261 + $0x10] sm:$0xf]
    %v1267 = vld [vmem:[%s1261 + $0x14] sm:$0xf]
    %v1268 = vld [vmem:[%s1261 + $0x18] sm:$0xf]
    %v1269 = vld [vmem:[%s1261 + $0x1c] sm:$0xf]
    %v1270 = vld [vmem:[%s1261 + $0x20] sm:$0xf]
    %v1271 = vld [vmem:[%s1261 + $0x24] sm:$0xf]
    %v1272 = vld [vmem:[%s1261 + $0x28] sm:$0xf]
    %v1273 = vld [vmem:[%s1261 + $0x2c] sm:$0xf]
    %v1274 = vld [vmem:[%s1261 + $0x30] sm:$0xf]
    %v1275 = vld [vmem:[%s1261 + $0x34] sm:$0xf]
    %v1276 = vld [vmem:[%s1261 + $0x38] sm:$0xf]
    %v1277 = vld [vmem:[%s1261 + $0x3c] sm:$0xf]
    %v1278 = vld [vmem:[%s1261 + $0x40] sm:$0xf]
    %v1279 = vld [vmem:[%s1261 + $0x44] sm:$0xf]
    %v1280 = vld [vmem:[%s1261 + $0x48] sm:$0xf]
    %v1281 = vld [vmem:[%s1261 + $0x4c] sm:$0xf]
    %v1282 = vld [vmem:[%s1261 + $0x50] sm:$0xf]
    %v1283 = vld [vmem:[%s1261 + $0x54] sm:$0xf]
    %v1284 = vld [vmem:[%s1261 + $0x58] sm:$0xf]
    %v1285 = vld [vmem:[%s1261 + $0x5c] sm:$0xf]
    %v1286 = vld [vmem:[%s1261 + $0x60] sm:$0xf]
    %v1287 = vld [vmem:[%s1261 + $0x64] sm:$0xf]
    %v1288 = vld [vmem:[%s1261 + $0x68] sm:$0xf]
    %v1289 = vld [vmem:[%s1261 + $0x6c] sm:$0xf]
    %v1290 = vld [vmem:[%s1261 + $0x70] sm:$0xf]
    %v1291 = vld [vmem:[%s1261 + $0x74] sm:$0xf]
    %v1292 = vld [vmem:[%s1261 + $0x78] sm:$0xf]
    %v1293 = vld [vmem:[%s1261 + $0x7c] sm:$0xf]
    %v1294 = vld [vmem:[%s1261 + $0x80] sm:$0xf]
    %v1295 = vld [vmem:[%s1261 + $0x84] sm:$0xf]
    %v1296 = vld [vmem:[%s1261 + $0x88] sm:$0xf]
    %v1297 = vld [vmem:[%s1261 + $0x8c] sm:$0xf]
    %v1298 = vld [vmem:[%s1261 + $0x90] sm:$0xf]
    %v1299 = vld [vmem:[%s1261 + $0x94] sm:$0xf]
    %v1300 = vld [vmem:[%s1261 + $0x98] sm:$0xf]
    %v1301 = vld [vmem:[%s1261 + $0x9c] sm:$0xf]
    %v1302 = vld [vmem:[%s1261 + $0xa0] sm:$0xf]
    %v1303 = vld [vmem:[%s1261 + $0xa4] sm:$0xf]
    %v1304 = vld [vmem:[%s1261 + $0xa8] sm:$0xf]
    %v1305 = vld [vmem:[%s1261 + $0xac] sm:$0xf]
    %v1306 = vld [vmem:[%s1261 + $0xb0] sm:$0xf]
    %v1307 = vld [vmem:[%s1261 + $0xb4] sm:$0xf]
    %v1308 = vld [vmem:[%s1261 + $0xb8] sm:$0xf]
    %v1309 = vld [vmem:[%s1261 + $0xbc] sm:$0xf]
    %v1310 = vld [vmem:[%s1261 + $0xc0] sm:$0xf]
    %v1311 = vld [vmem:[%s1261 + $0xc4] sm:$0xf]
    %v1312 = vld [vmem:[%s1261 + $0xc8] sm:$0xf]
    %v1313 = vld [vmem:[%s1261 + $0xcc] sm:$0xf]
    %v1314 = vld [vmem:[%s1261 + $0xd0] sm:$0xf]
    %v1315 = vld [vmem:[%s1261 + $0xd4] sm:$0xf]
    %v1316 = vld [vmem:[%s1261 + $0xd8] sm:$0xf]
    %v1317 = vld [vmem:[%s1261 + $0xdc] sm:$0xf]
    %v1318 = vld [vmem:[%s1261 + $0xe0] sm:$0xf]
    %v1319 = vld [vmem:[%s1261 + $0xe4] sm:$0xf]
    %v1320 = vld [vmem:[%s1261 + $0xe8] sm:$0xf]
    %v1321 = vld [vmem:[%s1261 + $0xec] sm:$0xf]
    %v1322 = vld [vmem:[%s1261 + $0xf0] sm:$0xf]
    %v1323 = vld [vmem:[%s1261 + $0xf4] sm:$0xf]
    %v1324 = vld [vmem:[%s1261 + $0xf8] sm:$0xf]
    %v1325 = vld [vmem:[%s1261 + $0xfc] sm:$0xf]
    %v1326 = vld [vmem:[%s1261 + $0x100] sm:$0xf]
    %v1327 = vld [vmem:[%s1261 + $0x104] sm:$0xf]
    %v1328 = vld [vmem:[%s1261 + $0x108] sm:$0xf]
    %v1329 = vld [vmem:[%s1261 + $0x10c] sm:$0xf]
    %v1330 = vld [vmem:[%s1261 + $0x110] sm:$0xf]
    %v1331 = vld [vmem:[%s1261 + $0x114] sm:$0xf]
    %v1332 = vld [vmem:[%s1261 + $0x118] sm:$0xf]
    %v1333 = vld [vmem:[%s1261 + $0x11c] sm:$0xf]
    %v1334 = vld [vmem:[%s1261 + $0x120] sm:$0xf]
    %v1335 = vld [vmem:[%s1261 + $0x124] sm:$0xf]
    %v1336 = vld [vmem:[%s1261 + $0x128] sm:$0xf]
    %v1337 = vld [vmem:[%s1261 + $0x12c] sm:$0xf]
    %v1338 = vld [vmem:[%s1261 + $0x130] sm:$0xf]
    %v1339 = vld [vmem:[%s1261 + $0x134] sm:$0xf]
    %v1340 = vld [vmem:[%s1261 + $0x138] sm:$0xf]
    %v1341 = vld [vmem:[%s1261 + $0x13c] sm:$0xf]
    %v1342 = vld [vmem:[%s1261 + $0x140] sm:$0xf]
    %v1343 = vld [vmem:[%s1261 + $0x144] sm:$0xf]
    %v1344 = vld [vmem:[%s1261 + $0x148] sm:$0xf]
    %v1345 = vld [vmem:[%s1261 + $0x14c] sm:$0xf]
    %v1346 = vld [vmem:[%s1261 + $0x150] sm:$0xf]
    %v1347 = vld [vmem:[%s1261 + $0x154] sm:$0xf]
    %v1348 = vld [vmem:[%s1261 + $0x158] sm:$0xf]
    %v1349 = vld [vmem:[%s1261 + $0x15c] sm:$0xf]
    %v1350 = vld [vmem:[%s1261 + $0x160] sm:$0xf]
    %v1351 = vld [vmem:[%s1261 + $0x164] sm:$0xf]
    %v1352 = vld [vmem:[%s1261 + $0x168] sm:$0xf]
    %v1353 = vld [vmem:[%s1261 + $0x16c] sm:$0xf]
    %v1354 = vld [vmem:[%s1261 + $0x170] sm:$0xf]
    %v1355 = vld [vmem:[%s1261 + $0x174] sm:$0xf]
    %v1356 = vld [vmem:[%s1261 + $0x178] sm:$0xf]
    %v1357 = vld [vmem:[%s1261 + $0x17c] sm:$0xf]
    %v1358 = vld [vmem:[%s1261 + $0x180] sm:$0xf]
    %v1359 = vld [vmem:[%s1261 + $0x184] sm:$0xf]
    %v1360 = vld [vmem:[%s1261 + $0x188] sm:$0xf]
    %v1361 = vld [vmem:[%s1261 + $0x18c] sm:$0xf]
    %v1362 = vld [vmem:[%s1261 + $0x190] sm:$0xf]
    %v1363 = vld [vmem:[%s1261 + $0x194] sm:$0xf]
    %v1364 = vld [vmem:[%s1261 + $0x198] sm:$0xf]
    %v1365 = vld [vmem:[%s1261 + $0x19c] sm:$0xf]
    %v1366 = vld [vmem:[%s1261 + $0x1a0] sm:$0xf]
    %v1367 = vld [vmem:[%s1261 + $0x1a4] sm:$0xf]
    %v1368 = vld [vmem:[%s1261 + $0x1a8] sm:$0xf]
    %v1369 = vld [vmem:[%s1261 + $0x1ac] sm:$0xf]
    %v1370 = vld [vmem:[%s1261 + $0x1b0] sm:$0xf]
    %v1371 = vld [vmem:[%s1261 + $0x1b4] sm:$0xf]
    %v1372 = vld [vmem:[%s1261 + $0x1b8] sm:$0xf]
    %v1373 = vld [vmem:[%s1261 + $0x1bc] sm:$0xf]
    %v1374 = vld [vmem:[%s1261 + $0x1c0] sm:$0xf]
    %v1375 = vld [vmem:[%s1261 + $0x1c4] sm:$0xf]
    %v1376 = vld [vmem:[%s1261 + $0x1c8] sm:$0xf]
    %v1377 = vld [vmem:[%s1261 + $0x1cc] sm:$0xf]
    %v1378 = vld [vmem:[%s1261 + $0x1d0] sm:$0xf]
    %v1379 = vld [vmem:[%s1261 + $0x1d4] sm:$0xf]
    %v1380 = vld [vmem:[%s1261 + $0x1d8] sm:$0xf]
    %v1381 = vld [vmem:[%s1261 + $0x1dc] sm:$0xf]
    %v1382 = vld [vmem:[%s1261 + $0x1e0] sm:$0xf]
    %v1383 = vld [vmem:[%s1261 + $0x1e4] sm:$0xf]
    %v1384 = vld [vmem:[%s1261 + $0x1e8] sm:$0xf]
    %v1385 = vld [vmem:[%s1261 + $0x1ec] sm:$0xf]
    %v1386 = vld [vmem:[%s1261 + $0x1f0] sm:$0xf]
    %v1387 = vld [vmem:[%s1261 + $0x1f4] sm:$0xf]
    %v1388 = vld [vmem:[%s1261 + $0x1f8] sm:$0xf]
    %v1389 = vld [vmem:[%s1261 + $0x1fc] sm:$0xf]
    %v1390 = vld [vmem:[%s1261 + $0x200] sm:$0xf]
    %v1391 = vld [vmem:[%s1261 + $0x204] sm:$0xf]
    %v1392 = vld [vmem:[%s1261 + $0x208] sm:$0xf]
    %v1393 = vld [vmem:[%s1261 + $0x20c] sm:$0xf]
    %v1394 = vld [vmem:[%s1261 + $0x210] sm:$0xf]
    %v1395 = vld [vmem:[%s1261 + $0x214] sm:$0xf]
    %v1396 = vld [vmem:[%s1261 + $0x218] sm:$0xf]
    %v1397 = vld [vmem:[%s1261 + $0x21c] sm:$0xf]
    %v1398 = vld [vmem:[%s1261 + $0x220] sm:$0xf]
    %v1399 = vld [vmem:[%s1261 + $0x224] sm:$0xf]
    %v1400 = vld [vmem:[%s1261 + $0x228] sm:$0xf]
    %v1401 = vld [vmem:[%s1261 + $0x22c] sm:$0xf]
    %v1402 = vld [vmem:[%s1261 + $0x230] sm:$0xf]
    %v1403 = vld [vmem:[%s1261 + $0x234] sm:$0xf]
    %v1404 = vld [vmem:[%s1261 + $0x238] sm:$0xf]
    %v1405 = vld [vmem:[%s1261 + $0x23c] sm:$0xf]
    %v1406 = vld [vmem:[%s1261 + $0x240] sm:$0xf]
    %v1407 = vld [vmem:[%s1261 + $0x244] sm:$0xf]
    %v1408 = vld [vmem:[%s1261 + $0x248] sm:$0xf]
    %v1409 = vld [vmem:[%s1261 + $0x24c] sm:$0xf]
    %v1410 = vld [vmem:[%s1261 + $0x250] sm:$0xf]
    %v1411 = vld [vmem:[%s1261 + $0x254] sm:$0xf]
    %v1412 = vld [vmem:[%s1261 + $0x258] sm:$0xf]
    %v1413 = vld [vmem:[%s1261 + $0x25c] sm:$0xf]
    %v1414 = vld [vmem:[%s1261 + $0x260] sm:$0xf]
    %v1415 = vld [vmem:[%s1261 + $0x264] sm:$0xf]
    %v1416 = vld [vmem:[%s1261 + $0x268] sm:$0xf]
    %v1417 = vld [vmem:[%s1261 + $0x26c] sm:$0xf]
    %v1418 = vld [vmem:[%s1261 + $0x270] sm:$0xf]
    %v1419 = vld [vmem:[%s1261 + $0x274] sm:$0xf]
    %v1420 = vld [vmem:[%s1261 + $0x278] sm:$0xf]
    %v1421 = vld [vmem:[%s1261 + $0x27c] sm:$0xf]
    %v1422 = vld [vmem:[%s1261 + $0x280] sm:$0xf]
    %v1423 = vld [vmem:[%s1261 + $0x284] sm:$0xf]
    %v1424 = vld [vmem:[%s1261 + $0x288] sm:$0xf]
    %v1425 = vld [vmem:[%s1261 + $0x28c] sm:$0xf]
    %v1426 = vld [vmem:[%s1261 + $0x290] sm:$0xf]
    %v1427 = vld [vmem:[%s1261 + $0x294] sm:$0xf]
    %v1428 = vld [vmem:[%s1261 + $0x298] sm:$0xf]
    %v1429 = vld [vmem:[%s1261 + $0x29c] sm:$0xf]
    %v1430 = vld [vmem:[%s1261 + $0x2a0] sm:$0xf]
    %v1431 = vld [vmem:[%s1261 + $0x2a4] sm:$0xf]
    %v1432 = vld [vmem:[%s1261 + $0x2a8] sm:$0xf]
    %v1433 = vld [vmem:[%s1261 + $0x2ac] sm:$0xf]
    %v1434 = vld [vmem:[%s1261 + $0x2b0] sm:$0xf]
    %v1435 = vld [vmem:[%s1261 + $0x2b4] sm:$0xf]
    %v1436 = vld [vmem:[%s1261 + $0x2b8] sm:$0xf]
    %v1437 = vld [vmem:[%s1261 + $0x2bc] sm:$0xf]
    %v1438 = vld [vmem:[%s1261 + $0x2c0] sm:$0xf]
    %v1439 = vld [vmem:[%s1261 + $0x2c4] sm:$0xf]
    %v1440 = vld [vmem:[%s1261 + $0x2c8] sm:$0xf]
    %v1441 = vld [vmem:[%s1261 + $0x2cc] sm:$0xf]
    %v1442 = vld [vmem:[%s1261 + $0x2d0] sm:$0xf]
    %v1443 = vld [vmem:[%s1261 + $0x2d4] sm:$0xf]
    %v1444 = vld [vmem:[%s1261 + $0x2d8] sm:$0xf]
    %v1445 = vld [vmem:[%s1261 + $0x2dc] sm:$0xf]
    %v1446 = vld [vmem:[%s1261 + $0x2e0] sm:$0xf]
    %v1447 = vld [vmem:[%s1261 + $0x2e4] sm:$0xf]
    %v1448 = vld [vmem:[%s1261 + $0x2e8] sm:$0xf]
    %v1449 = vld [vmem:[%s1261 + $0x2ec] sm:$0xf]
    %v1450 = vld [vmem:[%s1261 + $0x2f0] sm:$0xf]
    %v1451 = vld [vmem:[%s3] sm:$0xff]
    %v1452 = vld [vmem:[%s3 + $0x8] sm:$0xff]
    %v1453 = vld [vmem:[%s3 + $0x10] sm:$0xff]
    %v1454 = vld [vmem:[%s3 + $0x18] sm:$0xff]
    %v1455 = vld [vmem:[%s3 + $0x20] sm:$0xff]
    %v1456 = vld [vmem:[%s3 + $0x28] sm:$0xff]
    %v1457 = vld [vmem:[%s3 + $0x30] sm:$0xff]
    %v1458 = vld [vmem:[%s3 + $0x38] sm:$0xff]
    %v1459 = vld [vmem:[%s3 + $0x40] sm:$0xff]
    %v1460 = vld [vmem:[%s3 + $0x48] sm:$0xff]
    %v1461 = vld [vmem:[%s3 + $0x50] sm:$0xff]
    %v1462 = vld [vmem:[%s3 + $0x58] sm:$0xff]
    %v1463 = vld [vmem:[%s3 + $0x60] sm:$0xff]
    %v1464 = vld [vmem:[%s3 + $0x68] sm:$0xff]
    %v1465 = vld [vmem:[%s3 + $0x70] sm:$0xff]
    %v1466 = vld [vmem:[%s3 + $0x78] sm:$0xff]
    %v1467 = vld [vmem:[%s3 + $0x80] sm:$0xff]
    %v1468 = vld [vmem:[%s3 + $0x88] sm:$0xff]
    %v1469 = vld [vmem:[%s3 + $0x90] sm:$0xff]
    %v1470 = vld [vmem:[%s3 + $0x98] sm:$0xff]
    %v1471 = vld [vmem:[%s3 + $0xa0] sm:$0xff]
    %v1472 = vld [vmem:[%s3 + $0xa8] sm:$0xff]
    %v1473 = vld [vmem:[%s3 + $0xb0] sm:$0xff]
    %v1474 = vld [vmem:[%s3 + $0xb8] sm:$0xff]
    %v1475 = vld [vmem:[%s3 + $0xc0] sm:$0xff]
    %v1476 = vld [vmem:[%s3 + $0xc8] sm:$0xff]
    %v1477 = vld [vmem:[%s3 + $0xd0] sm:$0xff]
    %v1478 = vld [vmem:[%s3 + $0xd8] sm:$0xff]
    %v1479 = vld [vmem:[%s3 + $0xe0] sm:$0xff]
    %v1480 = vld [vmem:[%s3 + $0xe8] sm:$0xff]
    %v1481 = vld [vmem:[%s3 + $0xf0] sm:$0xff]
    %v1482 = vld [vmem:[%s3 + $0xf8] sm:$0xff]
    %v1483 = vld [vmem:[%s3 + $0x100] sm:$0xff]
    %v1484 = vld [vmem:[%s3 + $0x108] sm:$0xff]
    %v1485 = vld [vmem:[%s3 + $0x110] sm:$0xff]
    %v1486 = vld [vmem:[%s3 + $0x118] sm:$0xff]
    %v1487 = vld [vmem:[%s3 + $0x120] sm:$0xff]
    %v1488 = vld [vmem:[%s3 + $0x128] sm:$0xff]
    %v1489 = vld [vmem:[%s3 + $0x130] sm:$0xff]
    %v1490 = vld [vmem:[%s3 + $0x138] sm:$0xff]
    %v1491 = vld [vmem:[%s3 + $0x140] sm:$0xff]
    %v1492 = vld [vmem:[%s3 + $0x148] sm:$0xff]
    %v1493 = vld [vmem:[%s3 + $0x150] sm:$0xff]
    %v1494 = vld [vmem:[%s3 + $0x158] sm:$0xff]
    %v1495 = vld [vmem:[%s3 + $0x160] sm:$0xff]
    %v1496 = vld [vmem:[%s3 + $0x168] sm:$0xff]
    %v1497 = vld [vmem:[%s3 + $0x170] sm:$0xff]
    %v1498 = vld [vmem:[%s3 + $0x178] sm:$0xff]
    %v1499 = vld [vmem:[%s3 + $0x180] sm:$0xff]
    %v1500 = vld [vmem:[%s3 + $0x188] sm:$0xff]
    %v1501 = vld [vmem:[%s3 + $0x190] sm:$0xff]
    %v1502 = vld [vmem:[%s3 + $0x198] sm:$0xff]
    %v1503 = vld [vmem:[%s3 + $0x1a0] sm:$0xff]
    %v1504 = vld [vmem:[%s3 + $0x1a8] sm:$0xff]
    %v1505 = vld [vmem:[%s3 + $0x1b0] sm:$0xff]
    %v1506 = vld [vmem:[%s3 + $0x1b8] sm:$0xff]
    %v1507 = vld [vmem:[%s3 + $0x1c0] sm:$0xff]
    %v1508 = vld [vmem:[%s3 + $0x1c8] sm:$0xff]
    %v1509 = vld [vmem:[%s3 + $0x1d0] sm:$0xff]
    %v1510 = vld [vmem:[%s3 + $0x1d8] sm:$0xff]
    %v1511 = vld [vmem:[%s3 + $0x1e0] sm:$0xff]
    %v1512 = vld [vmem:[%s3 + $0x1e8] sm:$0xff]
    %v1513 = vld [vmem:[%s3 + $0x1f0] sm:$0xff]
    %v1514 = vld [vmem:[%s3 + $0x1f8] sm:$0xff]
    %v1515 = vld [vmem:[%s3 + $0x200] sm:$0xff]
    %v1516 = vld [vmem:[%s3 + $0x208] sm:$0xff]
    %v1517 = vld [vmem:[%s3 + $0x210] sm:$0xff]
    %v1518 = vld [vmem:[%s3 + $0x218] sm:$0xff]
    %v1519 = vld [vmem:[%s3 + $0x220] sm:$0xff]
    %v1520 = vld [vmem:[%s3 + $0x228] sm:$0xff]
    %v1521 = vld [vmem:[%s3 + $0x230] sm:$0xff]
    %v1522 = vld [vmem:[%s3 + $0x238] sm:$0xff]
    %v1523 = vld [vmem:[%s3 + $0x240] sm:$0xff]
    %v1524 = vld [vmem:[%s3 + $0x248] sm:$0xff]
    %v1525 = vld [vmem:[%s3 + $0x250] sm:$0xff]
    %v1526 = vld [vmem:[%s3 + $0x258] sm:$0xff]
    %v1527 = vld [vmem:[%s3 + $0x260] sm:$0xff]
    %v1528 = vld [vmem:[%s3 + $0x268] sm:$0xff]
    %v1529 = vld [vmem:[%s3 + $0x270] sm:$0xff]
    %v1530 = vld [vmem:[%s3 + $0x278] sm:$0xff]
    %v1531 = vld [vmem:[%s3 + $0x280] sm:$0xff]
    %v1532 = vld [vmem:[%s3 + $0x288] sm:$0xff]
    %v1533 = vld [vmem:[%s3 + $0x290] sm:$0xff]
    %v1534 = vld [vmem:[%s3 + $0x298] sm:$0xff]
    %v1535 = vld [vmem:[%s3 + $0x2a0] sm:$0xff]
    %v1536 = vld [vmem:[%s3 + $0x2a8] sm:$0xff]
    %v1537 = vld [vmem:[%s3 + $0x2b0] sm:$0xff]
    %v1538 = vld [vmem:[%s3 + $0x2b8] sm:$0xff]
    %v1539 = vld [vmem:[%s3 + $0x2c0] sm:$0xff]
    %v1540 = vld [vmem:[%s3 + $0x2c8] sm:$0xff]
    %v1541 = vld [vmem:[%s3 + $0x2d0] sm:$0xff]
    %v1542 = vld [vmem:[%s3 + $0x2d8] sm:$0xff]
    %v1543 = vld [vmem:[%s3 + $0x2e0] sm:$0xff]
    %v1544 = vld [vmem:[%s3 + $0x2e8] sm:$0xff]
    %v1545 = vld [vmem:[%s3 + $0x2f0] sm:$0xff]
    %v1546 = vld [vmem:[%s3 + $0x2f8] sm:$0xff]
    %v1547 = vld [vmem:[%s3 + $0x300] sm:$0xff]
    %v1548 = vld [vmem:[%s3 + $0x308] sm:$0xff]
    %v1549 = vld [vmem:[%s3 + $0x310] sm:$0xff]
    %v1550 = vld [vmem:[%s3 + $0x318] sm:$0xff]
    %v1551 = vld [vmem:[%s3 + $0x320] sm:$0xff]
    %v1552 = vld [vmem:[%s3 + $0x328] sm:$0xff]
    %v1553 = vld [vmem:[%s3 + $0x330] sm:$0xff]
    %v1554 = vld [vmem:[%s3 + $0x338] sm:$0xff]
    %v1555 = vld [vmem:[%s3 + $0x340] sm:$0xff]
    %v1556 = vld [vmem:[%s3 + $0x348] sm:$0xff]
    %v1557 = vld [vmem:[%s3 + $0x350] sm:$0xff]
    %v1558 = vld [vmem:[%s3 + $0x358] sm:$0xff]
    %v1559 = vld [vmem:[%s3 + $0x360] sm:$0xff]
    %v1560 = vld [vmem:[%s3 + $0x368] sm:$0xff]
    %v1561 = vld [vmem:[%s3 + $0x370] sm:$0xff]
    %v1562 = vld [vmem:[%s3 + $0x378] sm:$0xff]
    %v1563 = vld [vmem:[%s3 + $0x380] sm:$0xff]
    %v1564 = vld [vmem:[%s3 + $0x388] sm:$0xff]
    %v1565 = vld [vmem:[%s3 + $0x390] sm:$0xff]
    %v1566 = vld [vmem:[%s3 + $0x398] sm:$0xff]
    %v1567 = vld [vmem:[%s3 + $0x3a0] sm:$0xff]
    %v1568 = vld [vmem:[%s3 + $0x3a8] sm:$0xff]
    %v1569 = vld [vmem:[%s3 + $0x3b0] sm:$0xff]
    %v1570 = vld [vmem:[%s3 + $0x3b8] sm:$0xff]
    %v1571 = vld [vmem:[%s4] sm:$0xff]
    %v1572 = vld [vmem:[%s4 + $0x8] sm:$0xff]
    %v1573 = vld [vmem:[%s4 + $0x10] sm:$0xff]
    %v1574 = vld [vmem:[%s4 + $0x18] sm:$0xff]
    %v1575 = vld [vmem:[%s4 + $0x20] sm:$0xff]
    %v1576 = vld [vmem:[%s4 + $0x28] sm:$0xff]
    %v1577 = vld [vmem:[%s4 + $0x30] sm:$0xff]
    %v1578 = vld [vmem:[%s4 + $0x38] sm:$0xff]
    %v1579 = vld [vmem:[%s4 + $0x40] sm:$0xff]
    %v1580 = vld [vmem:[%s4 + $0x48] sm:$0xff]
    %v1581 = vld [vmem:[%s4 + $0x50] sm:$0xff]
    %v1582 = vld [vmem:[%s4 + $0x58] sm:$0xff]
    %v1583 = vld [vmem:[%s4 + $0x60] sm:$0xff]
    %v1584 = vld [vmem:[%s4 + $0x68] sm:$0xff]
    %v1585 = vld [vmem:[%s4 + $0x70] sm:$0xff]
    %v1586 = vld [vmem:[%s4 + $0x78] sm:$0xff]
    %v1587 = vld [vmem:[%s4 + $0x80] sm:$0xff]
    %v1588 = vld [vmem:[%s4 + $0x88] sm:$0xff]
    %v1589 = vld [vmem:[%s4 + $0x90] sm:$0xff]
    %v1590 = vld [vmem:[%s4 + $0x98] sm:$0xff]
    %1592 = vset.pattern.permute.xlu0 0
    %1593 = vperm.xlu0 %1592, %v1571
    %v1594 = vpop.permute.xlu0 %1593
    %1597 = vset.pattern.permute.xlu0 0
    %1598 = vperm.xlu0 %1597, %v1572
    %v1599 = vpop.permute.xlu0 %1598
    %1602 = vset.pattern.permute.xlu0 0
    %1603 = vperm.xlu0 %1602, %v1573
    %v1604 = vpop.permute.xlu0 %1603
    %1607 = vset.pattern.permute.xlu0 0
    %1608 = vperm.xlu0 %1607, %v1574
    %v1609 = vpop.permute.xlu0 %1608
    %1612 = vset.pattern.permute.xlu0 0
    %1613 = vperm.xlu0 %1612, %v1575
    %v1614 = vpop.permute.xlu0 %1613
    %1617 = vset.pattern.permute.xlu0 0
    %1618 = vperm.xlu0 %1617, %v1576
    %v1619 = vpop.permute.xlu0 %1618
    %1622 = vset.pattern.permute.xlu0 0
    %1623 = vperm.xlu0 %1622, %v1577
    %v1624 = vpop.permute.xlu0 %1623
    %1627 = vset.pattern.permute.xlu0 0
    %1628 = vperm.xlu0 %1627, %v1578
    %v1629 = vpop.permute.xlu0 %1628
    %1632 = vset.pattern.permute.xlu0 0
    %1633 = vperm.xlu0 %1632, %v1579
    %v1634 = vpop.permute.xlu0 %1633
    %1637 = vset.pattern.permute.xlu0 0
    %1638 = vperm.xlu0 %1637, %v1580
    %v1639 = vpop.permute.xlu0 %1638
    %1642 = vset.pattern.permute.xlu0 0
    %1643 = vperm.xlu0 %1642, %v1581
    %v1644 = vpop.permute.xlu0 %1643
    %1647 = vset.pattern.permute.xlu0 0
    %1648 = vperm.xlu0 %1647, %v1582
    %v1649 = vpop.permute.xlu0 %1648
    %1652 = vset.pattern.permute.xlu0 0
    %1653 = vperm.xlu0 %1652, %v1583
    %v1654 = vpop.permute.xlu0 %1653
    %1657 = vset.pattern.permute.xlu0 0
    %1658 = vperm.xlu0 %1657, %v1584
    %v1659 = vpop.permute.xlu0 %1658
    %1662 = vset.pattern.permute.xlu0 0
    %1663 = vperm.xlu0 %1662, %v1585
    %v1664 = vpop.permute.xlu0 %1663
    %1667 = vset.pattern.permute.xlu0 0
    %1668 = vperm.xlu0 %1667, %v1586
    %v1669 = vpop.permute.xlu0 %1668
    %1672 = vset.pattern.permute.xlu0 0
    %1673 = vperm.xlu0 %1672, %v1587
    %v1674 = vpop.permute.xlu0 %1673
    %1677 = vset.pattern.permute.xlu0 0
    %1678 = vperm.xlu0 %1677, %v1588
    %v1679 = vpop.permute.xlu0 %1678
    %1682 = vset.pattern.permute.xlu0 0
    %1683 = vperm.xlu0 %1682, %v1589
    %v1684 = vpop.permute.xlu0 %1683
    %1687 = vset.pattern.permute.xlu0 0
    %1688 = vperm.xlu0 %1687, %v1590
    %v1689 = vpop.permute.xlu0 %1688
    %v1811 = vunpack.c.l.b16 %v1451
    %v1812 = vunpack.c.h.b16 %v1451
    %v1813 = vunpack.c.l.b16 %v1452
    %v1814 = vunpack.c.h.b16 %v1452
    %v1815 = vunpack.c.l.b16 %v1453
    %v1816 = vunpack.c.h.b16 %v1453
    %v1817 = vunpack.c.l.b16 %v1454
    %v1818 = vunpack.c.h.b16 %v1454
    %v1819 = vunpack.c.l.b16 %v1455
    %v1820 = vunpack.c.h.b16 %v1455
    %v1821 = vunpack.c.l.b16 %v1456
    %v1822 = vunpack.c.h.b16 %v1456
    %v1823 = vunpack.c.l.b16 %v1457
    %v1824 = vunpack.c.h.b16 %v1457
    %v1825 = vunpack.c.l.b16 %v1458
    %v1826 = vunpack.c.h.b16 %v1458
    %v1827 = vunpack.c.l.b16 %v1459
    %v1828 = vunpack.c.h.b16 %v1459
    %v1829 = vunpack.c.l.b16 %v1460
    %v1830 = vunpack.c.h.b16 %v1460
    %v1831 = vunpack.c.l.b16 %v1461
    %v1832 = vunpack.c.h.b16 %v1461
    %v1833 = vunpack.c.l.b16 %v1462
    %v1834 = vunpack.c.h.b16 %v1462
    %v1835 = vunpack.c.l.b16 %v1463
    %v1836 = vunpack.c.h.b16 %v1463
    %v1837 = vunpack.c.l.b16 %v1464
    %v1838 = vunpack.c.h.b16 %v1464
    %v1839 = vunpack.c.l.b16 %v1465
    %v1840 = vunpack.c.h.b16 %v1465
    %v1841 = vunpack.c.l.b16 %v1466
    %v1842 = vunpack.c.h.b16 %v1466
    %v1843 = vunpack.c.l.b16 %v1467
    %v1844 = vunpack.c.h.b16 %v1467
    %v1845 = vunpack.c.l.b16 %v1468
    %v1846 = vunpack.c.h.b16 %v1468
    %v1847 = vunpack.c.l.b16 %v1469
    %v1848 = vunpack.c.h.b16 %v1469
    %v1849 = vunpack.c.l.b16 %v1470
    %v1850 = vunpack.c.h.b16 %v1470
    %v1851 = vunpack.c.l.b16 %v1471
    %v1852 = vunpack.c.h.b16 %v1471
    %v1853 = vunpack.c.l.b16 %v1472
    %v1854 = vunpack.c.h.b16 %v1472
    %v1855 = vunpack.c.l.b16 %v1473
    %v1856 = vunpack.c.h.b16 %v1473
    %v1857 = vunpack.c.l.b16 %v1474
    %v1858 = vunpack.c.h.b16 %v1474
    %v1859 = vunpack.c.l.b16 %v1475
    %v1860 = vunpack.c.h.b16 %v1475
    %v1861 = vunpack.c.l.b16 %v1476
    %v1862 = vunpack.c.h.b16 %v1476
    %v1863 = vunpack.c.l.b16 %v1477
    %v1864 = vunpack.c.h.b16 %v1477
    %v1865 = vunpack.c.l.b16 %v1478
    %v1866 = vunpack.c.h.b16 %v1478
    %v1867 = vunpack.c.l.b16 %v1479
    %v1868 = vunpack.c.h.b16 %v1479
    %v1869 = vunpack.c.l.b16 %v1480
    %v1870 = vunpack.c.h.b16 %v1480
    %v1871 = vunpack.c.l.b16 %v1481
    %v1872 = vunpack.c.h.b16 %v1481
    %v1873 = vunpack.c.l.b16 %v1482
    %v1874 = vunpack.c.h.b16 %v1482
    %v1875 = vunpack.c.l.b16 %v1483
    %v1876 = vunpack.c.h.b16 %v1483
    %v1877 = vunpack.c.l.b16 %v1484
    %v1878 = vunpack.c.h.b16 %v1484
    %v1879 = vunpack.c.l.b16 %v1485
    %v1880 = vunpack.c.h.b16 %v1485
    %v1881 = vunpack.c.l.b16 %v1486
    %v1882 = vunpack.c.h.b16 %v1486
    %v1883 = vunpack.c.l.b16 %v1487
    %v1884 = vunpack.c.h.b16 %v1487
    %v1885 = vunpack.c.l.b16 %v1488
    %v1886 = vunpack.c.h.b16 %v1488
    %v1887 = vunpack.c.l.b16 %v1489
    %v1888 = vunpack.c.h.b16 %v1489
    %v1889 = vunpack.c.l.b16 %v1490
    %v1890 = vunpack.c.h.b16 %v1490
    %v1891 = vunpack.c.l.b16 %v1491
    %v1892 = vunpack.c.h.b16 %v1491
    %v1893 = vunpack.c.l.b16 %v1492
    %v1894 = vunpack.c.h.b16 %v1492
    %v1895 = vunpack.c.l.b16 %v1493
    %v1896 = vunpack.c.h.b16 %v1493
    %v1897 = vunpack.c.l.b16 %v1494
    %v1898 = vunpack.c.h.b16 %v1494
    %v1899 = vunpack.c.l.b16 %v1495
    %v1900 = vunpack.c.h.b16 %v1495
    %v1901 = vunpack.c.l.b16 %v1496
    %v1902 = vunpack.c.h.b16 %v1496
    %v1903 = vunpack.c.l.b16 %v1497
    %v1904 = vunpack.c.h.b16 %v1497
    %v1905 = vunpack.c.l.b16 %v1498
    %v1906 = vunpack.c.h.b16 %v1498
    %v1907 = vunpack.c.l.b16 %v1499
    %v1908 = vunpack.c.h.b16 %v1499
    %v1909 = vunpack.c.l.b16 %v1500
    %v1910 = vunpack.c.h.b16 %v1500
    %v1911 = vunpack.c.l.b16 %v1501
    %v1912 = vunpack.c.h.b16 %v1501
    %v1913 = vunpack.c.l.b16 %v1502
    %v1914 = vunpack.c.h.b16 %v1502
    %v1915 = vunpack.c.l.b16 %v1503
    %v1916 = vunpack.c.h.b16 %v1503
    %v1917 = vunpack.c.l.b16 %v1504
    %v1918 = vunpack.c.h.b16 %v1504
    %v1919 = vunpack.c.l.b16 %v1505
    %v1920 = vunpack.c.h.b16 %v1505
    %v1921 = vunpack.c.l.b16 %v1506
    %v1922 = vunpack.c.h.b16 %v1506
    %v1923 = vunpack.c.l.b16 %v1507
    %v1924 = vunpack.c.h.b16 %v1507
    %v1925 = vunpack.c.l.b16 %v1508
    %v1926 = vunpack.c.h.b16 %v1508
    %v1927 = vunpack.c.l.b16 %v1509
    %v1928 = vunpack.c.h.b16 %v1509
    %v1929 = vunpack.c.l.b16 %v1510
    %v1930 = vunpack.c.h.b16 %v1510
    %v1931 = vunpack.c.l.b16 %v1511
    %v1932 = vunpack.c.h.b16 %v1511
    %v1933 = vunpack.c.l.b16 %v1512
    %v1934 = vunpack.c.h.b16 %v1512
    %v1935 = vunpack.c.l.b16 %v1513
    %v1936 = vunpack.c.h.b16 %v1513
    %v1937 = vunpack.c.l.b16 %v1514
    %v1938 = vunpack.c.h.b16 %v1514
    %v1939 = vunpack.c.l.b16 %v1515
    %v1940 = vunpack.c.h.b16 %v1515
    %v1941 = vunpack.c.l.b16 %v1516
    %v1942 = vunpack.c.h.b16 %v1516
    %v1943 = vunpack.c.l.b16 %v1517
    %v1944 = vunpack.c.h.b16 %v1517
    %v1945 = vunpack.c.l.b16 %v1518
    %v1946 = vunpack.c.h.b16 %v1518
    %v1947 = vunpack.c.l.b16 %v1519
    %v1948 = vunpack.c.h.b16 %v1519
    %v1949 = vunpack.c.l.b16 %v1520
    %v1950 = vunpack.c.h.b16 %v1520
    %v1951 = vunpack.c.l.b16 %v1521
    %v1952 = vunpack.c.h.b16 %v1521
    %v1953 = vunpack.c.l.b16 %v1522
    %v1954 = vunpack.c.h.b16 %v1522
    %v1955 = vunpack.c.l.b16 %v1523
    %v1956 = vunpack.c.h.b16 %v1523
    %v1957 = vunpack.c.l.b16 %v1524
    %v1958 = vunpack.c.h.b16 %v1524
    %v1959 = vunpack.c.l.b16 %v1525
    %v1960 = vunpack.c.h.b16 %v1525
    %v1961 = vunpack.c.l.b16 %v1526
    %v1962 = vunpack.c.h.b16 %v1526
    %v1963 = vunpack.c.l.b16 %v1527
    %v1964 = vunpack.c.h.b16 %v1527
    %v1965 = vunpack.c.l.b16 %v1528
    %v1966 = vunpack.c.h.b16 %v1528
    %v1967 = vunpack.c.l.b16 %v1529
    %v1968 = vunpack.c.h.b16 %v1529
    %v1969 = vunpack.c.l.b16 %v1530
    %v1970 = vunpack.c.h.b16 %v1530
    %v1971 = vunpack.c.l.b16 %v1531
    %v1972 = vunpack.c.h.b16 %v1531
    %v1973 = vunpack.c.l.b16 %v1532
    %v1974 = vunpack.c.h.b16 %v1532
    %v1975 = vunpack.c.l.b16 %v1533
    %v1976 = vunpack.c.h.b16 %v1533
    %v1977 = vunpack.c.l.b16 %v1534
    %v1978 = vunpack.c.h.b16 %v1534
    %v1979 = vunpack.c.l.b16 %v1535
    %v1980 = vunpack.c.h.b16 %v1535
    %v1981 = vunpack.c.l.b16 %v1536
    %v1982 = vunpack.c.h.b16 %v1536
    %v1983 = vunpack.c.l.b16 %v1537
    %v1984 = vunpack.c.h.b16 %v1537
    %v1985 = vunpack.c.l.b16 %v1538
    %v1986 = vunpack.c.h.b16 %v1538
    %v1987 = vunpack.c.l.b16 %v1539
    %v1988 = vunpack.c.h.b16 %v1539
    %v1989 = vunpack.c.l.b16 %v1540
    %v1990 = vunpack.c.h.b16 %v1540
    %v1991 = vunpack.c.l.b16 %v1541
    %v1992 = vunpack.c.h.b16 %v1541
    %v1993 = vunpack.c.l.b16 %v1542
    %v1994 = vunpack.c.h.b16 %v1542
    %v1995 = vunpack.c.l.b16 %v1543
    %v1996 = vunpack.c.h.b16 %v1543
    %v1997 = vunpack.c.l.b16 %v1544
    %v1998 = vunpack.c.h.b16 %v1544
    %v1999 = vunpack.c.l.b16 %v1545
    %v2000 = vunpack.c.h.b16 %v1545
    %v2001 = vunpack.c.l.b16 %v1546
    %v2002 = vunpack.c.h.b16 %v1546
    %v2003 = vunpack.c.l.b16 %v1547
    %v2004 = vunpack.c.h.b16 %v1547
    %v2005 = vunpack.c.l.b16 %v1548
    %v2006 = vunpack.c.h.b16 %v1548
    %v2007 = vunpack.c.l.b16 %v1549
    %v2008 = vunpack.c.h.b16 %v1549
    %v2009 = vunpack.c.l.b16 %v1550
    %v2010 = vunpack.c.h.b16 %v1550
    %v2011 = vunpack.c.l.b16 %v1551
    %v2012 = vunpack.c.h.b16 %v1551
    %v2013 = vunpack.c.l.b16 %v1552
    %v2014 = vunpack.c.h.b16 %v1552
    %v2015 = vunpack.c.l.b16 %v1553
    %v2016 = vunpack.c.h.b16 %v1553
    %v2017 = vunpack.c.l.b16 %v1554
    %v2018 = vunpack.c.h.b16 %v1554
    %v2019 = vunpack.c.l.b16 %v1555
    %v2020 = vunpack.c.h.b16 %v1555
    %v2021 = vunpack.c.l.b16 %v1556
    %v2022 = vunpack.c.h.b16 %v1556
    %v2023 = vunpack.c.l.b16 %v1557
    %v2024 = vunpack.c.h.b16 %v1557
    %v2025 = vunpack.c.l.b16 %v1558
    %v2026 = vunpack.c.h.b16 %v1558
    %v2027 = vunpack.c.l.b16 %v1559
    %v2028 = vunpack.c.h.b16 %v1559
    %v2029 = vunpack.c.l.b16 %v1560
    %v2030 = vunpack.c.h.b16 %v1560
    %v2031 = vunpack.c.l.b16 %v1561
    %v2032 = vunpack.c.h.b16 %v1561
    %v2033 = vunpack.c.l.b16 %v1562
    %v2034 = vunpack.c.h.b16 %v1562
    %v2035 = vunpack.c.l.b16 %v1563
    %v2036 = vunpack.c.h.b16 %v1563
    %v2037 = vunpack.c.l.b16 %v1564
    %v2038 = vunpack.c.h.b16 %v1564
    %v2039 = vunpack.c.l.b16 %v1565
    %v2040 = vunpack.c.h.b16 %v1565
    %v2041 = vunpack.c.l.b16 %v1566
    %v2042 = vunpack.c.h.b16 %v1566
    %v2043 = vunpack.c.l.b16 %v1567
    %v2044 = vunpack.c.h.b16 %v1567
    %v2045 = vunpack.c.l.b16 %v1568
    %v2046 = vunpack.c.h.b16 %v1568
    %v2047 = vunpack.c.l.b16 %v1569
    %v2048 = vunpack.c.h.b16 %v1569
    %v2049 = vunpack.c.l.b16 %v1570
    %v2050 = vunpack.c.h.b16 %v1570
    %v2051 = vpack.c.b16 %v1823, %v1811
    %v2052 = vpack.c.b16 %v1824, %v1812
    %v2053 = vpack.c.b16 %v1825, %v1813
    %v2054 = vpack.c.b16 %v1826, %v1814
    %v2055 = vpack.c.b16 %v1827, %v1815
    %v2056 = vpack.c.b16 %v1828, %v1816
    %v2057 = vpack.c.b16 %v1829, %v1817
    %v2058 = vpack.c.b16 %v1830, %v1818
    %v2059 = vpack.c.b16 %v1831, %v1819
    %v2060 = vpack.c.b16 %v1832, %v1820
    %v2061 = vpack.c.b16 %v1833, %v1821
    %v2062 = vpack.c.b16 %v1834, %v1822
    %v2063 = vpack.c.b16 %v1847, %v1835
    %v2064 = vpack.c.b16 %v1848, %v1836
    %v2065 = vpack.c.b16 %v1849, %v1837
    %v2066 = vpack.c.b16 %v1850, %v1838
    %v2067 = vpack.c.b16 %v1851, %v1839
    %v2068 = vpack.c.b16 %v1852, %v1840
    %v2069 = vpack.c.b16 %v1853, %v1841
    %v2070 = vpack.c.b16 %v1854, %v1842
    %v2071 = vpack.c.b16 %v1855, %v1843
    %v2072 = vpack.c.b16 %v1856, %v1844
    %v2073 = vpack.c.b16 %v1857, %v1845
    %v2074 = vpack.c.b16 %v1858, %v1846
    %v2075 = vpack.c.b16 %v1871, %v1859
    %v2076 = vpack.c.b16 %v1872, %v1860
    %v2077 = vpack.c.b16 %v1873, %v1861
    %v2078 = vpack.c.b16 %v1874, %v1862
    %v2079 = vpack.c.b16 %v1875, %v1863
    %v2080 = vpack.c.b16 %v1876, %v1864
    %v2081 = vpack.c.b16 %v1877, %v1865
    %v2082 = vpack.c.b16 %v1878, %v1866
    %v2083 = vpack.c.b16 %v1879, %v1867
    %v2084 = vpack.c.b16 %v1880, %v1868
    %v2085 = vpack.c.b16 %v1881, %v1869
    %v2086 = vpack.c.b16 %v1882, %v1870
    %v2087 = vpack.c.b16 %v1895, %v1883
    %v2088 = vpack.c.b16 %v1896, %v1884
    %v2089 = vpack.c.b16 %v1897, %v1885
    %v2090 = vpack.c.b16 %v1898, %v1886
    %v2091 = vpack.c.b16 %v1899, %v1887
    %v2092 = vpack.c.b16 %v1900, %v1888
    %v2093 = vpack.c.b16 %v1901, %v1889
    %v2094 = vpack.c.b16 %v1902, %v1890
    %v2095 = vpack.c.b16 %v1903, %v1891
    %v2096 = vpack.c.b16 %v1904, %v1892
    %v2097 = vpack.c.b16 %v1905, %v1893
    %v2098 = vpack.c.b16 %v1906, %v1894
    %v2099 = vpack.c.b16 %v1919, %v1907
    %v2100 = vpack.c.b16 %v1920, %v1908
    %v2101 = vpack.c.b16 %v1921, %v1909
    %v2102 = vpack.c.b16 %v1922, %v1910
    %v2103 = vpack.c.b16 %v1923, %v1911
    %v2104 = vpack.c.b16 %v1924, %v1912
    %v2105 = vpack.c.b16 %v1925, %v1913
    %v2106 = vpack.c.b16 %v1926, %v1914
    %v2107 = vpack.c.b16 %v1927, %v1915
    %v2108 = vpack.c.b16 %v1928, %v1916
    %v2109 = vpack.c.b16 %v1929, %v1917
    %v2110 = vpack.c.b16 %v1930, %v1918
    %v2111 = vpack.c.b16 %v1943, %v1931
    %v2112 = vpack.c.b16 %v1944, %v1932
    %v2113 = vpack.c.b16 %v1945, %v1933
    %v2114 = vpack.c.b16 %v1946, %v1934
    %v2115 = vpack.c.b16 %v1947, %v1935
    %v2116 = vpack.c.b16 %v1948, %v1936
    %v2117 = vpack.c.b16 %v1949, %v1937
    %v2118 = vpack.c.b16 %v1950, %v1938
    %v2119 = vpack.c.b16 %v1951, %v1939
    %v2120 = vpack.c.b16 %v1952, %v1940
    %v2121 = vpack.c.b16 %v1953, %v1941
    %v2122 = vpack.c.b16 %v1954, %v1942
    %v2123 = vpack.c.b16 %v1967, %v1955
    %v2124 = vpack.c.b16 %v1968, %v1956
    %v2125 = vpack.c.b16 %v1969, %v1957
    %v2126 = vpack.c.b16 %v1970, %v1958
    %v2127 = vpack.c.b16 %v1971, %v1959
    %v2128 = vpack.c.b16 %v1972, %v1960
    %v2129 = vpack.c.b16 %v1973, %v1961
    %v2130 = vpack.c.b16 %v1974, %v1962
    %v2131 = vpack.c.b16 %v1975, %v1963
    %v2132 = vpack.c.b16 %v1976, %v1964
    %v2133 = vpack.c.b16 %v1977, %v1965
    %v2134 = vpack.c.b16 %v1978, %v1966
    %v2135 = vpack.c.b16 %v1991, %v1979
    %v2136 = vpack.c.b16 %v1992, %v1980
    %v2137 = vpack.c.b16 %v1993, %v1981
    %v2138 = vpack.c.b16 %v1994, %v1982
    %v2139 = vpack.c.b16 %v1995, %v1983
    %v2140 = vpack.c.b16 %v1996, %v1984
    %v2141 = vpack.c.b16 %v1997, %v1985
    %v2142 = vpack.c.b16 %v1998, %v1986
    %v2143 = vpack.c.b16 %v1999, %v1987
    %v2144 = vpack.c.b16 %v2000, %v1988
    %v2145 = vpack.c.b16 %v2001, %v1989
    %v2146 = vpack.c.b16 %v2002, %v1990
    %v2147 = vpack.c.b16 %v2015, %v2003
    %v2148 = vpack.c.b16 %v2016, %v2004
    %v2149 = vpack.c.b16 %v2017, %v2005
    %v2150 = vpack.c.b16 %v2018, %v2006
    %v2151 = vpack.c.b16 %v2019, %v2007
    %v2152 = vpack.c.b16 %v2020, %v2008
    %v2153 = vpack.c.b16 %v2021, %v2009
    %v2154 = vpack.c.b16 %v2022, %v2010
    %v2155 = vpack.c.b16 %v2023, %v2011
    %v2156 = vpack.c.b16 %v2024, %v2012
    %v2157 = vpack.c.b16 %v2025, %v2013
    %v2158 = vpack.c.b16 %v2026, %v2014
    %v2159 = vpack.c.b16 %v2039, %v2027
    %v2160 = vpack.c.b16 %v2040, %v2028
    %v2161 = vpack.c.b16 %v2041, %v2029
    %v2162 = vpack.c.b16 %v2042, %v2030
    %v2163 = vpack.c.b16 %v2043, %v2031
    %v2164 = vpack.c.b16 %v2044, %v2032
    %v2165 = vpack.c.b16 %v2045, %v2033
    %v2166 = vpack.c.b16 %v2046, %v2034
    %v2167 = vpack.c.b16 %v2047, %v2035
    %v2168 = vpack.c.b16 %v2048, %v2036
    %v2169 = vpack.c.b16 %v2049, %v2037
    %v2170 = vpack.c.b16 %v2050, %v2038
    %v2470 = vunpack.c.l.b16 %v1262
    %v2471 = vunpack.c.l.b16 %v1263
    %v2472 = vunpack.c.l.b16 %v1264
    %v2473 = vunpack.c.l.b16 %v1265
    %v2474 = vunpack.c.l.b16 %v1266
    %v2475 = vunpack.c.l.b16 %v1267
    %v2476 = vunpack.c.l.b16 %v1268
    %v2477 = vunpack.c.l.b16 %v1269
    %v2478 = vunpack.c.l.b16 %v1270
    %v2479 = vunpack.c.l.b16 %v1271
    %v2480 = vunpack.c.l.b16 %v1272
    %v2481 = vunpack.c.l.b16 %v1273
    %v2482 = vunpack.c.l.b16 %v1274
    %v2483 = vunpack.c.l.b16 %v1275
    %v2484 = vunpack.c.l.b16 %v1276
    %v2485 = vunpack.c.l.b16 %v1277
    %v2486 = vunpack.c.l.b16 %v1278
    %v2487 = vunpack.c.l.b16 %v1279
    %v2488 = vunpack.c.l.b16 %v1280
    %v2489 = vunpack.c.l.b16 %v1281
    %v2490 = vunpack.c.l.b16 %v1282
    %v2491 = vunpack.c.l.b16 %v1283
    %v2492 = vunpack.c.l.b16 %v1284
    %v2493 = vunpack.c.l.b16 %v1285
    %v2494 = vunpack.c.l.b16 %v1286
    %v2495 = vunpack.c.l.b16 %v1287
    %v2496 = vunpack.c.l.b16 %v1288
    %v2497 = vunpack.c.l.b16 %v1289
    %v2498 = vunpack.c.l.b16 %v1290
    %v2499 = vunpack.c.l.b16 %v1291
    %v2500 = vunpack.c.l.b16 %v1292
    %v2501 = vunpack.c.l.b16 %v1293
    %v2502 = vunpack.c.l.b16 %v1294
    %v2503 = vunpack.c.l.b16 %v1295
    %v2504 = vunpack.c.l.b16 %v1296
    %v2505 = vunpack.c.l.b16 %v1297
    %v2506 = vunpack.c.l.b16 %v1298
    %v2507 = vunpack.c.l.b16 %v1299
    %v2508 = vunpack.c.l.b16 %v1300
    %v2509 = vunpack.c.l.b16 %v1301
    %v2510 = vunpack.c.l.b16 %v1302
    %v2511 = vunpack.c.l.b16 %v1303
    %v2512 = vunpack.c.l.b16 %v1304
    %v2513 = vunpack.c.l.b16 %v1305
    %v2514 = vunpack.c.l.b16 %v1306
    %v2515 = vunpack.c.l.b16 %v1307
    %v2516 = vunpack.c.l.b16 %v1308
    %v2517 = vunpack.c.l.b16 %v1309
    %v2518 = vunpack.c.l.b16 %v1310
    %v2519 = vunpack.c.l.b16 %v1311
    %v2520 = vunpack.c.l.b16 %v1312
    %v2521 = vunpack.c.l.b16 %v1313
    %v2522 = vunpack.c.l.b16 %v1314
    %v2523 = vunpack.c.l.b16 %v1315
    %v2524 = vunpack.c.l.b16 %v1316
    %v2525 = vunpack.c.l.b16 %v1317
    %v2526 = vunpack.c.l.b16 %v1318
    %v2527 = vunpack.c.l.b16 %v1319
    %v2528 = vunpack.c.l.b16 %v1320
    %v2529 = vunpack.c.l.b16 %v1321
    %v2530 = vunpack.c.l.b16 %v1322
    %v2531 = vunpack.c.l.b16 %v1323
    %v2532 = vunpack.c.l.b16 %v1324
    %v2533 = vunpack.c.l.b16 %v1325
    %v2534 = vunpack.c.l.b16 %v1326
    %v2535 = vunpack.c.l.b16 %v1327
    %v2536 = vunpack.c.l.b16 %v1328
    %v2537 = vunpack.c.l.b16 %v1329
    %v2538 = vunpack.c.l.b16 %v1330
    %v2539 = vunpack.c.l.b16 %v1331
    %v2540 = vunpack.c.l.b16 %v1332
    %v2541 = vunpack.c.l.b16 %v1333
    %v2542 = vunpack.c.l.b16 %v1334
    %v2543 = vunpack.c.l.b16 %v1335
    %v2544 = vunpack.c.l.b16 %v1336
    %v2545 = vunpack.c.l.b16 %v1337
    %v2546 = vunpack.c.l.b16 %v1338
    %v2547 = vunpack.c.l.b16 %v1339
    %v2548 = vunpack.c.l.b16 %v1340
    %v2549 = vunpack.c.l.b16 %v1341
    %v2550 = vunpack.c.l.b16 %v1342
    %v2551 = vunpack.c.l.b16 %v1343
    %v2552 = vunpack.c.l.b16 %v1344
    %v2553 = vunpack.c.l.b16 %v1345
    %v2554 = vunpack.c.l.b16 %v1346
    %v2555 = vunpack.c.l.b16 %v1347
    %v2556 = vunpack.c.l.b16 %v1348
    %v2557 = vunpack.c.l.b16 %v1349
    %v2558 = vunpack.c.l.b16 %v1350
    %v2559 = vunpack.c.l.b16 %v1351
    %v2560 = vunpack.c.l.b16 %v1352
    %v2561 = vunpack.c.l.b16 %v1353
    %v2562 = vunpack.c.l.b16 %v1354
    %v2563 = vunpack.c.l.b16 %v1355
    %v2564 = vunpack.c.l.b16 %v1356
    %v2565 = vunpack.c.l.b16 %v1357
    %v2566 = vunpack.c.l.b16 %v1358
    %v2567 = vunpack.c.l.b16 %v1359
    %v2568 = vunpack.c.l.b16 %v1360
    %v2569 = vunpack.c.l.b16 %v1361
    %v2570 = vunpack.c.l.b16 %v1362
    %v2571 = vunpack.c.l.b16 %v1363
    %v2572 = vunpack.c.l.b16 %v1364
    %v2573 = vunpack.c.l.b16 %v1365
    %v2574 = vunpack.c.l.b16 %v1366
    %v2575 = vunpack.c.l.b16 %v1367
    %v2576 = vunpack.c.l.b16 %v1368
    %v2577 = vunpack.c.l.b16 %v1369
    %v2578 = vunpack.c.l.b16 %v1370
    %v2579 = vunpack.c.l.b16 %v1371
    %v2580 = vunpack.c.l.b16 %v1372
    %v2581 = vunpack.c.l.b16 %v1373
    %v2582 = vunpack.c.l.b16 %v1374
    %v2583 = vunpack.c.l.b16 %v1375
    %v2584 = vunpack.c.l.b16 %v1376
    %v2585 = vunpack.c.l.b16 %v1377
    %v2586 = vunpack.c.l.b16 %v1378
    %v2587 = vunpack.c.l.b16 %v1379
    %v2588 = vunpack.c.l.b16 %v1380
    %v2589 = vunpack.c.l.b16 %v1381
    %v2590 = vunpack.c.l.b16 %v1382
    %v2591 = vunpack.c.l.b16 %v1383
    %v2592 = vunpack.c.l.b16 %v1384
    %v2593 = vunpack.c.l.b16 %v1385
    %v2594 = vunpack.c.l.b16 %v1386
    %v2595 = vunpack.c.l.b16 %v1387
    %v2596 = vunpack.c.l.b16 %v1388
    %v2597 = vunpack.c.l.b16 %v1389
    %v2598 = vunpack.c.l.b16 %v1390
    %v2599 = vunpack.c.l.b16 %v1391
    %v2600 = vunpack.c.l.b16 %v1392
    %v2601 = vunpack.c.l.b16 %v1393
    %v2602 = vunpack.c.l.b16 %v1394
    %v2603 = vunpack.c.l.b16 %v1395
    %v2604 = vunpack.c.l.b16 %v1396
    %v2605 = vunpack.c.l.b16 %v1397
    %v2606 = vunpack.c.l.b16 %v1398
    %v2607 = vunpack.c.l.b16 %v1399
    %v2608 = vunpack.c.l.b16 %v1400
    %v2609 = vunpack.c.l.b16 %v1401
    %v2610 = vunpack.c.l.b16 %v1402
    %v2611 = vunpack.c.l.b16 %v1403
    %v2612 = vunpack.c.l.b16 %v1404
    %v2613 = vunpack.c.l.b16 %v1405
    %v2614 = vunpack.c.l.b16 %v1406
    %v2615 = vunpack.c.l.b16 %v1407
    %v2616 = vunpack.c.l.b16 %v1408
    %v2617 = vunpack.c.l.b16 %v1409
    %v2618 = vunpack.c.l.b16 %v1410
    %v2619 = vunpack.c.l.b16 %v1411
    %v2620 = vunpack.c.l.b16 %v1412
    %v2621 = vunpack.c.l.b16 %v1413
    %v2622 = vunpack.c.l.b16 %v1414
    %v2623 = vunpack.c.l.b16 %v1415
    %v2624 = vunpack.c.l.b16 %v1416
    %v2625 = vunpack.c.l.b16 %v1417
    %v2626 = vunpack.c.l.b16 %v1418
    %v2627 = vunpack.c.l.b16 %v1419
    %v2628 = vunpack.c.l.b16 %v1420
    %v2629 = vunpack.c.l.b16 %v1421
    %v2630 = vunpack.c.l.b16 %v1422
    %v2631 = vunpack.c.l.b16 %v1423
    %v2632 = vunpack.c.l.b16 %v1424
    %v2633 = vunpack.c.l.b16 %v1425
    %v2634 = vunpack.c.l.b16 %v1426
    %v2635 = vunpack.c.l.b16 %v1427
    %v2636 = vunpack.c.l.b16 %v1428
    %v2637 = vunpack.c.l.b16 %v1429
    %v2638 = vunpack.c.l.b16 %v1430
    %v2639 = vunpack.c.l.b16 %v1431
    %v2640 = vunpack.c.l.b16 %v1432
    %v2641 = vunpack.c.l.b16 %v1433
    %v2642 = vunpack.c.l.b16 %v1434
    %v2643 = vunpack.c.l.b16 %v1435
    %v2644 = vunpack.c.l.b16 %v1436
    %v2645 = vunpack.c.l.b16 %v1437
    %v2646 = vunpack.c.l.b16 %v1438
    %v2647 = vunpack.c.l.b16 %v1439
    %v2648 = vunpack.c.l.b16 %v1440
    %v2649 = vunpack.c.l.b16 %v1441
    %v2650 = vunpack.c.l.b16 %v1442
    %v2651 = vunpack.c.l.b16 %v1443
    %v2652 = vunpack.c.l.b16 %v1444
    %v2653 = vunpack.c.l.b16 %v1445
    %v2654 = vunpack.c.l.b16 %v1446
    %v2655 = vunpack.c.l.b16 %v1447
    %v2656 = vunpack.c.l.b16 %v1448
    %v2657 = vunpack.c.l.b16 %v1449
    %v2658 = vunpack.c.l.b16 %v1450
    %v2659 = vpack.c.b16 %v2471, %v2470
    %v2660 = vpack.c.b16 %v2473, %v2472
    %v2661 = vpack.c.b16 %v2475, %v2474
    %v2662 = vpack.c.b16 %v2477, %v2476
    %v2663 = vpack.c.b16 %v2479, %v2478
    %v2664 = vpack.c.b16 %v2481, %v2480
    %v2665 = vpack.c.b16 %v2483, %v2482
    %v2666 = vpack.c.b16 %v2485, %v2484
    %v2667 = vpack.c.b16 %v2487, %v2486
    %v2668 = vpack.c.b16 %v2489, %v2488
    %v2669 = vpack.c.b16 %v2491, %v2490
    %v2670 = vpack.c.b16 %v2493, %v2492
    %v2671 = vpack.c.b16 %v2495, %v2494
    %v2672 = vpack.c.b16 %v2497, %v2496
    %v2673 = vpack.c.b16 %v2499, %v2498
    %v2674 = vpack.c.b16 %v2501, %v2500
    %v2675 = vpack.c.b16 %v2503, %v2502
    %v2676 = vpack.c.b16 %v2505, %v2504
    %v2677 = vpack.c.b16 %v2507, %v2506
    %v2678 = vpack.c.b16 %v2509, %v2508
    %v2679 = vpack.c.b16 %v2511, %v2510
    %v2680 = vpack.c.b16 %v2513, %v2512
    %v2681 = vpack.c.b16 %v2515, %v2514
    %v2682 = vpack.c.b16 %v2517, %v2516
    %v2683 = vpack.c.b16 %v2519, %v2518
    %v2684 = vpack.c.b16 %v2521, %v2520
    %v2685 = vpack.c.b16 %v2523, %v2522
    %v2686 = vpack.c.b16 %v2525, %v2524
    %v2687 = vpack.c.b16 %v2527, %v2526
    %v2688 = vpack.c.b16 %v2529, %v2528
    %v2689 = vpack.c.b16 %v2531, %v2530
    %v2690 = vpack.c.b16 %v2533, %v2532
    %v2691 = vpack.c.b16 %v2535, %v2534
    %v2692 = vpack.c.b16 %v2537, %v2536
    %v2693 = vpack.c.b16 %v2539, %v2538
    %v2694 = vpack.c.b16 %v2541, %v2540
    %v2695 = vpack.c.b16 %v2543, %v2542
    %v2696 = vpack.c.b16 %v2545, %v2544
    %v2697 = vpack.c.b16 %v2547, %v2546
    %v2698 = vpack.c.b16 %v2549, %v2548
    %v2699 = vpack.c.b16 %v2551, %v2550
    %v2700 = vpack.c.b16 %v2553, %v2552
    %v2701 = vpack.c.b16 %v2555, %v2554
    %v2702 = vpack.c.b16 %v2557, %v2556
    %v2703 = vpack.c.b16 %v2559, %v2558
    %v2704 = vpack.c.b16 %v2561, %v2560
    %v2705 = vpack.c.b16 %v2563, %v2562
    %v2706 = vpack.c.b16 %v2565, %v2564
    %v2707 = vpack.c.b16 %v2567, %v2566
    %v2708 = vpack.c.b16 %v2569, %v2568
    %v2709 = vpack.c.b16 %v2571, %v2570
    %v2710 = vpack.c.b16 %v2573, %v2572
    %v2711 = vpack.c.b16 %v2575, %v2574
    %v2712 = vpack.c.b16 %v2577, %v2576
    %v2713 = vpack.c.b16 %v2579, %v2578
    %v2714 = vpack.c.b16 %v2581, %v2580
    %v2715 = vpack.c.b16 %v2583, %v2582
    %v2716 = vpack.c.b16 %v2585, %v2584
    %v2717 = vpack.c.b16 %v2587, %v2586
    %v2718 = vpack.c.b16 %v2589, %v2588
    %v2719 = vpack.c.b16 %v2591, %v2590
    %v2720 = vpack.c.b16 %v2593, %v2592
    %v2721 = vpack.c.b16 %v2595, %v2594
    %v2722 = vpack.c.b16 %v2597, %v2596
    %v2723 = vpack.c.b16 %v2599, %v2598
    %v2724 = vpack.c.b16 %v2601, %v2600
    %v2725 = vpack.c.b16 %v2603, %v2602
    %v2726 = vpack.c.b16 %v2605, %v2604
    %v2727 = vpack.c.b16 %v2607, %v2606
    %v2728 = vpack.c.b16 %v2609, %v2608
    %v2729 = vpack.c.b16 %v2611, %v2610
    %v2730 = vpack.c.b16 %v2613, %v2612
    %v2731 = vpack.c.b16 %v2615, %v2614
    %v2732 = vpack.c.b16 %v2617, %v2616
    %v2733 = vpack.c.b16 %v2619, %v2618
    %v2734 = vpack.c.b16 %v2621, %v2620
    %v2735 = vpack.c.b16 %v2623, %v2622
    %v2736 = vpack.c.b16 %v2625, %v2624
    %v2737 = vpack.c.b16 %v2627, %v2626
    %v2738 = vpack.c.b16 %v2629, %v2628
    %v2739 = vpack.c.b16 %v2631, %v2630
    %v2740 = vpack.c.b16 %v2633, %v2632
    %v2741 = vpack.c.b16 %v2635, %v2634
    %v2742 = vpack.c.b16 %v2637, %v2636
    %v2743 = vpack.c.b16 %v2639, %v2638
    %v2744 = vpack.c.b16 %v2641, %v2640
    %v2745 = vpack.c.b16 %v2643, %v2642
    %v2746 = vpack.c.b16 %v2645, %v2644
    %v2747 = vpack.c.b16 %v2647, %v2646
    %v2748 = vpack.c.b16 %v2649, %v2648
    %v2749 = vpack.c.b16 %v2651, %v2650
    %v2750 = vpack.c.b16 %v2653, %v2652
    %v2751 = vpack.c.b16 %v2655, %v2654
    %v2752 = vpack.c.b16 %v2657, %v2656
    %v2753 = vpack.c.b16 %v2658, %v2658
    %vm2848 = vcmask 850944
    %v2850 = vsel %vm2848, %v2062, 0
    %v2853 = vsel %vm2848, %v2074, 0
    %v2856 = vsel %vm2848, %v2086, 0
    %v2859 = vsel %vm2848, %v2098, 0
    %v2862 = vsel %vm2848, %v2110, 0
    %v2865 = vsel %vm2848, %v2122, 0
    %v2868 = vsel %vm2848, %v2134, 0
    %v2871 = vsel %vm2848, %v2146, 0
    %v2874 = vsel %vm2848, %v2158, 0
    %v2877 = vsel %vm2848, %v2170, 0
    %vm2879 = vcmask 1043456
    %v2881 = vsel %vm2879, %v2753, 0
    %2883 = vmatprep.subr.bf16.mxu0 0
    %2884 = vmatpush1.bf16.msra.mxu0 %v2659
    %2885 = vmatprep.subr.bf16.mxu0 0
    %2886 = vmatpush1.bf16.msra.mxu0 %v2660
    %2887 = vmatprep.subr.bf16.mxu0 0
    %2888 = vmatpush1.bf16.msra.mxu0 %v2661
    %2889 = vmatprep.subr.bf16.mxu0 0
    %2890 = vmatpush1.bf16.msra.mxu0 %v2662
    %2891 = vmatprep.subr.bf16.mxu0 0
    %2892 = vmatpush1.bf16.msra.mxu0 %v2663
    %2893 = vmatprep.subr.bf16.mxu0 0
    %2894 = vmatpush1.bf16.msra.mxu0 %v2664
    %2895 = vmatprep.subr.bf16.mxu0 0
    %2896 = vmatpush1.bf16.msra.mxu0 %v2665
    %2897 = vmatprep.subr.bf16.mxu0 0
    %2898 = vmatpush1.bf16.msra.mxu0 %v2666
    %2899 = vmatprep.subr.bf16.mxu0 0
    %2900 = vmatpush1.bf16.msra.mxu0 %v2667
    %2901 = vmatprep.subr.bf16.mxu0 0
    %2902 = vmatpush1.bf16.msra.mxu0 %v2668
    %2903 = vmatprep.subr.bf16.mxu0 0
    %2904 = vmatpush1.bf16.msra.mxu0 %v2669
    %2905 = vmatprep.subr.bf16.mxu0 0
    %2906 = vmatpush1.bf16.msra.mxu0 %v2670
    %2907 = vmatprep.subr.bf16.mxu0 0
    %2908 = vmatpush1.bf16.msra.mxu0 %v2671
    %2909 = vmatprep.subr.bf16.mxu0 0
    %2910 = vmatpush1.bf16.msra.mxu0 %v2672
    %2911 = vmatprep.subr.bf16.mxu0 0
    %2912 = vmatpush1.bf16.msra.mxu0 %v2673
    %2913 = vmatprep.subr.bf16.mxu0 0
    %2914 = vmatpush1.bf16.msra.mxu0 %v2674
    %2915 = vmatprep.mubr.bf16.mxu0 %v2052
    %2916 = vmatmul.mubr.bf16.gmra.mrb[0].mxu0 %v2051
    %v2917 = vpop.f32.mrb[0].mxu0
    %v2918 = vadd.f32 %v1594, %v2917
    %v2919 = vpop.f32.mrb[0].mxu0
    %v2920 = vpop.f32.mrb[0].mxu0
    %v2921 = vadd.f32 %v1599, %v2920
    %v2922 = vpop.f32.mrb[0].mxu0
    %2923 = vmatprep.mubr.bf16.mxu0 %v2064
    %2924 = vmatmul.mubr.bf16.gmra.mrb[0].mxu0 %v2063
    %v2925 = vpop.f32.mrb[0].mxu0
    %v2926 = vadd.f32 %v1604, %v2925
    %v2927 = vpop.f32.mrb[0].mxu0
    %v2928 = vpop.f32.mrb[0].mxu0
    %v2929 = vadd.f32 %v1609, %v2928
    %v2930 = vpop.f32.mrb[0].mxu0
    %2931 = vmatprep.mubr.bf16.mxu0 %v2076
    %2932 = vmatmul.mubr.bf16.gmra.mrb[0].mxu0 %v2075
    %v2933 = vpop.f32.mrb[0].mxu0
    %v2934 = vadd.f32 %v1614, %v2933
    %v2935 = vpop.f32.mrb[0].mxu0
    %v2936 = vpop.f32.mrb[0].mxu0
    %v2937 = vadd.f32 %v1619, %v2936
    %v2938 = vpop.f32.mrb[0].mxu0
    %2939 = vmatprep.mubr.bf16.mxu0 %v2088
    %2940 = vmatmul.mubr.bf16.gmra.mrb[0].mxu0 %v2087
    %v2941 = vpop.f32.mrb[0].mxu0
    %v2942 = vadd.f32 %v1624, %v2941
    %v2943 = vpop.f32.mrb[0].mxu0
    %v2944 = vpop.f32.mrb[0].mxu0
    %v2945 = vadd.f32 %v1629, %v2944
    %v2946 = vpop.f32.mrb[0].mxu0
    %2947 = vmatprep.mubr.bf16.mxu0 %v2100
    %2948 = vmatmul.mubr.bf16.gmra.mrb[0].mxu0 %v2099
    %v2949 = vpop.f32.mrb[0].mxu0
    %v2950 = vadd.f32 %v1634, %v2949
    %v2951 = vpop.f32.mrb[0].mxu0
    %v2952 = vpop.f32.mrb[0].mxu0
    %v2953 = vadd.f32 %v1639, %v2952
    %v2954 = vpop.f32.mrb[0].mxu0
    %2955 = vmatprep.mubr.bf16.mxu0 %v2112
    %2956 = vmatmul.mubr.bf16.gmra.mrb[0].mxu0 %v2111
    %v2957 = vpop.f32.mrb[0].mxu0
    %v2958 = vadd.f32 %v1644, %v2957
    %v2959 = vpop.f32.mrb[0].mxu0
    %v2960 = vpop.f32.mrb[0].mxu0
    %v2961 = vadd.f32 %v1649, %v2960
    %v2962 = vpop.f32.mrb[0].mxu0
    %2963 = vmatprep.mubr.bf16.mxu0 %v2124
    %2964 = vmatmul.mubr.bf16.gmra.mrb[0].mxu0 %v2123
    %v2965 = vpop.f32.mrb[0].mxu0
    %v2966 = vadd.f32 %v1654, %v2965
    %v2967 = vpop.f32.mrb[0].mxu0
    %v2968 = vpop.f32.mrb[0].mxu0
    %v2969 = vadd.f32 %v1659, %v2968
    %v2970 = vpop.f32.mrb[0].mxu0
    %2971 = vmatprep.mubr.bf16.mxu0 %v2136
    %2972 = vmatmul.mubr.bf16.gmra.mrb[0].mxu0 %v2135
    %v2973 = vpop.f32.mrb[0].mxu0
    %v2974 = vadd.f32 %v1664, %v2973
    %v2975 = vpop.f32.mrb[0].mxu0
    %v2976 = vpop.f32.mrb[0].mxu0
    %v2977 = vadd.f32 %v1669, %v2976
    %v2978 = vpop.f32.mrb[0].mxu0
    %2979 = vmatprep.mubr.bf16.mxu0 %v2148
    %2980 = vmatmul.mubr.bf16.gmra.mrb[0].mxu0 %v2147
    %v2981 = vpop.f32.mrb[0].mxu0
    %v2982 = vadd.f32 %v1674, %v2981
    %v2983 = vpop.f32.mrb[0].mxu0
    %v2984 = vpop.f32.mrb[0].mxu0
    %v2985 = vadd.f32 %v1679, %v2984
    %v2986 = vpop.f32.mrb[0].mxu0
    %2987 = vmatprep.mubr.bf16.mxu0 %v2160
    %2988 = vmatmul.mubr.bf16.gmra.mrb[0].mxu0 %v2159
    %v2989 = vpop.f32.mrb[0].mxu0
    %v2990 = vadd.f32 %v1684, %v2989
    %v2991 = vpop.f32.mrb[0].mxu0
    %v2992 = vpop.f32.mrb[0].mxu0
    %v2993 = vadd.f32 %v1689, %v2992
    %v2994 = vpop.f32.mrb[0].mxu0
    %2995 = vdwg.mxu0
    %2996 = vmatprep.subr.bf16.mxu0 0
    %2997 = vmatpush1.bf16.msra.mxu0 %v2675
    %2998 = vmatprep.subr.bf16.mxu0 0
    %2999 = vmatpush1.bf16.msra.mxu0 %v2676
    %3000 = vmatprep.subr.bf16.mxu0 0
    %3001 = vmatpush1.bf16.msra.mxu0 %v2677
    %3002 = vmatprep.subr.bf16.mxu0 0
    %3003 = vmatpush1.bf16.msra.mxu0 %v2678
    %3004 = vmatprep.subr.bf16.mxu0 0
    %3005 = vmatpush1.bf16.msra.mxu0 %v2679
    %3006 = vmatprep.subr.bf16.mxu0 0
    %3007 = vmatpush1.bf16.msra.mxu0 %v2680
    %3008 = vmatprep.subr.bf16.mxu0 0
    %3009 = vmatpush1.bf16.msra.mxu0 %v2681
    %3010 = vmatprep.subr.bf16.mxu0 0
    %3011 = vmatpush1.bf16.msra.mxu0 %v2682
    %3012 = vmatprep.subr.bf16.mxu0 0
    %3013 = vmatpush1.bf16.msra.mxu0 %v2683
    %3014 = vmatprep.subr.bf16.mxu0 0
    %3015 = vmatpush1.bf16.msra.mxu0 %v2684
    %3016 = vmatprep.subr.bf16.mxu0 0
    %3017 = vmatpush1.bf16.msra.mxu0 %v2685
    %3018 = vmatprep.subr.bf16.mxu0 0
    %3019 = vmatpush1.bf16.msra.mxu0 %v2686
    %3020 = vmatprep.subr.bf16.mxu0 0
    %3021 = vmatpush1.bf16.msra.mxu0 %v2687
    %3022 = vmatprep.subr.bf16.mxu0 0
    %3023 = vmatpush1.bf16.msra.mxu0 %v2688
    %3024 = vmatprep.subr.bf16.mxu0 0
    %3025 = vmatpush1.bf16.msra.mxu0 %v2689
    %3026 = vmatprep.subr.bf16.mxu0 0
    %3027 = vmatpush1.bf16.msra.mxu0 %v2690
    %3028 = vmatprep.mubr.bf16.mxu0 %v2054
    %3029 = vmatmul.mubr.bf16.gmra.mrb[0].mxu0 %v2053
    %v3030 = vpop.f32.mrb[0].mxu0
    %v3031 = vadd.f32 %v2918, %v3030
    %v3032 = vpop.f32.mrb[0].mxu0
    %v3033 = vpop.f32.mrb[0].mxu0
    %v3034 = vadd.f32 %v2921, %v3033
    %v3035 = vpop.f32.mrb[0].mxu0
    %3036 = vmatprep.mubr.bf16.mxu0 %v2066
    %3037 = vmatmul.mubr.bf16.gmra.mrb[0].mxu0 %v2065
    %v3038 = vpop.f32.mrb[0].mxu0
    %v3039 = vadd.f32 %v2926, %v3038
    %v3040 = vpop.f32.mrb[0].mxu0
    %v3041 = vpop.f32.mrb[0].mxu0
    %v3042 = vadd.f32 %v2929, %v3041
    %v3043 = vpop.f32.mrb[0].mxu0
    %3044 = vmatprep.mubr.bf16.mxu0 %v2078
    %3045 = vmatmul.mubr.bf16.gmra.mrb[0].mxu0 %v2077
    %v3046 = vpop.f32.mrb[0].mxu0
    %v3047 = vadd.f32 %v2934, %v3046
    %v3048 = vpop.f32.mrb[0].mxu0
    %v3049 = vpop.f32.mrb[0].mxu0
    %v3050 = vadd.f32 %v2937, %v3049
    %v3051 = vpop.f32.mrb[0].mxu0
    %3052 = vmatprep.mubr.bf16.mxu0 %v2090
    %3053 = vmatmul.mubr.bf16.gmra.mrb[0].mxu0 %v2089
    %v3054 = vpop.f32.mrb[0].mxu0
    %v3055 = vadd.f32 %v2942, %v3054
    %v3056 = vpop.f32.mrb[0].mxu0
    %v3057 = vpop.f32.mrb[0].mxu0
    %v3058 = vadd.f32 %v2945, %v3057
    %v3059 = vpop.f32.mrb[0].mxu0
    %3060 = vmatprep.mubr.bf16.mxu0 %v2102
    %3061 = vmatmul.mubr.bf16.gmra.mrb[0].mxu0 %v2101
    %v3062 = vpop.f32.mrb[0].mxu0
    %v3063 = vadd.f32 %v2950, %v3062
    %v3064 = vpop.f32.mrb[0].mxu0
    %v3065 = vpop.f32.mrb[0].mxu0
    %v3066 = vadd.f32 %v2953, %v3065
    %v3067 = vpop.f32.mrb[0].mxu0
    %3068 = vmatprep.mubr.bf16.mxu0 %v2114
    %3069 = vmatmul.mubr.bf16.gmra.mrb[0].mxu0 %v2113
    %v3070 = vpop.f32.mrb[0].mxu0
    %v3071 = vadd.f32 %v2958, %v3070
    %v3072 = vpop.f32.mrb[0].mxu0
    %v3073 = vpop.f32.mrb[0].mxu0
    %v3074 = vadd.f32 %v2961, %v3073
    %v3075 = vpop.f32.mrb[0].mxu0
    %3076 = vmatprep.mubr.bf16.mxu0 %v2126
    %3077 = vmatmul.mubr.bf16.gmra.mrb[0].mxu0 %v2125
    %v3078 = vpop.f32.mrb[0].mxu0
    %v3079 = vadd.f32 %v2966, %v3078
    %v3080 = vpop.f32.mrb[0].mxu0
    %v3081 = vpop.f32.mrb[0].mxu0
    %v3082 = vadd.f32 %v2969, %v3081
    %v3083 = vpop.f32.mrb[0].mxu0
    %3084 = vmatprep.mubr.bf16.mxu0 %v2138
    %3085 = vmatmul.mubr.bf16.gmra.mrb[0].mxu0 %v2137
    %v3086 = vpop.f32.mrb[0].mxu0
    %v3087 = vadd.f32 %v2974, %v3086
    %v3088 = vpop.f32.mrb[0].mxu0
    %v3089 = vpop.f32.mrb[0].mxu0
    %v3090 = vadd.f32 %v2977, %v3089
    %v3091 = vpop.f32.mrb[0].mxu0
    %3092 = vmatprep.mubr.bf16.mxu0 %v2150
    %3093 = vmatmul.mubr.bf16.gmra.mrb[0].mxu0 %v2149
    %v3094 = vpop.f32.mrb[0].mxu0
    %v3095 = vadd.f32 %v2982, %v3094
    %v3096 = vpop.f32.mrb[0].mxu0
    %v3097 = vpop.f32.mrb[0].mxu0
    %v3098 = vadd.f32 %v2985, %v3097
    %v3099 = vpop.f32.mrb[0].mxu0
    %3100 = vmatprep.mubr.bf16.mxu0 %v2162
    %3101 = vmatmul.mubr.bf16.gmra.mrb[0].mxu0 %v2161
    %v3102 = vpop.f32.mrb[0].mxu0
    %v3103 = vadd.f32 %v2990, %v3102
    %v3104 = vpop.f32.mrb[0].mxu0
    %v3105 = vpop.f32.mrb[0].mxu0
    %v3106 = vadd.f32 %v2993, %v3105
    %v3107 = vpop.f32.mrb[0].mxu0
    %3108 = vdwg.mxu0
    %3109 = vmatprep.subr.bf16.mxu0 0
    %3110 = vmatpush1.bf16.msra.mxu0 %v2691
    %3111 = vmatprep.subr.bf16.mxu0 0
    %3112 = vmatpush1.bf16.msra.mxu0 %v2692
    %3113 = vmatprep.subr.bf16.mxu0 0
    %3114 = vmatpush1.bf16.msra.mxu0 %v2693
    %3115 = vmatprep.subr.bf16.mxu0 0
    %3116 = vmatpush1.bf16.msra.mxu0 %v2694
    %3117 = vmatprep.subr.bf16.mxu0 0
    %3118 = vmatpush1.bf16.msra.mxu0 %v2695
    %3119 = vmatprep.subr.bf16.mxu0 0
    %3120 = vmatpush1.bf16.msra.mxu0 %v2696
    %3121 = vmatprep.subr.bf16.mxu0 0
    %3122 = vmatpush1.bf16.msra.mxu0 %v2697
    %3123 = vmatprep.subr.bf16.mxu0 0
    %3124 = vmatpush1.bf16.msra.mxu0 %v2698
    %3125 = vmatprep.subr.bf16.mxu0 0
    %3126 = vmatpush1.bf16.msra.mxu0 %v2699
    %3127 = vmatprep.subr.bf16.mxu0 0
    %3128 = vmatpush1.bf16.msra.mxu0 %v2700
    %3129 = vmatprep.subr.bf16.mxu0 0
    %3130 = vmatpush1.bf16.msra.mxu0 %v2701
    %3131 = vmatprep.subr.bf16.mxu0 0
    %3132 = vmatpush1.bf16.msra.mxu0 %v2702
    %3133 = vmatprep.subr.bf16.mxu0 0
    %3134 = vmatpush1.bf16.msra.mxu0 %v2703
    %3135 = vmatprep.subr.bf16.mxu0 0
    %3136 = vmatpush1.bf16.msra.mxu0 %v2704
    %3137 = vmatprep.subr.bf16.mxu0 0
    %3138 = vmatpush1.bf16.msra.mxu0 %v2705
    %3139 = vmatprep.subr.bf16.mxu0 0
    %3140 = vmatpush1.bf16.msra.mxu0 %v2706
    %3141 = vmatprep.mubr.bf16.mxu0 %v2056
    %3142 = vmatmul.mubr.bf16.gmra.mrb[0].mxu0 %v2055
    %v3143 = vpop.f32.mrb[0].mxu0
    %v3144 = vadd.f32 %v3031, %v3143
    %v3145 = vpop.f32.mrb[0].mxu0
    %v3146 = vpop.f32.mrb[0].mxu0
    %v3147 = vadd.f32 %v3034, %v3146
    %v3148 = vpop.f32.mrb[0].mxu0
    %3149 = vmatprep.mubr.bf16.mxu0 %v2068
    %3150 = vmatmul.mubr.bf16.gmra.mrb[0].mxu0 %v2067
    %v3151 = vpop.f32.mrb[0].mxu0
    %v3152 = vadd.f32 %v3039, %v3151
    %v3153 = vpop.f32.mrb[0].mxu0
    %v3154 = vpop.f32.mrb[0].mxu0
    %v3155 = vadd.f32 %v3042, %v3154
    %v3156 = vpop.f32.mrb[0].mxu0
    %3157 = vmatprep.mubr.bf16.mxu0 %v2080
    %3158 = vmatmul.mubr.bf16.gmra.mrb[0].mxu0 %v2079
    %v3159 = vpop.f32.mrb[0].mxu0
    %v3160 = vadd.f32 %v3047, %v3159
    %v3161 = vpop.f32.mrb[0].mxu0
    %v3162 = vpop.f32.mrb[0].mxu0
    %v3163 = vadd.f32 %v3050, %v3162
    %v3164 = vpop.f32.mrb[0].mxu0
    %3165 = vmatprep.mubr.bf16.mxu0 %v2092
    %3166 = vmatmul.mubr.bf16.gmra.mrb[0].mxu0 %v2091
    %v3167 = vpop.f32.mrb[0].mxu0
    %v3168 = vadd.f32 %v3055, %v3167
    %v3169 = vpop.f32.mrb[0].mxu0
    %v3170 = vpop.f32.mrb[0].mxu0
    %v3171 = vadd.f32 %v3058, %v3170
    %v3172 = vpop.f32.mrb[0].mxu0
    %3173 = vmatprep.mubr.bf16.mxu0 %v2104
    %3174 = vmatmul.mubr.bf16.gmra.mrb[0].mxu0 %v2103
    %v3175 = vpop.f32.mrb[0].mxu0
    %v3176 = vadd.f32 %v3063, %v3175
    %v3177 = vpop.f32.mrb[0].mxu0
    %v3178 = vpop.f32.mrb[0].mxu0
    %v3179 = vadd.f32 %v3066, %v3178
    %v3180 = vpop.f32.mrb[0].mxu0
    %3181 = vmatprep.mubr.bf16.mxu0 %v2116
    %3182 = vmatmul.mubr.bf16.gmra.mrb[0].mxu0 %v2115
    %v3183 = vpop.f32.mrb[0].mxu0
    %v3184 = vadd.f32 %v3071, %v3183
    %v3185 = vpop.f32.mrb[0].mxu0
    %v3186 = vpop.f32.mrb[0].mxu0
    %v3187 = vadd.f32 %v3074, %v3186
    %v3188 = vpop.f32.mrb[0].mxu0
    %3189 = vmatprep.mubr.bf16.mxu0 %v2128
    %3190 = vmatmul.mubr.bf16.gmra.mrb[0].mxu0 %v2127
    %v3191 = vpop.f32.mrb[0].mxu0
    %v3192 = vadd.f32 %v3079, %v3191
    %v3193 = vpop.f32.mrb[0].mxu0
    %v3194 = vpop.f32.mrb[0].mxu0
    %v3195 = vadd.f32 %v3082, %v3194
    %v3196 = vpop.f32.mrb[0].mxu0
    %3197 = vmatprep.mubr.bf16.mxu0 %v2140
    %3198 = vmatmul.mubr.bf16.gmra.mrb[0].mxu0 %v2139
    %v3199 = vpop.f32.mrb[0].mxu0
    %v3200 = vadd.f32 %v3087, %v3199
    %v3201 = vpop.f32.mrb[0].mxu0
    %v3202 = vpop.f32.mrb[0].mxu0
    %v3203 = vadd.f32 %v3090, %v3202
    %v3204 = vpop.f32.mrb[0].mxu0
    %3205 = vmatprep.mubr.bf16.mxu0 %v2152
    %3206 = vmatmul.mubr.bf16.gmra.mrb[0].mxu0 %v2151
    %v3207 = vpop.f32.mrb[0].mxu0
    %v3208 = vadd.f32 %v3095, %v3207
    %v3209 = vpop.f32.mrb[0].mxu0
    %v3210 = vpop.f32.mrb[0].mxu0
    %v3211 = vadd.f32 %v3098, %v3210
    %v3212 = vpop.f32.mrb[0].mxu0
    %3213 = vmatprep.mubr.bf16.mxu0 %v2164
    %3214 = vmatmul.mubr.bf16.gmra.mrb[0].mxu0 %v2163
    %v3215 = vpop.f32.mrb[0].mxu0
    %v3216 = vadd.f32 %v3103, %v3215
    %v3217 = vpop.f32.mrb[0].mxu0
    %v3218 = vpop.f32.mrb[0].mxu0
    %v3219 = vadd.f32 %v3106, %v3218
    %v3220 = vpop.f32.mrb[0].mxu0
    %3221 = vdwg.mxu0
    %3222 = vmatprep.subr.bf16.mxu0 0
    %3223 = vmatpush1.bf16.msra.mxu0 %v2707
    %3224 = vmatprep.subr.bf16.mxu0 0
    %3225 = vmatpush1.bf16.msra.mxu0 %v2708
    %3226 = vmatprep.subr.bf16.mxu0 0
    %3227 = vmatpush1.bf16.msra.mxu0 %v2709
    %3228 = vmatprep.subr.bf16.mxu0 0
    %3229 = vmatpush1.bf16.msra.mxu0 %v2710
    %3230 = vmatprep.subr.bf16.mxu0 0
    %3231 = vmatpush1.bf16.msra.mxu0 %v2711
    %3232 = vmatprep.subr.bf16.mxu0 0
    %3233 = vmatpush1.bf16.msra.mxu0 %v2712
    %3234 = vmatprep.subr.bf16.mxu0 0
    %3235 = vmatpush1.bf16.msra.mxu0 %v2713
    %3236 = vmatprep.subr.bf16.mxu0 0
    %3237 = vmatpush1.bf16.msra.mxu0 %v2714
    %3238 = vmatprep.subr.bf16.mxu0 0
    %3239 = vmatpush1.bf16.msra.mxu0 %v2715
    %3240 = vmatprep.subr.bf16.mxu0 0
    %3241 = vmatpush1.bf16.msra.mxu0 %v2716
    %3242 = vmatprep.subr.bf16.mxu0 0
    %3243 = vmatpush1.bf16.msra.mxu0 %v2717
    %3244 = vmatprep.subr.bf16.mxu0 0
    %3245 = vmatpush1.bf16.msra.mxu0 %v2718
    %3246 = vmatprep.subr.bf16.mxu0 0
    %3247 = vmatpush1.bf16.msra.mxu0 %v2719
    %3248 = vmatprep.subr.bf16.mxu0 0
    %3249 = vmatpush1.bf16.msra.mxu0 %v2720
    %3250 = vmatprep.subr.bf16.mxu0 0
    %3251 = vmatpush1.bf16.msra.mxu0 %v2721
    %3252 = vmatprep.subr.bf16.mxu0 0
    %3253 = vmatpush1.bf16.msra.mxu0 %v2722
    %3254 = vmatprep.mubr.bf16.mxu0 %v2058
    %3255 = vmatmul.mubr.bf16.gmra.mrb[0].mxu0 %v2057
    %v3256 = vpop.f32.mrb[0].mxu0
    %v3257 = vadd.f32 %v3144, %v3256
    %v3258 = vpop.f32.mrb[0].mxu0
    %v3259 = vpop.f32.mrb[0].mxu0
    %v3260 = vadd.f32 %v3147, %v3259
    %v3261 = vpop.f32.mrb[0].mxu0
    %3262 = vmatprep.mubr.bf16.mxu0 %v2070
    %3263 = vmatmul.mubr.bf16.gmra.mrb[0].mxu0 %v2069
    %v3264 = vpop.f32.mrb[0].mxu0
    %v3265 = vadd.f32 %v3152, %v3264
    %v3266 = vpop.f32.mrb[0].mxu0
    %v3267 = vpop.f32.mrb[0].mxu0
    %v3268 = vadd.f32 %v3155, %v3267
    %v3269 = vpop.f32.mrb[0].mxu0
    %3270 = vmatprep.mubr.bf16.mxu0 %v2082
    %3271 = vmatmul.mubr.bf16.gmra.mrb[0].mxu0 %v2081
    %v3272 = vpop.f32.mrb[0].mxu0
    %v3273 = vadd.f32 %v3160, %v3272
    %v3274 = vpop.f32.mrb[0].mxu0
    %v3275 = vpop.f32.mrb[0].mxu0
    %v3276 = vadd.f32 %v3163, %v3275
    %v3277 = vpop.f32.mrb[0].mxu0
    %3278 = vmatprep.mubr.bf16.mxu0 %v2094
    %3279 = vmatmul.mubr.bf16.gmra.mrb[0].mxu0 %v2093
    %v3280 = vpop.f32.mrb[0].mxu0
    %v3281 = vadd.f32 %v3168, %v3280
    %v3282 = vpop.f32.mrb[0].mxu0
    %v3283 = vpop.f32.mrb[0].mxu0
    %v3284 = vadd.f32 %v3171, %v3283
    %v3285 = vpop.f32.mrb[0].mxu0
    %3286 = vmatprep.mubr.bf16.mxu0 %v2106
    %3287 = vmatmul.mubr.bf16.gmra.mrb[0].mxu0 %v2105
    %v3288 = vpop.f32.mrb[0].mxu0
    %v3289 = vadd.f32 %v3176, %v3288
    %v3290 = vpop.f32.mrb[0].mxu0
    %v3291 = vpop.f32.mrb[0].mxu0
    %v3292 = vadd.f32 %v3179, %v3291
    %v3293 = vpop.f32.mrb[0].mxu0
    %3294 = vmatprep.mubr.bf16.mxu0 %v2118
    %3295 = vmatmul.mubr.bf16.gmra.mrb[0].mxu0 %v2117
    %v3296 = vpop.f32.mrb[0].mxu0
    %v3297 = vadd.f32 %v3184, %v3296
    %v3298 = vpop.f32.mrb[0].mxu0
    %v3299 = vpop.f32.mrb[0].mxu0
    %v3300 = vadd.f32 %v3187, %v3299
    %v3301 = vpop.f32.mrb[0].mxu0
    %3302 = vmatprep.mubr.bf16.mxu0 %v2130
    %3303 = vmatmul.mubr.bf16.gmra.mrb[0].mxu0 %v2129
    %v3304 = vpop.f32.mrb[0].mxu0
    %v3305 = vadd.f32 %v3192, %v3304
    %v3306 = vpop.f32.mrb[0].mxu0
    %v3307 = vpop.f32.mrb[0].mxu0
    %v3308 = vadd.f32 %v3195, %v3307
    %v3309 = vpop.f32.mrb[0].mxu0
    %3310 = vmatprep.mubr.bf16.mxu0 %v2142
    %3311 = vmatmul.mubr.bf16.gmra.mrb[0].mxu0 %v2141
    %v3312 = vpop.f32.mrb[0].mxu0
    %v3313 = vadd.f32 %v3200, %v3312
    %v3314 = vpop.f32.mrb[0].mxu0
    %v3315 = vpop.f32.mrb[0].mxu0
    %v3316 = vadd.f32 %v3203, %v3315
    %v3317 = vpop.f32.mrb[0].mxu0
    %3318 = vmatprep.mubr.bf16.mxu0 %v2154
    %3319 = vmatmul.mubr.bf16.gmra.mrb[0].mxu0 %v2153
    %v3320 = vpop.f32.mrb[0].mxu0
    %v3321 = vadd.f32 %v3208, %v3320
    %v3322 = vpop.f32.mrb[0].mxu0
    %v3323 = vpop.f32.mrb[0].mxu0
    %v3324 = vadd.f32 %v3211, %v3323
    %v3325 = vpop.f32.mrb[0].mxu0
    %3326 = vmatprep.mubr.bf16.mxu0 %v2166
    %3327 = vmatmul.mubr.bf16.gmra.mrb[0].mxu0 %v2165
    %v3328 = vpop.f32.mrb[0].mxu0
    %v3329 = vadd.f32 %v3216, %v3328
    %v3330 = vpop.f32.mrb[0].mxu0
    %v3331 = vpop.f32.mrb[0].mxu0
    %v3332 = vadd.f32 %v3219, %v3331
    %v3333 = vpop.f32.mrb[0].mxu0
    %3334 = vdwg.mxu0
    %3335 = vmatprep.subr.bf16.mxu0 0
    %3336 = vmatpush1.bf16.msra.mxu0 %v2723
    %3337 = vmatprep.subr.bf16.mxu0 0
    %3338 = vmatpush1.bf16.msra.mxu0 %v2724
    %3339 = vmatprep.subr.bf16.mxu0 0
    %3340 = vmatpush1.bf16.msra.mxu0 %v2725
    %3341 = vmatprep.subr.bf16.mxu0 0
    %3342 = vmatpush1.bf16.msra.mxu0 %v2726
    %3343 = vmatprep.subr.bf16.mxu0 0
    %3344 = vmatpush1.bf16.msra.mxu0 %v2727
    %3345 = vmatprep.subr.bf16.mxu0 0
    %3346 = vmatpush1.bf16.msra.mxu0 %v2728
    %3347 = vmatprep.subr.bf16.mxu0 0
    %3348 = vmatpush1.bf16.msra.mxu0 %v2729
    %3349 = vmatprep.subr.bf16.mxu0 0
    %3350 = vmatpush1.bf16.msra.mxu0 %v2730
    %3351 = vmatprep.subr.bf16.mxu0 0
    %3352 = vmatpush1.bf16.msra.mxu0 %v2731
    %3353 = vmatprep.subr.bf16.mxu0 0
    %3354 = vmatpush1.bf16.msra.mxu0 %v2732
    %3355 = vmatprep.subr.bf16.mxu0 0
    %3356 = vmatpush1.bf16.msra.mxu0 %v2733
    %3357 = vmatprep.subr.bf16.mxu0 0
    %3358 = vmatpush1.bf16.msra.mxu0 %v2734
    %3359 = vmatprep.subr.bf16.mxu0 0
    %3360 = vmatpush1.bf16.msra.mxu0 %v2735
    %3361 = vmatprep.subr.bf16.mxu0 0
    %3362 = vmatpush1.bf16.msra.mxu0 %v2736
    %3363 = vmatprep.subr.bf16.mxu0 0
    %3364 = vmatpush1.bf16.msra.mxu0 %v2737
    %3365 = vmatprep.subr.bf16.mxu0 0
    %3366 = vmatpush1.bf16.msra.mxu0 %v2738
    %3367 = vmatprep.mubr.bf16.mxu0 %v2060
    %3368 = vmatmul.mubr.bf16.gmra.mrb[0].mxu0 %v2059
    %v3369 = vpop.f32.mrb[0].mxu0
    %v3370 = vadd.f32 %v3257, %v3369
    %v3371 = vpop.f32.mrb[0].mxu0
    %v3372 = vpop.f32.mrb[0].mxu0
    %v3373 = vadd.f32 %v3260, %v3372
    %v3374 = vpop.f32.mrb[0].mxu0
    %3375 = vmatprep.mubr.bf16.mxu0 %v2072
    %3376 = vmatmul.mubr.bf16.gmra.mrb[0].mxu0 %v2071
    %v3377 = vpop.f32.mrb[0].mxu0
    %v3378 = vadd.f32 %v3265, %v3377
    %v3379 = vpop.f32.mrb[0].mxu0
    %v3380 = vpop.f32.mrb[0].mxu0
    %v3381 = vadd.f32 %v3268, %v3380
    %v3382 = vpop.f32.mrb[0].mxu0
    %3383 = vmatprep.mubr.bf16.mxu0 %v2084
    %3384 = vmatmul.mubr.bf16.gmra.mrb[0].mxu0 %v2083
    %v3385 = vpop.f32.mrb[0].mxu0
    %v3386 = vadd.f32 %v3273, %v3385
    %v3387 = vpop.f32.mrb[0].mxu0
    %v3388 = vpop.f32.mrb[0].mxu0
    %v3389 = vadd.f32 %v3276, %v3388
    %v3390 = vpop.f32.mrb[0].mxu0
    %3391 = vmatprep.mubr.bf16.mxu0 %v2096
    %3392 = vmatmul.mubr.bf16.gmra.mrb[0].mxu0 %v2095
    %v3393 = vpop.f32.mrb[0].mxu0
    %v3394 = vadd.f32 %v3281, %v3393
    %v3395 = vpop.f32.mrb[0].mxu0
    %v3396 = vpop.f32.mrb[0].mxu0
    %v3397 = vadd.f32 %v3284, %v3396
    %v3398 = vpop.f32.mrb[0].mxu0
    %3399 = vmatprep.mubr.bf16.mxu0 %v2108
    %3400 = vmatmul.mubr.bf16.gmra.mrb[0].mxu0 %v2107
    %v3401 = vpop.f32.mrb[0].mxu0
    %v3402 = vadd.f32 %v3289, %v3401
    %v3403 = vpop.f32.mrb[0].mxu0
    %v3404 = vpop.f32.mrb[0].mxu0
    %v3405 = vadd.f32 %v3292, %v3404
    %v3406 = vpop.f32.mrb[0].mxu0
    %3407 = vmatprep.mubr.bf16.mxu0 %v2120
    %3408 = vmatmul.mubr.bf16.gmra.mrb[0].mxu0 %v2119
    %v3409 = vpop.f32.mrb[0].mxu0
    %v3410 = vadd.f32 %v3297, %v3409
    %v3411 = vpop.f32.mrb[0].mxu0
    %v3412 = vpop.f32.mrb[0].mxu0
    %v3413 = vadd.f32 %v3300, %v3412
    %v3414 = vpop.f32.mrb[0].mxu0
    %3415 = vmatprep.mubr.bf16.mxu0 %v2132
    %3416 = vmatmul.mubr.bf16.gmra.mrb[0].mxu0 %v2131
    %v3417 = vpop.f32.mrb[0].mxu0
    %v3418 = vadd.f32 %v3305, %v3417
    %v3419 = vpop.f32.mrb[0].mxu0
    %v3420 = vpop.f32.mrb[0].mxu0
    %v3421 = vadd.f32 %v3308, %v3420
    %v3422 = vpop.f32.mrb[0].mxu0
    %3423 = vmatprep.mubr.bf16.mxu0 %v2144
    %3424 = vmatmul.mubr.bf16.gmra.mrb[0].mxu0 %v2143
    %v3425 = vpop.f32.mrb[0].mxu0
    %v3426 = vadd.f32 %v3313, %v3425
    %v3427 = vpop.f32.mrb[0].mxu0
    %v3428 = vpop.f32.mrb[0].mxu0
    %v3429 = vadd.f32 %v3316, %v3428
    %v3430 = vpop.f32.mrb[0].mxu0
    %3431 = vmatprep.mubr.bf16.mxu0 %v2156
    %3432 = vmatmul.mubr.bf16.gmra.mrb[0].mxu0 %v2155
    %v3433 = vpop.f32.mrb[0].mxu0
    %v3434 = vadd.f32 %v3321, %v3433
    %v3435 = vpop.f32.mrb[0].mxu0
    %v3436 = vpop.f32.mrb[0].mxu0
    %v3437 = vadd.f32 %v3324, %v3436
    %v3438 = vpop.f32.mrb[0].mxu0
    %3439 = vmatprep.mubr.bf16.mxu0 %v2168
    %3440 = vmatmul.mubr.bf16.gmra.mrb[0].mxu0 %v2167
    %v3441 = vpop.f32.mrb[0].mxu0
    %v3442 = vadd.f32 %v3329, %v3441
    %v3443 = vpop.f32.mrb[0].mxu0
    %v3444 = vpop.f32.mrb[0].mxu0
    %v3445 = vadd.f32 %v3332, %v3444
    %v3446 = vpop.f32.mrb[0].mxu0
    %3447 = vdwg.mxu0
    %3448 = vmatprep.subr.bf16.mxu0 0
    %3449 = vmatpush1.bf16.msra.mxu0 %v2739
    %3450 = vmatprep.subr.bf16.mxu0 0
    %3451 = vmatpush1.bf16.msra.mxu0 %v2740
    %3452 = vmatprep.subr.bf16.mxu0 0
    %3453 = vmatpush1.bf16.msra.mxu0 %v2741
    %3454 = vmatprep.subr.bf16.mxu0 0
    %3455 = vmatpush1.bf16.msra.mxu0 %v2742
    %3456 = vmatprep.subr.bf16.mxu0 0
    %3457 = vmatpush1.bf16.msra.mxu0 %v2743
    %3458 = vmatprep.subr.bf16.mxu0 0
    %3459 = vmatpush1.bf16.msra.mxu0 %v2744
    %3460 = vmatprep.subr.bf16.mxu0 0
    %3461 = vmatpush1.bf16.msra.mxu0 %v2745
    %3462 = vmatprep.subr.bf16.mxu0 0
    %3463 = vmatpush1.bf16.msra.mxu0 %v2746
    %3464 = vmatprep.subr.bf16.mxu0 0
    %3465 = vmatpush1.bf16.msra.mxu0 %v2747
    %3466 = vmatprep.subr.bf16.mxu0 0
    %3467 = vmatpush1.bf16.msra.mxu0 %v2748
    %3468 = vmatprep.subr.bf16.mxu0 0
    %3469 = vmatpush1.bf16.msra.mxu0 %v2749
    %3470 = vmatprep.subr.bf16.mxu0 0
    %3471 = vmatpush1.bf16.msra.mxu0 %v2750
    %3472 = vmatprep.subr.bf16.mxu0 0
    %3473 = vmatpush1.bf16.msra.mxu0 %v2751
    %3474 = vmatprep.subr.bf16.mxu0 0
    %3475 = vmatpush1.bf16.msra.mxu0 %v2752
    %3476 = vmatprep.subr.bf16.mxu0 0
    %3477 = vmatpush1.bf16.msra.mxu0 %v2881
    %3478 = vmatprep.subr.bf16.mxu0 0
    %3479 = vmatpush1.bf16.msra.mxu0 0
    %3480 = vmatprep.mubr.bf16.mxu0 %v2850
    %3481 = vmatmul.mubr.bf16.gmra.mrb[0].mxu0 %v2061
    %v3482 = vpop.f32.mrb[0].mxu0
    %v3483 = vadd.f32 %v3370, %v3482
    %v3484 = vpop.f32.mrb[0].mxu0
    %v3485 = vpop.f32.mrb[0].mxu0
    %v3486 = vadd.f32 %v3373, %v3485
    %v3487 = vpop.f32.mrb[0].mxu0
    %3488 = vmatprep.mubr.bf16.mxu0 %v2853
    %3489 = vmatmul.mubr.bf16.gmra.mrb[0].mxu0 %v2073
    %v3490 = vpop.f32.mrb[0].mxu0
    %v3491 = vadd.f32 %v3378, %v3490
    %v3492 = vpop.f32.mrb[0].mxu0
    %v3493 = vpop.f32.mrb[0].mxu0
    %v3494 = vadd.f32 %v3381, %v3493
    %v3495 = vpop.f32.mrb[0].mxu0
    %3496 = vmatprep.mubr.bf16.mxu0 %v2856
    %3497 = vmatmul.mubr.bf16.gmra.mrb[0].mxu0 %v2085
    %v3498 = vpop.f32.mrb[0].mxu0
    %v3499 = vadd.f32 %v3386, %v3498
    %v3500 = vpop.f32.mrb[0].mxu0
    %v3501 = vpop.f32.mrb[0].mxu0
    %v3502 = vadd.f32 %v3389, %v3501
    %v3503 = vpop.f32.mrb[0].mxu0
    %3504 = vmatprep.mubr.bf16.mxu0 %v2859
    %3505 = vmatmul.mubr.bf16.gmra.mrb[0].mxu0 %v2097
    %v3506 = vpop.f32.mrb[0].mxu0
    %v3507 = vadd.f32 %v3394, %v3506
    %v3508 = vpop.f32.mrb[0].mxu0
    %v3509 = vpop.f32.mrb[0].mxu0
    %v3510 = vadd.f32 %v3397, %v3509
    %v3511 = vpop.f32.mrb[0].mxu0
    %3512 = vmatprep.mubr.bf16.mxu0 %v2862
    %3513 = vmatmul.mubr.bf16.gmra.mrb[0].mxu0 %v2109
    %v3514 = vpop.f32.mrb[0].mxu0
    %v3515 = vadd.f32 %v3402, %v3514
    %v3516 = vpop.f32.mrb[0].mxu0
    %v3517 = vpop.f32.mrb[0].mxu0
    %v3518 = vadd.f32 %v3405, %v3517
    %v3519 = vpop.f32.mrb[0].mxu0
    %3520 = vmatprep.mubr.bf16.mxu0 %v2865
    %3521 = vmatmul.mubr.bf16.gmra.mrb[0].mxu0 %v2121
    %v3522 = vpop.f32.mrb[0].mxu0
    %v3523 = vadd.f32 %v3410, %v3522
    %v3524 = vpop.f32.mrb[0].mxu0
    %v3525 = vpop.f32.mrb[0].mxu0
    %v3526 = vadd.f32 %v3413, %v3525
    %v3527 = vpop.f32.mrb[0].mxu0
    %3528 = vmatprep.mubr.bf16.mxu0 %v2868
    %3529 = vmatmul.mubr.bf16.gmra.mrb[0].mxu0 %v2133
    %v3530 = vpop.f32.mrb[0].mxu0
    %v3531 = vadd.f32 %v3418, %v3530
    %v3532 = vpop.f32.mrb[0].mxu0
    %v3533 = vpop.f32.mrb[0].mxu0
    %v3534 = vadd.f32 %v3421, %v3533
    %v3535 = vpop.f32.mrb[0].mxu0
    %3536 = vmatprep.mubr.bf16.mxu0 %v2871
    %3537 = vmatmul.mubr.bf16.gmra.mrb[0].mxu0 %v2145
    %v3538 = vpop.f32.mrb[0].mxu0
    %v3539 = vadd.f32 %v3426, %v3538
    %v3540 = vpop.f32.mrb[0].mxu0
    %v3541 = vpop.f32.mrb[0].mxu0
    %v3542 = vadd.f32 %v3429, %v3541
    %v3543 = vpop.f32.mrb[0].mxu0
    %3544 = vmatprep.mubr.bf16.mxu0 %v2874
    %3545 = vmatmul.mubr.bf16.gmra.mrb[0].mxu0 %v2157
    %v3546 = vpop.f32.mrb[0].mxu0
    %v3547 = vadd.f32 %v3434, %v3546
    %v3548 = vpop.f32.mrb[0].mxu0
    %v3549 = vpop.f32.mrb[0].mxu0
    %v3550 = vadd.f32 %v3437, %v3549
    %v3551 = vpop.f32.mrb[0].mxu0
    %3552 = vmatprep.mubr.bf16.mxu0 %v2877
    %3553 = vmatmul.mubr.bf16.gmra.mrb[0].mxu0 %v2169
    %v3554 = vpop.f32.mrb[0].mxu0
    %v3555 = vadd.f32 %v3442, %v3554
    %v3556 = vpop.f32.mrb[0].mxu0
    %v3557 = vpop.f32.mrb[0].mxu0
    %v3558 = vadd.f32 %v3445, %v3557
    %v3559 = vpop.f32.mrb[0].mxu0
    %3560 = vdwg.mxu0
    %v3561 = vmax.f32 %v3483, 0.0
    %v3562 = vmax.f32 %v3486, 0.0
    %v3563 = vmax.f32 %v3491, 0.0
    %v3564 = vmax.f32 %v3494, 0.0
    %v3565 = vmax.f32 %v3499, 0.0
    %v3566 = vmax.f32 %v3502, 0.0
    %v3567 = vmax.f32 %v3507, 0.0
    %v3568 = vmax.f32 %v3510, 0.0
    %v3569 = vmax.f32 %v3515, 0.0
    %v3570 = vmax.f32 %v3518, 0.0
    %v3571 = vmax.f32 %v3523, 0.0
    %v3572 = vmax.f32 %v3526, 0.0
    %v3573 = vmax.f32 %v3531, 0.0
    %v3574 = vmax.f32 %v3534, 0.0
    %v3575 = vmax.f32 %v3539, 0.0
    %v3576 = vmax.f32 %v3542, 0.0
    %v3577 = vmax.f32 %v3547, 0.0
    %v3578 = vmax.f32 %v3550, 0.0
    %v3579 = vmax.f32 %v3555, 0.0
    %v3580 = vmax.f32 %v3558, 0.0
    %s3581 = smul.u32 %s1252, 160
    %s3582 = scalar_lea.vmem [#allocation4], %s3581
    %3583 = vst [vmem:[%s3582] sm:$0xff] %v3561
    %3584 = vst [vmem:[%s3582 + $0x8] sm:$0xff] %v3562
    %3585 = vst [vmem:[%s3582 + $0x10] sm:$0xff] %v3563
    %3586 = vst [vmem:[%s3582 + $0x18] sm:$0xff] %v3564
    %3587 = vst [vmem:[%s3582 + $0x20] sm:$0xff] %v3565
    %3588 = vst [vmem:[%s3582 + $0x28] sm:$0xff] %v3566
    %3589 = vst [vmem:[%s3582 + $0x30] sm:$0xff] %v3567
    %3590 = vst [vmem:[%s3582 + $0x38] sm:$0xff] %v3568
    %3591 = vst [vmem:[%s3582 + $0x40] sm:$0xff] %v3569
    %3592 = vst [vmem:[%s3582 + $0x48] sm:$0xff] %v3570
    %3593 = vst [vmem:[%s3582 + $0x50] sm:$0xff] %v3571
    %3594 = vst [vmem:[%s3582 + $0x58] sm:$0xff] %v3572
    %3595 = vst [vmem:[%s3582 + $0x60] sm:$0xff] %v3573
    %3596 = vst [vmem:[%s3582 + $0x68] sm:$0xff] %v3574
    %3597 = vst [vmem:[%s3582 + $0x70] sm:$0xff] %v3575
    %3598 = vst [vmem:[%s3582 + $0x78] sm:$0xff] %v3576
    %3599 = vst [vmem:[%s3582 + $0x80] sm:$0xff] %v3577
    %3600 = vst [vmem:[%s3582 + $0x88] sm:$0xff] %v3578
    %3601 = vst [vmem:[%s3582 + $0x90] sm:$0xff] %v3579
    %3602 = vst [vmem:[%s3582 + $0x98] sm:$0xff] %v3580
  $region64: #{model_forward.1} parent=0 // loop_footer
    %s1256 = sadd.s32 1, %s1252
  $region65: #{model_forward.1} parent=0 // loop_footer_branch
    %1251 = sbr.rel target = $region61
  $region66: #{model_forward.1} parent=0 // loop_exit
    _
  %3603 = vst [vmem:[#allocation4 + $0x640] sm:$0xff] 0.0
  loop: start=0, step=1, limit=9
  $region67: #{model_forward.1} parent=0 // loop_pre_header
    _
  $region68: #{model_forward.1} parent=0 // loop_header
    %s3605 = sphi 0, %s3609
    %p3606 = scmp.ge.s32.totalorder %s3605, 9
  $region69: #{model_forward.1} parent=0 // loop_header_branch
    %3608 = sbr.rel (%p3606) target = $region73
  $region70: #{model_forward.1} parent=0 // loop_body
    %s3610 = smul.u32 %s3605, 160
    %s3611 = scalar_lea.vmem [#allocation4], %s3610
    %v3612 = vld [vmem:[%s3611] sm:$0xff]
    %v3613 = vld [vmem:[%s3611 + $0x8] sm:$0xff]
    %v3614 = vld [vmem:[%s3611 + $0x10] sm:$0xff]
    %v3615 = vld [vmem:[%s3611 + $0x18] sm:$0xff]
    %v3616 = vld [vmem:[%s3611 + $0x20] sm:$0xff]
    %v3617 = vld [vmem:[%s3611 + $0x28] sm:$0xff]
    %v3618 = vld [vmem:[%s3611 + $0x30] sm:$0xff]
    %v3619 = vld [vmem:[%s3611 + $0x38] sm:$0xff]
    %v3620 = vld [vmem:[%s3611 + $0x40] sm:$0xff]
    %v3621 = vld [vmem:[%s3611 + $0x48] sm:$0xff]
    %v3622 = vld [vmem:[%s3611 + $0x50] sm:$0xff]
    %v3623 = vld [vmem:[%s3611 + $0x58] sm:$0xff]
    %v3624 = vld [vmem:[%s3611 + $0x60] sm:$0xff]
    %v3625 = vld [vmem:[%s3611 + $0x68] sm:$0xff]
    %v3626 = vld [vmem:[%s3611 + $0x70] sm:$0xff]
    %v3627 = vld [vmem:[%s3611 + $0x78] sm:$0xff]
    %v3628 = vld [vmem:[%s3611 + $0x80] sm:$0xff]
    %v3629 = vld [vmem:[%s3611 + $0x88] sm:$0xff]
    %v3630 = vld [vmem:[%s3611 + $0x90] sm:$0xff]
    %v3631 = vld [vmem:[%s3611 + $0x98] sm:$0xff]
    %s3632 = sadd.s32 %s3610, 1
    %s3633 = scalar_lea.vmem [#allocation4], %s3632
    %v3634 = vld [vmem:[%s3633] sm:$0xff]
    %v3635 = vld [vmem:[%s3633 + $0x8] sm:$0xff]
    %v3636 = vld [vmem:[%s3633 + $0x10] sm:$0xff]
    %v3637 = vld [vmem:[%s3633 + $0x18] sm:$0xff]
    %v3638 = vld [vmem:[%s3633 + $0x20] sm:$0xff]
    %v3639 = vld [vmem:[%s3633 + $0x28] sm:$0xff]
    %v3640 = vld [vmem:[%s3633 + $0x30] sm:$0xff]
    %v3641 = vld [vmem:[%s3633 + $0x38] sm:$0xff]
    %v3642 = vld [vmem:[%s3633 + $0x40] sm:$0xff]
    %v3643 = vld [vmem:[%s3633 + $0x48] sm:$0xff]
    %v3644 = vld [vmem:[%s3633 + $0x50] sm:$0xff]
    %v3645 = vld [vmem:[%s3633 + $0x58] sm:$0xff]
    %v3646 = vld [vmem:[%s3633 + $0x60] sm:$0xff]
    %v3647 = vld [vmem:[%s3633 + $0x68] sm:$0xff]
    %v3648 = vld [vmem:[%s3633 + $0x70] sm:$0xff]
    %v3649 = vld [vmem:[%s3633 + $0x78] sm:$0xff]
    %v3650 = vld [vmem:[%s3633 + $0x80] sm:$0xff]
    %v3651 = vld [vmem:[%s3633 + $0x88] sm:$0xff]
    %v3652 = vld [vmem:[%s3633 + $0x90] sm:$0xff]
    %v3653 = vld [vmem:[%s3633 + $0x98] sm:$0xff]
    %v3654 = vmax.f32 %v3612, %v3634
    %v3655 = vmax.f32 %v3613, %v3635
    %v3656 = vmax.f32 %v3614, %v3636
    %v3657 = vmax.f32 %v3615, %v3637
    %v3658 = vmax.f32 %v3616, %v3638
    %v3659 = vmax.f32 %v3617, %v3639
    %v3660 = vmax.f32 %v3618, %v3640
    %v3661 = vmax.f32 %v3619, %v3641
    %v3662 = vmax.f32 %v3620, %v3642
    %v3663 = vmax.f32 %v3621, %v3643
    %v3664 = vmax.f32 %v3622, %v3644
    %v3665 = vmax.f32 %v3623, %v3645
    %v3666 = vmax.f32 %v3624, %v3646
    %v3667 = vmax.f32 %v3625, %v3647
    %v3668 = vmax.f32 %v3626, %v3648
    %v3669 = vmax.f32 %v3627, %v3649
    %v3670 = vmax.f32 %v3628, %v3650
    %v3671 = vmax.f32 %v3629, %v3651
    %v3672 = vmax.f32 %v3630, %v3652
    %v3673 = vmax.f32 %v3631, %v3653
    %s3674 = sadd.s32 %s3610, 160
    %s3675 = scalar_lea.vmem [#allocation4], %s3674
    %v3676 = vld [vmem:[%s3675] sm:$0xff]
    %v3677 = vld [vmem:[%s3675 + $0x8] sm:$0xff]
    %v3678 = vld [vmem:[%s3675 + $0x10] sm:$0xff]
    %v3679 = vld [vmem:[%s3675 + $0x18] sm:$0xff]
    %v3680 = vld [vmem:[%s3675 + $0x20] sm:$0xff]
    %v3681 = vld [vmem:[%s3675 + $0x28] sm:$0xff]
    %v3682 = vld [vmem:[%s3675 + $0x30] sm:$0xff]
    %v3683 = vld [vmem:[%s3675 + $0x38] sm:$0xff]
    %v3684 = vld [vmem:[%s3675 + $0x40] sm:$0xff]
    %v3685 = vld [vmem:[%s3675 + $0x48] sm:$0xff]
    %v3686 = vld [vmem:[%s3675 + $0x50] sm:$0xff]
    %v3687 = vld [vmem:[%s3675 + $0x58] sm:$0xff]
    %v3688 = vld [vmem:[%s3675 + $0x60] sm:$0xff]
    %v3689 = vld [vmem:[%s3675 + $0x68] sm:$0xff]
    %v3690 = vld [vmem:[%s3675 + $0x70] sm:$0xff]
    %v3691 = vld [vmem:[%s3675 + $0x78] sm:$0xff]
    %v3692 = vld [vmem:[%s3675 + $0x80] sm:$0xff]
    %v3693 = vld [vmem:[%s3675 + $0x88] sm:$0xff]
    %v3694 = vld [vmem:[%s3675 + $0x90] sm:$0xff]
    %v3695 = vld [vmem:[%s3675 + $0x98] sm:$0xff]
    %v3696 = vmax.f32 %v3654, %v3676
    %v3697 = vmax.f32 %v3655, %v3677
    %v3698 = vmax.f32 %v3656, %v3678
    %v3699 = vmax.f32 %v3657, %v3679
    %v3700 = vmax.f32 %v3658, %v3680
    %v3701 = vmax.f32 %v3659, %v3681
    %v3702 = vmax.f32 %v3660, %v3682
    %v3703 = vmax.f32 %v3661, %v3683
    %v3704 = vmax.f32 %v3662, %v3684
    %v3705 = vmax.f32 %v3663, %v3685
    %v3706 = vmax.f32 %v3664, %v3686
    %v3707 = vmax.f32 %v3665, %v3687
    %v3708 = vmax.f32 %v3666, %v3688
    %v3709 = vmax.f32 %v3667, %v3689
    %v3710 = vmax.f32 %v3668, %v3690
    %v3711 = vmax.f32 %v3669, %v3691
    %v3712 = vmax.f32 %v3670, %v3692
    %v3713 = vmax.f32 %v3671, %v3693
    %v3714 = vmax.f32 %v3672, %v3694
    %v3715 = vmax.f32 %v3673, %v3695
    %s3716 = sadd.s32 %s3610, 161
    %s3717 = scalar_lea.vmem [#allocation4], %s3716
    %v3718 = vld [vmem:[%s3717] sm:$0xff]
    %v3719 = vld [vmem:[%s3717 + $0x8] sm:$0xff]
    %v3720 = vld [vmem:[%s3717 + $0x10] sm:$0xff]
    %v3721 = vld [vmem:[%s3717 + $0x18] sm:$0xff]
    %v3722 = vld [vmem:[%s3717 + $0x20] sm:$0xff]
    %v3723 = vld [vmem:[%s3717 + $0x28] sm:$0xff]
    %v3724 = vld [vmem:[%s3717 + $0x30] sm:$0xff]
    %v3725 = vld [vmem:[%s3717 + $0x38] sm:$0xff]
    %v3726 = vld [vmem:[%s3717 + $0x40] sm:$0xff]
    %v3727 = vld [vmem:[%s3717 + $0x48] sm:$0xff]
    %v3728 = vld [vmem:[%s3717 + $0x50] sm:$0xff]
    %v3729 = vld [vmem:[%s3717 + $0x58] sm:$0xff]
    %v3730 = vld [vmem:[%s3717 + $0x60] sm:$0xff]
    %v3731 = vld [vmem:[%s3717 + $0x68] sm:$0xff]
    %v3732 = vld [vmem:[%s3717 + $0x70] sm:$0xff]
    %v3733 = vld [vmem:[%s3717 + $0x78] sm:$0xff]
    %v3734 = vld [vmem:[%s3717 + $0x80] sm:$0xff]
    %v3735 = vld [vmem:[%s3717 + $0x88] sm:$0xff]
    %v3736 = vld [vmem:[%s3717 + $0x90] sm:$0xff]
    %v3737 = vld [vmem:[%s3717 + $0x98] sm:$0xff]
    %v3738 = vmax.f32 %v3696, %v3718
    %v3739 = vmax.f32 %v3697, %v3719
    %v3740 = vmax.f32 %v3698, %v3720
    %v3741 = vmax.f32 %v3699, %v3721
    %v3742 = vmax.f32 %v3700, %v3722
    %v3743 = vmax.f32 %v3701, %v3723
    %v3744 = vmax.f32 %v3702, %v3724
    %v3745 = vmax.f32 %v3703, %v3725
    %v3746 = vmax.f32 %v3704, %v3726
    %v3747 = vmax.f32 %v3705, %v3727
    %v3748 = vmax.f32 %v3706, %v3728
    %v3749 = vmax.f32 %v3707, %v3729
    %v3750 = vmax.f32 %v3708, %v3730
    %v3751 = vmax.f32 %v3709, %v3731
    %v3752 = vmax.f32 %v3710, %v3732
    %v3753 = vmax.f32 %v3711, %v3733
    %v3754 = vmax.f32 %v3712, %v3734
    %v3755 = vmax.f32 %v3713, %v3735
    %v3756 = vmax.f32 %v3714, %v3736
    %v3757 = vmax.f32 %v3715, %v3737
    %v3758 = vpack.c.bf16 %v3739, %v3738
    %v3759 = vpack.c.bf16 %v3741, %v3740
    %v3760 = vpack.c.bf16 %v3743, %v3742
    %v3761 = vpack.c.bf16 %v3745, %v3744
    %v3762 = vpack.c.bf16 %v3747, %v3746
    %v3763 = vpack.c.bf16 %v3749, %v3748
    %v3764 = vpack.c.bf16 %v3751, %v3750
    %v3765 = vpack.c.bf16 %v3753, %v3752
    %v3766 = vpack.c.bf16 %v3755, %v3754
    %v3767 = vpack.c.bf16 %v3757, %v3756
    %s3768 = sshra.s32 %s3610, 4
    %s3769 = sand.u32 %s3610, 15
    %s3770 = smul.addr %s3768, 8
    %s3771 = scalar_lea.vmem [#allocation5], %s3770
    %3772 = vst [vmem:[%s3771] sm:$0xff] %v3758
    %3773 = vst [vmem:[%s3771 + $0x8] sm:$0xff] %v3759
    %3774 = vst [vmem:[%s3771 + $0x10] sm:$0xff] %v3760
    %3775 = vst [vmem:[%s3771 + $0x18] sm:$0xff] %v3761
    %3776 = vst [vmem:[%s3771 + $0x20] sm:$0xff] %v3762
    %3777 = vst [vmem:[%s3771 + $0x28] sm:$0xff] %v3763
    %3778 = vst [vmem:[%s3771 + $0x30] sm:$0xff] %v3764
    %3779 = vst [vmem:[%s3771 + $0x38] sm:$0xff] %v3765
    %3780 = vst [vmem:[%s3771 + $0x40] sm:$0xff] %v3766
    %3781 = vst [vmem:[%s3771 + $0x48] sm:$0xff] %v3767
  $region71: #{model_forward.1} parent=0 // loop_footer
    %s3609 = sadd.s32 1, %s3605
  $region72: #{model_forward.1} parent=0 // loop_footer_branch
    %3604 = sbr.rel target = $region68
  $region73: #{model_forward.1} parent=0 // loop_exit
    _
  %v3782 = vld [vmem:[%s5] sm:$0xff]
  %v3783 = vld [vmem:[%s5 + $0x8] sm:$0xff]
  %v3784 = vld [vmem:[%s5 + $0x10] sm:$0xff]
  %v3785 = vld [vmem:[%s5 + $0x18] sm:$0xff]
  %v3786 = vld [vmem:[%s5 + $0x20] sm:$0xff]
  %v3787 = vld [vmem:[%s5 + $0x28] sm:$0xff]
  %v3788 = vld [vmem:[%s5 + $0x30] sm:$0xff]
  %v3789 = vld [vmem:[%s5 + $0x38] sm:$0xff]
  %v3790 = vld [vmem:[%s5 + $0x40] sm:$0xff]
  %v3791 = vld [vmem:[%s5 + $0x48] sm:$0xff]
  %v3792 = vld [vmem:[%s5 + $0x50] sm:$0xff]
  %v3793 = vld [vmem:[%s5 + $0x58] sm:$0xff]
  %v3794 = vld [vmem:[%s5 + $0x60] sm:$0xff]
  %v3795 = vld [vmem:[%s5 + $0x68] sm:$0xff]
  %v3796 = vld [vmem:[%s5 + $0x70] sm:$0xff]
  %v3797 = vld [vmem:[%s5 + $0x78] sm:$0xff]
  %v3798 = vld [vmem:[%s5 + $0x80] sm:$0xff]
  %v3799 = vld [vmem:[%s5 + $0x88] sm:$0xff]
  %v3800 = vld [vmem:[%s5 + $0x90] sm:$0xff]
  %v3801 = vld [vmem:[%s5 + $0x98] sm:$0xff]
  %v3802 = vld [vmem:[%s5 + $0xa0] sm:$0xff]
  %v3803 = vld [vmem:[%s5 + $0xa8] sm:$0xff]
  %v3804 = vld [vmem:[%s5 + $0xb0] sm:$0xff]
  %v3805 = vld [vmem:[%s5 + $0xb8] sm:$0xff]
  %v3806 = vld [vmem:[%s5 + $0xc0] sm:$0xff]
  %v3807 = vld [vmem:[%s5 + $0xc8] sm:$0xff]
  %v3808 = vld [vmem:[%s5 + $0xd0] sm:$0xff]
  %v3809 = vld [vmem:[%s5 + $0xd8] sm:$0xff]
  %v3810 = vld [vmem:[%s5 + $0xe0] sm:$0xff]
  %v3811 = vld [vmem:[%s5 + $0xe8] sm:$0xff]
  %v3812 = vld [vmem:[%s5 + $0xf0] sm:$0xff]
  %v3813 = vld [vmem:[%s5 + $0xf8] sm:$0xff]
  %v3814 = vld [vmem:[%s5 + $0x100] sm:$0xff]
  %v3815 = vld [vmem:[%s5 + $0x108] sm:$0xff]
  %v3816 = vld [vmem:[%s5 + $0x110] sm:$0xff]
  %v3817 = vld [vmem:[%s5 + $0x118] sm:$0xff]
  %v3818 = vld [vmem:[%s5 + $0x120] sm:$0xff]
  %v3819 = vld [vmem:[%s5 + $0x128] sm:$0xff]
  %v3820 = vld [vmem:[%s5 + $0x130] sm:$0xff]
  %v3821 = vld [vmem:[%s5 + $0x138] sm:$0xff]
  %v3822 = vld [vmem:[%s5 + $0x140] sm:$0xff]
  %v3823 = vld [vmem:[%s5 + $0x148] sm:$0xff]
  %v3824 = vld [vmem:[%s5 + $0x150] sm:$0xff]
  %v3825 = vld [vmem:[%s5 + $0x158] sm:$0xff]
  %v3826 = vld [vmem:[%s5 + $0x160] sm:$0xff]
  %v3827 = vld [vmem:[%s5 + $0x168] sm:$0xff]
  %v3828 = vld [vmem:[%s5 + $0x170] sm:$0xff]
  %v3829 = vld [vmem:[%s5 + $0x178] sm:$0xff]
  %v3830 = vld [vmem:[%s5 + $0x180] sm:$0xff]
  %v3831 = vld [vmem:[%s5 + $0x188] sm:$0xff]
  %v3832 = vld [vmem:[%s5 + $0x190] sm:$0xff]
  %v3833 = vld [vmem:[%s5 + $0x198] sm:$0xff]
  %v3834 = vld [vmem:[%s5 + $0x1a0] sm:$0xff]
  %v3835 = vld [vmem:[%s5 + $0x1a8] sm:$0xff]
  %v3836 = vld [vmem:[%s5 + $0x1b0] sm:$0xff]
  %v3837 = vld [vmem:[%s5 + $0x1b8] sm:$0xff]
  %v3838 = vld [vmem:[%s5 + $0x1c0] sm:$0xff]
  %v3839 = vld [vmem:[%s5 + $0x1c8] sm:$0xff]
  %v3840 = vld [vmem:[%s5 + $0x1d0] sm:$0xff]
  %v3841 = vld [vmem:[%s5 + $0x1d8] sm:$0xff]
  %v3842 = vld [vmem:[%s5 + $0x1e0] sm:$0xff]
  %v3843 = vld [vmem:[%s5 + $0x1e8] sm:$0xff]
  %v3844 = vld [vmem:[%s5 + $0x1f0] sm:$0xff]
  %v3845 = vld [vmem:[%s5 + $0x1f8] sm:$0xff]
  %v3846 = vld [vmem:[%s5 + $0x200] sm:$0xff]
  %v3847 = vld [vmem:[%s5 + $0x208] sm:$0xff]
  %v3848 = vld [vmem:[%s5 + $0x210] sm:$0xff]
  %v3849 = vld [vmem:[%s5 + $0x218] sm:$0xff]
  %v3850 = vld [vmem:[%s5 + $0x220] sm:$0xff]
  %v3851 = vld [vmem:[%s5 + $0x228] sm:$0xff]
  %v3852 = vld [vmem:[%s5 + $0x230] sm:$0xff]
  %v3853 = vld [vmem:[%s5 + $0x238] sm:$0xff]
  %v3854 = vld [vmem:[%s5 + $0x240] sm:$0xff]
  %v3855 = vld [vmem:[%s5 + $0x248] sm:$0xff]
  %v3856 = vld [vmem:[%s5 + $0x250] sm:$0xff]
  %v3857 = vld [vmem:[%s5 + $0x258] sm:$0xff]
  %v3858 = vld [vmem:[%s5 + $0x260] sm:$0xff]
  %v3859 = vld [vmem:[%s5 + $0x268] sm:$0xff]
  %v3860 = vld [vmem:[%s5 + $0x270] sm:$0xff]
  %v3861 = vld [vmem:[%s5 + $0x278] sm:$0xff]
  %v3862 = vld [vmem:[%s5 + $0x280] sm:$0xff]
  %v3863 = vld [vmem:[%s5 + $0x288] sm:$0xff]
  %v3864 = vld [vmem:[%s5 + $0x290] sm:$0xff]
  %v3865 = vld [vmem:[%s5 + $0x298] sm:$0xff]
  %v3866 = vld [vmem:[%s5 + $0x2a0] sm:$0xff]
  %v3867 = vld [vmem:[%s5 + $0x2a8] sm:$0xff]
  %v3868 = vld [vmem:[%s5 + $0x2b0] sm:$0xff]
  %v3869 = vld [vmem:[%s5 + $0x2b8] sm:$0xff]
  %v3870 = vld [vmem:[%s5 + $0x2c0] sm:$0xff]
  %v3871 = vld [vmem:[%s5 + $0x2c8] sm:$0xff]
  %v3872 = vld [vmem:[#allocation5] sm:$0xff]
  %v3873 = vld [vmem:[#allocation5 + $0x8] sm:$0xff]
  %v3874 = vld [vmem:[#allocation5 + $0x10] sm:$0xff]
  %v3875 = vld [vmem:[#allocation5 + $0x18] sm:$0xff]
  %v3876 = vld [vmem:[#allocation5 + $0x20] sm:$0xff]
  %v3877 = vld [vmem:[#allocation5 + $0x28] sm:$0xff]
  %v3878 = vld [vmem:[#allocation5 + $0x30] sm:$0xff]
  %v3879 = vld [vmem:[#allocation5 + $0x38] sm:$0xff]
  %v3880 = vld [vmem:[#allocation5 + $0x40] sm:$0xff]
  %v3881 = vld [vmem:[#allocation5 + $0x48] sm:$0xff]
  %v3882 = vld [vmem:[#allocation5 + $0x50] sm:$0xff]
  %v3883 = vld [vmem:[#allocation5 + $0x58] sm:$0xff]
  %v3884 = vld [vmem:[#allocation5 + $0x60] sm:$0xff]
  %v3885 = vld [vmem:[#allocation5 + $0x68] sm:$0xff]
  %v3886 = vld [vmem:[#allocation5 + $0x70] sm:$0xff]
  %v3887 = vld [vmem:[#allocation5 + $0x78] sm:$0xff]
  %v3888 = vld [vmem:[#allocation5 + $0x80] sm:$0xff]
  %v3889 = vld [vmem:[#allocation5 + $0x88] sm:$0xff]
  %v3890 = vld [vmem:[#allocation5 + $0x90] sm:$0xff]
  %v3891 = vld [vmem:[#allocation5 + $0x98] sm:$0xff]
  %v3892 = vld [vmem:[#allocation5 + $0xa0] sm:$0xff]
  %v3893 = vld [vmem:[#allocation5 + $0xa8] sm:$0xff]
  %v3894 = vld [vmem:[#allocation5 + $0xb0] sm:$0xff]
  %v3895 = vld [vmem:[#allocation5 + $0xb8] sm:$0xff]
  %v3896 = vld [vmem:[#allocation5 + $0xc0] sm:$0xff]
  %v3897 = vld [vmem:[#allocation5 + $0xc8] sm:$0xff]
  %v3898 = vld [vmem:[#allocation5 + $0xd0] sm:$0xff]
  %v3899 = vld [vmem:[#allocation5 + $0xd8] sm:$0xff]
  %v3900 = vld [vmem:[#allocation5 + $0xe0] sm:$0xff]
  %v3901 = vld [vmem:[#allocation5 + $0xe8] sm:$0xff]
  %v3902 = vld [vmem:[#allocation5 + $0xf0] sm:$0xff]
  %v3903 = vld [vmem:[#allocation5 + $0xf8] sm:$0xff]
  %v3904 = vld [vmem:[#allocation5 + $0x100] sm:$0xff]
  %v3905 = vld [vmem:[#allocation5 + $0x108] sm:$0xff]
  %v3906 = vld [vmem:[#allocation5 + $0x110] sm:$0xff]
  %v3907 = vld [vmem:[#allocation5 + $0x118] sm:$0xff]
  %v3908 = vld [vmem:[#allocation5 + $0x120] sm:$0xff]
  %v3909 = vld [vmem:[#allocation5 + $0x128] sm:$0xff]
  %v3910 = vld [vmem:[#allocation5 + $0x130] sm:$0xff]
  %v3911 = vld [vmem:[#allocation5 + $0x138] sm:$0xff]
  %v3912 = vld [vmem:[#allocation5 + $0x140] sm:$0xff]
  %v3913 = vld [vmem:[#allocation5 + $0x148] sm:$0xff]
  %v3914 = vld [vmem:[#allocation5 + $0x150] sm:$0xff]
  %v3915 = vld [vmem:[#allocation5 + $0x158] sm:$0xff]
  %v3916 = vld [vmem:[#allocation5 + $0x160] sm:$0xff]
  %v3917 = vld [vmem:[#allocation5 + $0x168] sm:$0xff]
  %v3918 = vld [vmem:[#allocation5 + $0x170] sm:$0xff]
  %v3919 = vld [vmem:[#allocation5 + $0x178] sm:$0xff]
  %v3920 = vld [vmem:[#allocation5 + $0x180] sm:$0xff]
  %v3921 = vld [vmem:[#allocation5 + $0x188] sm:$0xff]
  %v3922 = vld [vmem:[#allocation5 + $0x190] sm:$0xff]
  %v3923 = vld [vmem:[#allocation5 + $0x198] sm:$0xff]
  %v3924 = vld [vmem:[#allocation5 + $0x1a0] sm:$0xff]
  %v3925 = vld [vmem:[#allocation5 + $0x1a8] sm:$0xff]
  %v3926 = vld [vmem:[#allocation5 + $0x1b0] sm:$0xff]
  %v3927 = vld [vmem:[#allocation5 + $0x1b8] sm:$0xff]
  %v3928 = vld [vmem:[#allocation5 + $0x1c0] sm:$0xff]
  %v3929 = vld [vmem:[#allocation5 + $0x1c8] sm:$0xff]
  %v3930 = vld [vmem:[#allocation5 + $0x1d0] sm:$0xff]
  %v3931 = vld [vmem:[#allocation5 + $0x1d8] sm:$0xff]
  %v3932 = vld [vmem:[#allocation5 + $0x1e0] sm:$0xff]
  %v3933 = vld [vmem:[#allocation5 + $0x1e8] sm:$0xff]
  %v3934 = vld [vmem:[#allocation5 + $0x1f0] sm:$0xff]
  %v3935 = vld [vmem:[#allocation5 + $0x1f8] sm:$0xff]
  %v3936 = vld [vmem:[#allocation5 + $0x200] sm:$0xff]
  %v3937 = vld [vmem:[#allocation5 + $0x208] sm:$0xff]
  %v3938 = vld [vmem:[#allocation5 + $0x210] sm:$0xff]
  %v3939 = vld [vmem:[#allocation5 + $0x218] sm:$0xff]
  %v3940 = vld [vmem:[#allocation5 + $0x220] sm:$0xff]
  %v3941 = vld [vmem:[#allocation5 + $0x228] sm:$0xff]
  %v3942 = vld [vmem:[#allocation5 + $0x230] sm:$0xff]
  %v3943 = vld [vmem:[#allocation5 + $0x238] sm:$0xff]
  %v3944 = vld [vmem:[#allocation5 + $0x240] sm:$0xff]
  %v3945 = vld [vmem:[#allocation5 + $0x248] sm:$0xff]
  %v3946 = vld [vmem:[#allocation5 + $0x250] sm:$0xff]
  %v3947 = vld [vmem:[#allocation5 + $0x258] sm:$0xff]
  %v3948 = vld [vmem:[#allocation5 + $0x260] sm:$0xff]
  %v3949 = vld [vmem:[#allocation5 + $0x268] sm:$0xff]
  %v3950 = vld [vmem:[#allocation5 + $0x270] sm:$0xff]
  %v3951 = vld [vmem:[#allocation5 + $0x278] sm:$0xff]
  %v3952 = vld [vmem:[#allocation5 + $0x280] sm:$0xff]
  %v3953 = vld [vmem:[#allocation5 + $0x288] sm:$0xff]
  %v3954 = vld [vmem:[#allocation5 + $0x290] sm:$0xff]
  %v3955 = vld [vmem:[#allocation5 + $0x298] sm:$0xff]
  %v3956 = vld [vmem:[#allocation5 + $0x2a0] sm:$0xff]
  %v3957 = vld [vmem:[#allocation5 + $0x2a8] sm:$0xff]
  %v3958 = vld [vmem:[#allocation5 + $0x2b0] sm:$0xff]
  %v3959 = vld [vmem:[#allocation5 + $0x2b8] sm:$0xff]
  %v3960 = vld [vmem:[#allocation5 + $0x2c0] sm:$0xff]
  %v3961 = vld [vmem:[#allocation5 + $0x2c8] sm:$0xff]
  %v3962 = vld [vmem:[%s6] sm:$0xff]
  %v3963 = vld [vmem:[%s6 + $0x8] sm:$0xff]
  %v3964 = vld [vmem:[%s6 + $0x10] sm:$0xff]
  %v3965 = vld [vmem:[%s6 + $0x18] sm:$0xff]
  %v3966 = vld [vmem:[%s6 + $0x20] sm:$0xff]
  %v3967 = vld [vmem:[%s6 + $0x28] sm:$0xff]
  %v3968 = vld [vmem:[%s6 + $0x30] sm:$0xff]
  %v3969 = vld [vmem:[%s6 + $0x38] sm:$0xff]
  %v3970 = vld [vmem:[%s6 + $0x40] sm:$0xff]
  %v3971 = vld [vmem:[%s6 + $0x48] sm:$0xff]
  %v3972 = vld [vmem:[%s6 + $0x50] sm:$0xff]
  %v3973 = vld [vmem:[%s6 + $0x58] sm:$0xff]
  %v3974 = vld [vmem:[%s6 + $0x60] sm:$0xff]
  %v3975 = vld [vmem:[%s6 + $0x68] sm:$0xff]
  %v3976 = vld [vmem:[%s6 + $0x70] sm:$0xff]
  %3978 = vset.pattern.permute.xlu0 0
  %3979 = vperm.xlu0 %3978, %v3962
  %v3980 = vpop.permute.xlu0 %3979
  %3983 = vset.pattern.permute.xlu0 0
  %3984 = vperm.xlu0 %3983, %v3963
  %v3985 = vpop.permute.xlu0 %3984
  %3988 = vset.pattern.permute.xlu0 0
  %3989 = vperm.xlu0 %3988, %v3964
  %v3990 = vpop.permute.xlu0 %3989
  %3993 = vset.pattern.permute.xlu0 0
  %3994 = vperm.xlu0 %3993, %v3965
  %v3995 = vpop.permute.xlu0 %3994
  %3998 = vset.pattern.permute.xlu0 0
  %3999 = vperm.xlu0 %3998, %v3966
  %v4000 = vpop.permute.xlu0 %3999
  %4003 = vset.pattern.permute.xlu0 0
  %4004 = vperm.xlu0 %4003, %v3967
  %v4005 = vpop.permute.xlu0 %4004
  %4008 = vset.pattern.permute.xlu0 0
  %4009 = vperm.xlu0 %4008, %v3968
  %v4010 = vpop.permute.xlu0 %4009
  %4013 = vset.pattern.permute.xlu0 0
  %4014 = vperm.xlu0 %4013, %v3969
  %v4015 = vpop.permute.xlu0 %4014
  %4018 = vset.pattern.permute.xlu0 0
  %4019 = vperm.xlu0 %4018, %v3970
  %v4020 = vpop.permute.xlu0 %4019
  %4023 = vset.pattern.permute.xlu0 0
  %4024 = vperm.xlu0 %4023, %v3971
  %v4025 = vpop.permute.xlu0 %4024
  %4028 = vset.pattern.permute.xlu0 0
  %4029 = vperm.xlu0 %4028, %v3972
  %v4030 = vpop.permute.xlu0 %4029
  %4033 = vset.pattern.permute.xlu0 0
  %4034 = vperm.xlu0 %4033, %v3973
  %v4035 = vpop.permute.xlu0 %4034
  %4038 = vset.pattern.permute.xlu0 0
  %4039 = vperm.xlu0 %4038, %v3974
  %v4040 = vpop.permute.xlu0 %4039
  %4043 = vset.pattern.permute.xlu0 0
  %4044 = vperm.xlu0 %4043, %v3975
  %v4045 = vpop.permute.xlu0 %4044
  %4048 = vset.pattern.permute.xlu0 0
  %4049 = vperm.xlu0 %4048, %v3976
  %v4050 = vpop.permute.xlu0 %4049
  %v4142 = vunpack.c.l.b16 %v3782
  %v4143 = vunpack.c.h.b16 %v3782
  %v4144 = vunpack.c.l.b16 %v3783
  %v4145 = vunpack.c.h.b16 %v3783
  %v4146 = vunpack.c.l.b16 %v3784
  %v4147 = vunpack.c.h.b16 %v3784
  %v4148 = vunpack.c.l.b16 %v3785
  %v4149 = vunpack.c.h.b16 %v3785
  %v4150 = vunpack.c.l.b16 %v3786
  %v4151 = vunpack.c.h.b16 %v3786
  %v4152 = vunpack.c.l.b16 %v3787
  %v4153 = vunpack.c.h.b16 %v3787
  %v4154 = vunpack.c.l.b16 %v3788
  %v4155 = vunpack.c.h.b16 %v3788
  %v4156 = vunpack.c.l.b16 %v3789
  %v4157 = vunpack.c.h.b16 %v3789
  %v4158 = vunpack.c.l.b16 %v3790
  %v4159 = vunpack.c.h.b16 %v3790
  %v4160 = vunpack.c.l.b16 %v3791
  %v4161 = vunpack.c.h.b16 %v3791
  %v4162 = vunpack.c.l.b16 %v3792
  %v4163 = vunpack.c.h.b16 %v3792
  %v4164 = vunpack.c.l.b16 %v3793
  %v4165 = vunpack.c.h.b16 %v3793
  %v4166 = vunpack.c.l.b16 %v3794
  %v4167 = vunpack.c.h.b16 %v3794
  %v4168 = vunpack.c.l.b16 %v3795
  %v4169 = vunpack.c.h.b16 %v3795
  %v4170 = vunpack.c.l.b16 %v3796
  %v4171 = vunpack.c.h.b16 %v3796
  %v4172 = vunpack.c.l.b16 %v3797
  %v4173 = vunpack.c.h.b16 %v3797
  %v4174 = vunpack.c.l.b16 %v3798
  %v4175 = vunpack.c.h.b16 %v3798
  %v4176 = vunpack.c.l.b16 %v3799
  %v4177 = vunpack.c.h.b16 %v3799
  %v4178 = vunpack.c.l.b16 %v3800
  %v4179 = vunpack.c.h.b16 %v3800
  %v4180 = vunpack.c.l.b16 %v3801
  %v4181 = vunpack.c.h.b16 %v3801
  %v4182 = vunpack.c.l.b16 %v3802
  %v4183 = vunpack.c.h.b16 %v3802
  %v4184 = vunpack.c.l.b16 %v3803
  %v4185 = vunpack.c.h.b16 %v3803
  %v4186 = vunpack.c.l.b16 %v3804
  %v4187 = vunpack.c.h.b16 %v3804
  %v4188 = vunpack.c.l.b16 %v3805
  %v4189 = vunpack.c.h.b16 %v3805
  %v4190 = vunpack.c.l.b16 %v3806
  %v4191 = vunpack.c.h.b16 %v3806
  %v4192 = vunpack.c.l.b16 %v3807
  %v4193 = vunpack.c.h.b16 %v3807
  %v4194 = vunpack.c.l.b16 %v3808
  %v4195 = vunpack.c.h.b16 %v3808
  %v4196 = vunpack.c.l.b16 %v3809
  %v4197 = vunpack.c.h.b16 %v3809
  %v4198 = vunpack.c.l.b16 %v3810
  %v4199 = vunpack.c.h.b16 %v3810
  %v4200 = vunpack.c.l.b16 %v3811
  %v4201 = vunpack.c.h.b16 %v3811
  %v4202 = vunpack.c.l.b16 %v3812
  %v4203 = vunpack.c.h.b16 %v3812
  %v4204 = vunpack.c.l.b16 %v3813
  %v4205 = vunpack.c.h.b16 %v3813
  %v4206 = vunpack.c.l.b16 %v3814
  %v4207 = vunpack.c.h.b16 %v3814
  %v4208 = vunpack.c.l.b16 %v3815
  %v4209 = vunpack.c.h.b16 %v3815
  %v4210 = vunpack.c.l.b16 %v3816
  %v4211 = vunpack.c.h.b16 %v3816
  %v4212 = vunpack.c.l.b16 %v3817
  %v4213 = vunpack.c.h.b16 %v3817
  %v4214 = vunpack.c.l.b16 %v3818
  %v4215 = vunpack.c.h.b16 %v3818
  %v4216 = vunpack.c.l.b16 %v3819
  %v4217 = vunpack.c.h.b16 %v3819
  %v4218 = vunpack.c.l.b16 %v3820
  %v4219 = vunpack.c.h.b16 %v3820
  %v4220 = vunpack.c.l.b16 %v3821
  %v4221 = vunpack.c.h.b16 %v3821
  %v4222 = vunpack.c.l.b16 %v3822
  %v4223 = vunpack.c.h.b16 %v3822
  %v4224 = vunpack.c.l.b16 %v3823
  %v4225 = vunpack.c.h.b16 %v3823
  %v4226 = vunpack.c.l.b16 %v3824
  %v4227 = vunpack.c.h.b16 %v3824
  %v4228 = vunpack.c.l.b16 %v3825
  %v4229 = vunpack.c.h.b16 %v3825
  %v4230 = vunpack.c.l.b16 %v3826
  %v4231 = vunpack.c.h.b16 %v3826
  %v4232 = vunpack.c.l.b16 %v3827
  %v4233 = vunpack.c.h.b16 %v3827
  %v4234 = vunpack.c.l.b16 %v3828
  %v4235 = vunpack.c.h.b16 %v3828
  %v4236 = vunpack.c.l.b16 %v3829
  %v4237 = vunpack.c.h.b16 %v3829
  %v4238 = vunpack.c.l.b16 %v3830
  %v4239 = vunpack.c.h.b16 %v3830
  %v4240 = vunpack.c.l.b16 %v3831
  %v4241 = vunpack.c.h.b16 %v3831
  %v4242 = vunpack.c.l.b16 %v3832
  %v4243 = vunpack.c.h.b16 %v3832
  %v4244 = vunpack.c.l.b16 %v3833
  %v4245 = vunpack.c.h.b16 %v3833
  %v4246 = vunpack.c.l.b16 %v3834
  %v4247 = vunpack.c.h.b16 %v3834
  %v4248 = vunpack.c.l.b16 %v3835
  %v4249 = vunpack.c.h.b16 %v3835
  %v4250 = vunpack.c.l.b16 %v3836
  %v4251 = vunpack.c.h.b16 %v3836
  %v4252 = vunpack.c.l.b16 %v3837
  %v4253 = vunpack.c.h.b16 %v3837
  %v4254 = vunpack.c.l.b16 %v3838
  %v4255 = vunpack.c.h.b16 %v3838
  %v4256 = vunpack.c.l.b16 %v3839
  %v4257 = vunpack.c.h.b16 %v3839
  %v4258 = vunpack.c.l.b16 %v3840
  %v4259 = vunpack.c.h.b16 %v3840
  %v4260 = vunpack.c.l.b16 %v3841
  %v4261 = vunpack.c.h.b16 %v3841
  %v4262 = vunpack.c.l.b16 %v3842
  %v4263 = vunpack.c.h.b16 %v3842
  %v4264 = vunpack.c.l.b16 %v3843
  %v4265 = vunpack.c.h.b16 %v3843
  %v4266 = vunpack.c.l.b16 %v3844
  %v4267 = vunpack.c.h.b16 %v3844
  %v4268 = vunpack.c.l.b16 %v3845
  %v4269 = vunpack.c.h.b16 %v3845
  %v4270 = vunpack.c.l.b16 %v3846
  %v4271 = vunpack.c.h.b16 %v3846
  %v4272 = vunpack.c.l.b16 %v3847
  %v4273 = vunpack.c.h.b16 %v3847
  %v4274 = vunpack.c.l.b16 %v3848
  %v4275 = vunpack.c.h.b16 %v3848
  %v4276 = vunpack.c.l.b16 %v3849
  %v4277 = vunpack.c.h.b16 %v3849
  %v4278 = vunpack.c.l.b16 %v3850
  %v4279 = vunpack.c.h.b16 %v3850
  %v4280 = vunpack.c.l.b16 %v3851
  %v4281 = vunpack.c.h.b16 %v3851
  %v4282 = vunpack.c.l.b16 %v3852
  %v4283 = vunpack.c.h.b16 %v3852
  %v4284 = vunpack.c.l.b16 %v3853
  %v4285 = vunpack.c.h.b16 %v3853
  %v4286 = vunpack.c.l.b16 %v3854
  %v4287 = vunpack.c.h.b16 %v3854
  %v4288 = vunpack.c.l.b16 %v3855
  %v4289 = vunpack.c.h.b16 %v3855
  %v4290 = vunpack.c.l.b16 %v3856
  %v4291 = vunpack.c.h.b16 %v3856
  %v4292 = vunpack.c.l.b16 %v3857
  %v4293 = vunpack.c.h.b16 %v3857
  %v4294 = vunpack.c.l.b16 %v3858
  %v4295 = vunpack.c.h.b16 %v3858
  %v4296 = vunpack.c.l.b16 %v3859
  %v4297 = vunpack.c.h.b16 %v3859
  %v4298 = vunpack.c.l.b16 %v3860
  %v4299 = vunpack.c.h.b16 %v3860
  %v4300 = vunpack.c.l.b16 %v3861
  %v4301 = vunpack.c.h.b16 %v3861
  %v4302 = vunpack.c.l.b16 %v3862
  %v4303 = vunpack.c.h.b16 %v3862
  %v4304 = vunpack.c.l.b16 %v3863
  %v4305 = vunpack.c.h.b16 %v3863
  %v4306 = vunpack.c.l.b16 %v3864
  %v4307 = vunpack.c.h.b16 %v3864
  %v4308 = vunpack.c.l.b16 %v3865
  %v4309 = vunpack.c.h.b16 %v3865
  %v4310 = vunpack.c.l.b16 %v3866
  %v4311 = vunpack.c.h.b16 %v3866
  %v4312 = vunpack.c.l.b16 %v3867
  %v4313 = vunpack.c.h.b16 %v3867
  %v4314 = vunpack.c.l.b16 %v3868
  %v4315 = vunpack.c.h.b16 %v3868
  %v4316 = vunpack.c.l.b16 %v3869
  %v4317 = vunpack.c.h.b16 %v3869
  %v4318 = vunpack.c.l.b16 %v3870
  %v4319 = vunpack.c.h.b16 %v3870
  %v4320 = vunpack.c.l.b16 %v3871
  %v4321 = vunpack.c.h.b16 %v3871
  %v4322 = vpack.c.b16 %v4154, %v4142
  %v4323 = vpack.c.b16 %v4155, %v4143
  %v4324 = vpack.c.b16 %v4156, %v4144
  %v4325 = vpack.c.b16 %v4157, %v4145
  %v4326 = vpack.c.b16 %v4158, %v4146
  %v4327 = vpack.c.b16 %v4159, %v4147
  %v4328 = vpack.c.b16 %v4160, %v4148
  %v4329 = vpack.c.b16 %v4161, %v4149
  %v4330 = vpack.c.b16 %v4162, %v4150
  %v4331 = vpack.c.b16 %v4163, %v4151
  %v4332 = vpack.c.b16 %v4164, %v4152
  %v4333 = vpack.c.b16 %v4165, %v4153
  %v4334 = vpack.c.b16 %v4178, %v4166
  %v4335 = vpack.c.b16 %v4179, %v4167
  %v4336 = vpack.c.b16 %v4180, %v4168
  %v4337 = vpack.c.b16 %v4181, %v4169
  %v4338 = vpack.c.b16 %v4182, %v4170
  %v4339 = vpack.c.b16 %v4183, %v4171
  %v4340 = vpack.c.b16 %v4184, %v4172
  %v4341 = vpack.c.b16 %v4185, %v4173
  %v4342 = vpack.c.b16 %v4186, %v4174
  %v4343 = vpack.c.b16 %v4187, %v4175
  %v4344 = vpack.c.b16 %v4188, %v4176
  %v4345 = vpack.c.b16 %v4189, %v4177
  %v4346 = vpack.c.b16 %v4202, %v4190
  %v4347 = vpack.c.b16 %v4203, %v4191
  %v4348 = vpack.c.b16 %v4204, %v4192
  %v4349 = vpack.c.b16 %v4205, %v4193
  %v4350 = vpack.c.b16 %v4206, %v4194
  %v4351 = vpack.c.b16 %v4207, %v4195
  %v4352 = vpack.c.b16 %v4208, %v4196
  %v4353 = vpack.c.b16 %v4209, %v4197
  %v4354 = vpack.c.b16 %v4210, %v4198
  %v4355 = vpack.c.b16 %v4211, %v4199
  %v4356 = vpack.c.b16 %v4212, %v4200
  %v4357 = vpack.c.b16 %v4213, %v4201
  %v4358 = vpack.c.b16 %v4226, %v4214
  %v4359 = vpack.c.b16 %v4227, %v4215
  %v4360 = vpack.c.b16 %v4228, %v4216
  %v4361 = vpack.c.b16 %v4229, %v4217
  %v4362 = vpack.c.b16 %v4230, %v4218
  %v4363 = vpack.c.b16 %v4231, %v4219
  %v4364 = vpack.c.b16 %v4232, %v4220
  %v4365 = vpack.c.b16 %v4233, %v4221
  %v4366 = vpack.c.b16 %v4234, %v4222
  %v4367 = vpack.c.b16 %v4235, %v4223
  %v4368 = vpack.c.b16 %v4236, %v4224
  %v4369 = vpack.c.b16 %v4237, %v4225
  %v4370 = vpack.c.b16 %v4250, %v4238
  %v4371 = vpack.c.b16 %v4251, %v4239
  %v4372 = vpack.c.b16 %v4252, %v4240
  %v4373 = vpack.c.b16 %v4253, %v4241
  %v4374 = vpack.c.b16 %v4254, %v4242
  %v4375 = vpack.c.b16 %v4255, %v4243
  %v4376 = vpack.c.b16 %v4256, %v4244
  %v4377 = vpack.c.b16 %v4257, %v4245
  %v4378 = vpack.c.b16 %v4258, %v4246
  %v4379 = vpack.c.b16 %v4259, %v4247
  %v4380 = vpack.c.b16 %v4260, %v4248
  %v4381 = vpack.c.b16 %v4261, %v4249
  %v4382 = vpack.c.b16 %v4274, %v4262
  %v4383 = vpack.c.b16 %v4275, %v4263
  %v4384 = vpack.c.b16 %v4276, %v4264
  %v4385 = vpack.c.b16 %v4277, %v4265
  %v4386 = vpack.c.b16 %v4278, %v4266
  %v4387 = vpack.c.b16 %v4279, %v4267
  %v4388 = vpack.c.b16 %v4280, %v4268
  %v4389 = vpack.c.b16 %v4281, %v4269
  %v4390 = vpack.c.b16 %v4282, %v4270
  %v4391 = vpack.c.b16 %v4283, %v4271
  %v4392 = vpack.c.b16 %v4284, %v4272
  %v4393 = vpack.c.b16 %v4285, %v4273
  %v4394 = vpack.c.b16 %v4298, %v4286
  %v4395 = vpack.c.b16 %v4299, %v4287
  %v4396 = vpack.c.b16 %v4300, %v4288
  %v4397 = vpack.c.b16 %v4301, %v4289
  %v4398 = vpack.c.b16 %v4302, %v4290
  %v4399 = vpack.c.b16 %v4303, %v4291
  %v4400 = vpack.c.b16 %v4304, %v4292
  %v4401 = vpack.c.b16 %v4305, %v4293
  %v4402 = vpack.c.b16 %v4306, %v4294
  %v4403 = vpack.c.b16 %v4307, %v4295
  %v4404 = vpack.c.b16 %v4308, %v4296
  %v4405 = vpack.c.b16 %v4309, %v4297
  %v4406 = vpack.c.b16 %v4310, %v4310
  %v4407 = vpack.c.b16 %v4311, %v4311
  %v4408 = vpack.c.b16 %v4312, %v4312
  %v4409 = vpack.c.b16 %v4313, %v4313
  %v4410 = vpack.c.b16 %v4314, %v4314
  %v4411 = vpack.c.b16 %v4315, %v4315
  %v4412 = vpack.c.b16 %v4316, %v4316
  %v4413 = vpack.c.b16 %v4317, %v4317
  %v4414 = vpack.c.b16 %v4318, %v4318
  %v4415 = vpack.c.b16 %v4319, %v4319
  %v4416 = vpack.c.b16 %v4320, %v4320
  %v4417 = vpack.c.b16 %v4321, %v4321
  %vm4506 = vcmask 261120
  %v4508 = vsel %vm4506, %v4333, 0
  %v4511 = vsel %vm4506, %v4345, 0
  %v4514 = vsel %vm4506, %v4357, 0
  %v4517 = vsel %vm4506, %v4369, 0
  %v4520 = vsel %vm4506, %v4381, 0
  %v4523 = vsel %vm4506, %v4393, 0
  %v4526 = vsel %vm4506, %v4405, 0
  %v4529 = vsel %vm4506, %v4417, 0
  %4531 = vmatprep.subr.bf16.mxu0 0
  %4532 = vmatpush1.bf16.msra.mxu0 %v3872
  %4533 = vmatprep.subr.bf16.mxu0 0
  %4534 = vmatpush1.bf16.msra.mxu0 %v3873
  %4535 = vmatprep.subr.bf16.mxu0 0
  %4536 = vmatpush1.bf16.msra.mxu0 %v3874
  %4537 = vmatprep.subr.bf16.mxu0 0
  %4538 = vmatpush1.bf16.msra.mxu0 %v3875
  %4539 = vmatprep.subr.bf16.mxu0 0
  %4540 = vmatpush1.bf16.msra.mxu0 %v3876
  %4541 = vmatprep.subr.bf16.mxu0 0
  %4542 = vmatpush1.bf16.msra.mxu0 %v3877
  %4543 = vmatprep.subr.bf16.mxu0 0
  %4544 = vmatpush1.bf16.msra.mxu0 %v3878
  %4545 = vmatprep.subr.bf16.mxu0 0
  %4546 = vmatpush1.bf16.msra.mxu0 %v3879
  %4547 = vmatprep.subr.bf16.mxu0 0
  %4548 = vmatpush1.bf16.msra.mxu0 %v3880
  %4549 = vmatprep.subr.bf16.mxu0 0
  %4550 = vmatpush1.bf16.msra.mxu0 %v3881
  %4551 = vmatprep.subr.bf16.mxu0 0
  %4552 = vmatpush1.bf16.msra.mxu0 %v3882
  %4553 = vmatprep.subr.bf16.mxu0 0
  %4554 = vmatpush1.bf16.msra.mxu0 %v3883
  %4555 = vmatprep.subr.bf16.mxu0 0
  %4556 = vmatpush1.bf16.msra.mxu0 %v3884
  %4557 = vmatprep.subr.bf16.mxu0 0
  %4558 = vmatpush1.bf16.msra.mxu0 %v3885
  %4559 = vmatprep.subr.bf16.mxu0 0
  %4560 = vmatpush1.bf16.msra.mxu0 %v3886
  %4561 = vmatprep.subr.bf16.mxu0 0
  %4562 = vmatpush1.bf16.msra.mxu0 %v3887
  %4563 = vmatprep.mubr.bf16.mxu0 %v4323
  %4564 = vmatmul.mubr.bf16.gmra.mrb[0].mxu0 %v4322
  %v4565 = vpop.f32.mrb[0].mxu0
  %v4566 = vadd.f32 %v3980, %v4565
  %v4567 = vpop.f32.mrb[0].mxu0
  %v4568 = vpop.f32.mrb[0].mxu0
  %v4569 = vadd.f32 %v3985, %v4568
  %v4570 = vpop.f32.mrb[0].mxu0
  %4571 = vmatprep.mubr.bf16.mxu0 %v4335
  %4572 = vmatmul.mubr.bf16.gmra.mrb[0].mxu0 %v4334
  %v4573 = vpop.f32.mrb[0].mxu0
  %v4574 = vadd.f32 %v3990, %v4573
  %v4575 = vpop.f32.mrb[0].mxu0
  %v4576 = vpop.f32.mrb[0].mxu0
  %v4577 = vadd.f32 %v3995, %v4576
  %v4578 = vpop.f32.mrb[0].mxu0
  %4579 = vmatprep.mubr.bf16.mxu0 %v4347
  %4580 = vmatmul.mubr.bf16.gmra.mrb[0].mxu0 %v4346
  %v4581 = vpop.f32.mrb[0].mxu0
  %v4582 = vadd.f32 %v4000, %v4581
  %v4583 = vpop.f32.mrb[0].mxu0
  %v4584 = vpop.f32.mrb[0].mxu0
  %v4585 = vadd.f32 %v4005, %v4584
  %v4586 = vpop.f32.mrb[0].mxu0
  %4587 = vmatprep.mubr.bf16.mxu0 %v4359
  %4588 = vmatmul.mubr.bf16.gmra.mrb[0].mxu0 %v4358
  %v4589 = vpop.f32.mrb[0].mxu0
  %v4590 = vadd.f32 %v4010, %v4589
  %v4591 = vpop.f32.mrb[0].mxu0
  %v4592 = vpop.f32.mrb[0].mxu0
  %v4593 = vadd.f32 %v4015, %v4592
  %v4594 = vpop.f32.mrb[0].mxu0
  %4595 = vmatprep.mubr.bf16.mxu0 %v4371
  %4596 = vmatmul.mubr.bf16.gmra.mrb[0].mxu0 %v4370
  %v4597 = vpop.f32.mrb[0].mxu0
  %v4598 = vadd.f32 %v4020, %v4597
  %v4599 = vpop.f32.mrb[0].mxu0
  %v4600 = vpop.f32.mrb[0].mxu0
  %v4601 = vadd.f32 %v4025, %v4600
  %v4602 = vpop.f32.mrb[0].mxu0
  %4603 = vmatprep.mubr.bf16.mxu0 %v4383
  %4604 = vmatmul.mubr.bf16.gmra.mrb[0].mxu0 %v4382
  %v4605 = vpop.f32.mrb[0].mxu0
  %v4606 = vadd.f32 %v4030, %v4605
  %v4607 = vpop.f32.mrb[0].mxu0
  %v4608 = vpop.f32.mrb[0].mxu0
  %v4609 = vadd.f32 %v4035, %v4608
  %v4610 = vpop.f32.mrb[0].mxu0
  %4611 = vmatprep.mubr.bf16.mxu0 %v4395
  %4612 = vmatmul.mubr.bf16.gmra.mrb[0].mxu0 %v4394
  %v4613 = vpop.f32.mrb[0].mxu0
  %v4614 = vadd.f32 %v4040, %v4613
  %v4615 = vpop.f32.mrb[0].mxu0
  %v4616 = vpop.f32.mrb[0].mxu0
  %v4617 = vadd.f32 %v4045, %v4616
  %v4618 = vpop.f32.mrb[0].mxu0
  %4619 = vmatprep.mubr.bf16.mxu0 %v4407
  %4620 = vmatmul.mubr.bf16.gmra.mrb[0].mxu0 %v4406
  %v4621 = vpop.f32.mrb[0].mxu0
  %v4622 = vadd.f32 %v4050, %v4621
  %v4623 = vpop.f32.mrb[0].mxu0
  %v4624 = vpop.f32.mrb[0].mxu0
  %v4625 = vpop.f32.mrb[0].mxu0
  %4626 = vdwg.mxu0
  %4627 = vmatprep.subr.bf16.mxu0 0
  %4628 = vmatpush1.bf16.msra.mxu0 %v3888
  %4629 = vmatprep.subr.bf16.mxu0 0
  %4630 = vmatpush1.bf16.msra.mxu0 %v3889
  %4631 = vmatprep.subr.bf16.mxu0 0
  %4632 = vmatpush1.bf16.msra.mxu0 %v3890
  %4633 = vmatprep.subr.bf16.mxu0 0
  %4634 = vmatpush1.bf16.msra.mxu0 %v3891
  %4635 = vmatprep.subr.bf16.mxu0 0
  %4636 = vmatpush1.bf16.msra.mxu0 %v3892
  %4637 = vmatprep.subr.bf16.mxu0 0
  %4638 = vmatpush1.bf16.msra.mxu0 %v3893
  %4639 = vmatprep.subr.bf16.mxu0 0
  %4640 = vmatpush1.bf16.msra.mxu0 %v3894
  %4641 = vmatprep.subr.bf16.mxu0 0
  %4642 = vmatpush1.bf16.msra.mxu0 %v3895
  %4643 = vmatprep.subr.bf16.mxu0 0
  %4644 = vmatpush1.bf16.msra.mxu0 %v3896
  %4645 = vmatprep.subr.bf16.mxu0 0
  %4646 = vmatpush1.bf16.msra.mxu0 %v3897
  %4647 = vmatprep.subr.bf16.mxu0 0
  %4648 = vmatpush1.bf16.msra.mxu0 %v3898
  %4649 = vmatprep.subr.bf16.mxu0 0
  %4650 = vmatpush1.bf16.msra.mxu0 %v3899
  %4651 = vmatprep.subr.bf16.mxu0 0
  %4652 = vmatpush1.bf16.msra.mxu0 %v3900
  %4653 = vmatprep.subr.bf16.mxu0 0
  %4654 = vmatpush1.bf16.msra.mxu0 %v3901
  %4655 = vmatprep.subr.bf16.mxu0 0
  %4656 = vmatpush1.bf16.msra.mxu0 %v3902
  %4657 = vmatprep.subr.bf16.mxu0 0
  %4658 = vmatpush1.bf16.msra.mxu0 %v3903
  %4659 = vmatprep.mubr.bf16.mxu0 %v4325
  %4660 = vmatmul.mubr.bf16.gmra.mrb[0].mxu0 %v4324
  %v4661 = vpop.f32.mrb[0].mxu0
  %v4662 = vadd.f32 %v4566, %v4661
  %v4663 = vpop.f32.mrb[0].mxu0
  %v4664 = vpop.f32.mrb[0].mxu0
  %v4665 = vadd.f32 %v4569, %v4664
  %v4666 = vpop.f32.mrb[0].mxu0
  %4667 = vmatprep.mubr.bf16.mxu0 %v4337
  %4668 = vmatmul.mubr.bf16.gmra.mrb[0].mxu0 %v4336
  %v4669 = vpop.f32.mrb[0].mxu0
  %v4670 = vadd.f32 %v4574, %v4669
  %v4671 = vpop.f32.mrb[0].mxu0
  %v4672 = vpop.f32.mrb[0].mxu0
  %v4673 = vadd.f32 %v4577, %v4672
  %v4674 = vpop.f32.mrb[0].mxu0
  %4675 = vmatprep.mubr.bf16.mxu0 %v4349
  %4676 = vmatmul.mubr.bf16.gmra.mrb[0].mxu0 %v4348
  %v4677 = vpop.f32.mrb[0].mxu0
  %v4678 = vadd.f32 %v4582, %v4677
  %v4679 = vpop.f32.mrb[0].mxu0
  %v4680 = vpop.f32.mrb[0].mxu0
  %v4681 = vadd.f32 %v4585, %v4680
  %v4682 = vpop.f32.mrb[0].mxu0
  %4683 = vmatprep.mubr.bf16.mxu0 %v4361
  %4684 = vmatmul.mubr.bf16.gmra.mrb[0].mxu0 %v4360
  %v4685 = vpop.f32.mrb[0].mxu0
  %v4686 = vadd.f32 %v4590, %v4685
  %v4687 = vpop.f32.mrb[0].mxu0
  %v4688 = vpop.f32.mrb[0].mxu0
  %v4689 = vadd.f32 %v4593, %v4688
  %v4690 = vpop.f32.mrb[0].mxu0
  %4691 = vmatprep.mubr.bf16.mxu0 %v4373
  %4692 = vmatmul.mubr.bf16.gmra.mrb[0].mxu0 %v4372
  %v4693 = vpop.f32.mrb[0].mxu0
  %v4694 = vadd.f32 %v4598, %v4693
  %v4695 = vpop.f32.mrb[0].mxu0
  %v4696 = vpop.f32.mrb[0].mxu0
  %v4697 = vadd.f32 %v4601, %v4696
  %v4698 = vpop.f32.mrb[0].mxu0
  %4699 = vmatprep.mubr.bf16.mxu0 %v4385
  %4700 = vmatmul.mubr.bf16.gmra.mrb[0].mxu0 %v4384
  %v4701 = vpop.f32.mrb[0].mxu0
  %v4702 = vadd.f32 %v4606, %v4701
  %v4703 = vpop.f32.mrb[0].mxu0
  %v4704 = vpop.f32.mrb[0].mxu0
  %v4705 = vadd.f32 %v4609, %v4704
  %v4706 = vpop.f32.mrb[0].mxu0
  %4707 = vmatprep.mubr.bf16.mxu0 %v4397
  %4708 = vmatmul.mubr.bf16.gmra.mrb[0].mxu0 %v4396
  %v4709 = vpop.f32.mrb[0].mxu0
  %v4710 = vadd.f32 %v4614, %v4709
  %v4711 = vpop.f32.mrb[0].mxu0
  %v4712 = vpop.f32.mrb[0].mxu0
  %v4713 = vadd.f32 %v4617, %v4712
  %v4714 = vpop.f32.mrb[0].mxu0
  %4715 = vmatprep.mubr.bf16.mxu0 %v4409
  %4716 = vmatmul.mubr.bf16.gmra.mrb[0].mxu0 %v4408
  %v4717 = vpop.f32.mrb[0].mxu0
  %v4718 = vadd.f32 %v4622, %v4717
  %v4719 = vpop.f32.mrb[0].mxu0
  %v4720 = vpop.f32.mrb[0].mxu0
  %v4721 = vpop.f32.mrb[0].mxu0
  %4722 = vdwg.mxu0
  %4723 = vmatprep.subr.bf16.mxu0 0
  %4724 = vmatpush1.bf16.msra.mxu0 %v3904
  %4725 = vmatprep.subr.bf16.mxu0 0
  %4726 = vmatpush1.bf16.msra.mxu0 %v3905
  %4727 = vmatprep.subr.bf16.mxu0 0
  %4728 = vmatpush1.bf16.msra.mxu0 %v3906
  %4729 = vmatprep.subr.bf16.mxu0 0
  %4730 = vmatpush1.bf16.msra.mxu0 %v3907
  %4731 = vmatprep.subr.bf16.mxu0 0
  %4732 = vmatpush1.bf16.msra.mxu0 %v3908
  %4733 = vmatprep.subr.bf16.mxu0 0
  %4734 = vmatpush1.bf16.msra.mxu0 %v3909
  %4735 = vmatprep.subr.bf16.mxu0 0
  %4736 = vmatpush1.bf16.msra.mxu0 %v3910
  %4737 = vmatprep.subr.bf16.mxu0 0
  %4738 = vmatpush1.bf16.msra.mxu0 %v3911
  %4739 = vmatprep.subr.bf16.mxu0 0
  %4740 = vmatpush1.bf16.msra.mxu0 %v3912
  %4741 = vmatprep.subr.bf16.mxu0 0
  %4742 = vmatpush1.bf16.msra.mxu0 %v3913
  %4743 = vmatprep.subr.bf16.mxu0 0
  %4744 = vmatpush1.bf16.msra.mxu0 %v3914
  %4745 = vmatprep.subr.bf16.mxu0 0
  %4746 = vmatpush1.bf16.msra.mxu0 %v3915
  %4747 = vmatprep.subr.bf16.mxu0 0
  %4748 = vmatpush1.bf16.msra.mxu0 %v3916
  %4749 = vmatprep.subr.bf16.mxu0 0
  %4750 = vmatpush1.bf16.msra.mxu0 %v3917
  %4751 = vmatprep.subr.bf16.mxu0 0
  %4752 = vmatpush1.bf16.msra.mxu0 %v3918
  %4753 = vmatprep.subr.bf16.mxu0 0
  %4754 = vmatpush1.bf16.msra.mxu0 %v3919
  %4755 = vmatprep.mubr.bf16.mxu0 %v4327
  %4756 = vmatmul.mubr.bf16.gmra.mrb[0].mxu0 %v4326
  %v4757 = vpop.f32.mrb[0].mxu0
  %v4758 = vadd.f32 %v4662, %v4757
  %v4759 = vpop.f32.mrb[0].mxu0
  %v4760 = vpop.f32.mrb[0].mxu0
  %v4761 = vadd.f32 %v4665, %v4760
  %v4762 = vpop.f32.mrb[0].mxu0
  %4763 = vmatprep.mubr.bf16.mxu0 %v4339
  %4764 = vmatmul.mubr.bf16.gmra.mrb[0].mxu0 %v4338
  %v4765 = vpop.f32.mrb[0].mxu0
  %v4766 = vadd.f32 %v4670, %v4765
  %v4767 = vpop.f32.mrb[0].mxu0
  %v4768 = vpop.f32.mrb[0].mxu0
  %v4769 = vadd.f32 %v4673, %v4768
  %v4770 = vpop.f32.mrb[0].mxu0
  %4771 = vmatprep.mubr.bf16.mxu0 %v4351
  %4772 = vmatmul.mubr.bf16.gmra.mrb[0].mxu0 %v4350
  %v4773 = vpop.f32.mrb[0].mxu0
  %v4774 = vadd.f32 %v4678, %v4773
  %v4775 = vpop.f32.mrb[0].mxu0
  %v4776 = vpop.f32.mrb[0].mxu0
  %v4777 = vadd.f32 %v4681, %v4776
  %v4778 = vpop.f32.mrb[0].mxu0
  %4779 = vmatprep.mubr.bf16.mxu0 %v4363
  %4780 = vmatmul.mubr.bf16.gmra.mrb[0].mxu0 %v4362
  %v4781 = vpop.f32.mrb[0].mxu0
  %v4782 = vadd.f32 %v4686, %v4781
  %v4783 = vpop.f32.mrb[0].mxu0
  %v4784 = vpop.f32.mrb[0].mxu0
  %v4785 = vadd.f32 %v4689, %v4784
  %v4786 = vpop.f32.mrb[0].mxu0
  %4787 = vmatprep.mubr.bf16.mxu0 %v4375
  %4788 = vmatmul.mubr.bf16.gmra.mrb[0].mxu0 %v4374
  %v4789 = vpop.f32.mrb[0].mxu0
  %v4790 = vadd.f32 %v4694, %v4789
  %v4791 = vpop.f32.mrb[0].mxu0
  %v4792 = vpop.f32.mrb[0].mxu0
  %v4793 = vadd.f32 %v4697, %v4792
  %v4794 = vpop.f32.mrb[0].mxu0
  %4795 = vmatprep.mubr.bf16.mxu0 %v4387
  %4796 = vmatmul.mubr.bf16.gmra.mrb[0].mxu0 %v4386
  %v4797 = vpop.f32.mrb[0].mxu0
  %v4798 = vadd.f32 %v4702, %v4797
  %v4799 = vpop.f32.mrb[0].mxu0
  %v4800 = vpop.f32.mrb[0].mxu0
  %v4801 = vadd.f32 %v4705, %v4800
  %v4802 = vpop.f32.mrb[0].mxu0
  %4803 = vmatprep.mubr.bf16.mxu0 %v4399
  %4804 = vmatmul.mubr.bf16.gmra.mrb[0].mxu0 %v4398
  %v4805 = vpop.f32.mrb[0].mxu0
  %v4806 = vadd.f32 %v4710, %v4805
  %v4807 = vpop.f32.mrb[0].mxu0
  %v4808 = vpop.f32.mrb[0].mxu0
  %v4809 = vadd.f32 %v4713, %v4808
  %v4810 = vpop.f32.mrb[0].mxu0
  %4811 = vmatprep.mubr.bf16.mxu0 %v4411
  %4812 = vmatmul.mubr.bf16.gmra.mrb[0].mxu0 %v4410
  %v4813 = vpop.f32.mrb[0].mxu0
  %v4814 = vadd.f32 %v4718, %v4813
  %v4815 = vpop.f32.mrb[0].mxu0
  %v4816 = vpop.f32.mrb[0].mxu0
  %v4817 = vpop.f32.mrb[0].mxu0
  %4818 = vdwg.mxu0
  %4819 = vmatprep.subr.bf16.mxu0 0
  %4820 = vmatpush1.bf16.msra.mxu0 %v3920
  %4821 = vmatprep.subr.bf16.mxu0 0
  %4822 = vmatpush1.bf16.msra.mxu0 %v3921
  %4823 = vmatprep.subr.bf16.mxu0 0
  %4824 = vmatpush1.bf16.msra.mxu0 %v3922
  %4825 = vmatprep.subr.bf16.mxu0 0
  %4826 = vmatpush1.bf16.msra.mxu0 %v3923
  %4827 = vmatprep.subr.bf16.mxu0 0
  %4828 = vmatpush1.bf16.msra.mxu0 %v3924
  %4829 = vmatprep.subr.bf16.mxu0 0
  %4830 = vmatpush1.bf16.msra.mxu0 %v3925
  %4831 = vmatprep.subr.bf16.mxu0 0
  %4832 = vmatpush1.bf16.msra.mxu0 %v3926
  %4833 = vmatprep.subr.bf16.mxu0 0
  %4834 = vmatpush1.bf16.msra.mxu0 %v3927
  %4835 = vmatprep.subr.bf16.mxu0 0
  %4836 = vmatpush1.bf16.msra.mxu0 %v3928
  %4837 = vmatprep.subr.bf16.mxu0 0
  %4838 = vmatpush1.bf16.msra.mxu0 %v3929
  %4839 = vmatprep.subr.bf16.mxu0 0
  %4840 = vmatpush1.bf16.msra.mxu0 %v3930
  %4841 = vmatprep.subr.bf16.mxu0 0
  %4842 = vmatpush1.bf16.msra.mxu0 %v3931
  %4843 = vmatprep.subr.bf16.mxu0 0
  %4844 = vmatpush1.bf16.msra.mxu0 %v3932
  %4845 = vmatprep.subr.bf16.mxu0 0
  %4846 = vmatpush1.bf16.msra.mxu0 %v3933
  %4847 = vmatprep.subr.bf16.mxu0 0
  %4848 = vmatpush1.bf16.msra.mxu0 %v3934
  %4849 = vmatprep.subr.bf16.mxu0 0
  %4850 = vmatpush1.bf16.msra.mxu0 %v3935
  %4851 = vmatprep.mubr.bf16.mxu0 %v4329
  %4852 = vmatmul.mubr.bf16.gmra.mrb[0].mxu0 %v4328
  %v4853 = vpop.f32.mrb[0].mxu0
  %v4854 = vadd.f32 %v4758, %v4853
  %v4855 = vpop.f32.mrb[0].mxu0
  %v4856 = vpop.f32.mrb[0].mxu0
  %v4857 = vadd.f32 %v4761, %v4856
  %v4858 = vpop.f32.mrb[0].mxu0
  %4859 = vmatprep.mubr.bf16.mxu0 %v4341
  %4860 = vmatmul.mubr.bf16.gmra.mrb[0].mxu0 %v4340
  %v4861 = vpop.f32.mrb[0].mxu0
  %v4862 = vadd.f32 %v4766, %v4861
  %v4863 = vpop.f32.mrb[0].mxu0
  %v4864 = vpop.f32.mrb[0].mxu0
  %v4865 = vadd.f32 %v4769, %v4864
  %v4866 = vpop.f32.mrb[0].mxu0
  %4867 = vmatprep.mubr.bf16.mxu0 %v4353
  %4868 = vmatmul.mubr.bf16.gmra.mrb[0].mxu0 %v4352
  %v4869 = vpop.f32.mrb[0].mxu0
  %v4870 = vadd.f32 %v4774, %v4869
  %v4871 = vpop.f32.mrb[0].mxu0
  %v4872 = vpop.f32.mrb[0].mxu0
  %v4873 = vadd.f32 %v4777, %v4872
  %v4874 = vpop.f32.mrb[0].mxu0
  %4875 = vmatprep.mubr.bf16.mxu0 %v4365
  %4876 = vmatmul.mubr.bf16.gmra.mrb[0].mxu0 %v4364
  %v4877 = vpop.f32.mrb[0].mxu0
  %v4878 = vadd.f32 %v4782, %v4877
  %v4879 = vpop.f32.mrb[0].mxu0
  %v4880 = vpop.f32.mrb[0].mxu0
  %v4881 = vadd.f32 %v4785, %v4880
  %v4882 = vpop.f32.mrb[0].mxu0
  %4883 = vmatprep.mubr.bf16.mxu0 %v4377
  %4884 = vmatmul.mubr.bf16.gmra.mrb[0].mxu0 %v4376
  %v4885 = vpop.f32.mrb[0].mxu0
  %v4886 = vadd.f32 %v4790, %v4885
  %v4887 = vpop.f32.mrb[0].mxu0
  %v4888 = vpop.f32.mrb[0].mxu0
  %v4889 = vadd.f32 %v4793, %v4888
  %v4890 = vpop.f32.mrb[0].mxu0
  %4891 = vmatprep.mubr.bf16.mxu0 %v4389
  %4892 = vmatmul.mubr.bf16.gmra.mrb[0].mxu0 %v4388
  %v4893 = vpop.f32.mrb[0].mxu0
  %v4894 = vadd.f32 %v4798, %v4893
  %v4895 = vpop.f32.mrb[0].mxu0
  %v4896 = vpop.f32.mrb[0].mxu0
  %v4897 = vadd.f32 %v4801, %v4896
  %v4898 = vpop.f32.mrb[0].mxu0
  %4899 = vmatprep.mubr.bf16.mxu0 %v4401
  %4900 = vmatmul.mubr.bf16.gmra.mrb[0].mxu0 %v4400
  %v4901 = vpop.f32.mrb[0].mxu0
  %v4902 = vadd.f32 %v4806, %v4901
  %v4903 = vpop.f32.mrb[0].mxu0
  %v4904 = vpop.f32.mrb[0].mxu0
  %v4905 = vadd.f32 %v4809, %v4904
  %v4906 = vpop.f32.mrb[0].mxu0
  %4907 = vmatprep.mubr.bf16.mxu0 %v4413
  %4908 = vmatmul.mubr.bf16.gmra.mrb[0].mxu0 %v4412
  %v4909 = vpop.f32.mrb[0].mxu0
  %v4910 = vadd.f32 %v4814, %v4909
  %v4911 = vpop.f32.mrb[0].mxu0
  %v4912 = vpop.f32.mrb[0].mxu0
  %v4913 = vpop.f32.mrb[0].mxu0
  %4914 = vdwg.mxu0
  %4915 = vmatprep.subr.bf16.mxu0 0
  %4916 = vmatpush1.bf16.msra.mxu0 %v3936
  %4917 = vmatprep.subr.bf16.mxu0 0
  %4918 = vmatpush1.bf16.msra.mxu0 %v3937
  %4919 = vmatprep.subr.bf16.mxu0 0
  %4920 = vmatpush1.bf16.msra.mxu0 %v3938
  %4921 = vmatprep.subr.bf16.mxu0 0
  %4922 = vmatpush1.bf16.msra.mxu0 %v3939
  %4923 = vmatprep.subr.bf16.mxu0 0
  %4924 = vmatpush1.bf16.msra.mxu0 %v3940
  %4925 = vmatprep.subr.bf16.mxu0 0
  %4926 = vmatpush1.bf16.msra.mxu0 %v3941
  %4927 = vmatprep.subr.bf16.mxu0 0
  %4928 = vmatpush1.bf16.msra.mxu0 %v3942
  %4929 = vmatprep.subr.bf16.mxu0 0
  %4930 = vmatpush1.bf16.msra.mxu0 %v3943
  %4931 = vmatprep.subr.bf16.mxu0 0
  %4932 = vmatpush1.bf16.msra.mxu0 %v3944
  %4933 = vmatprep.subr.bf16.mxu0 0
  %4934 = vmatpush1.bf16.msra.mxu0 %v3945
  %4935 = vmatprep.subr.bf16.mxu0 0
  %4936 = vmatpush1.bf16.msra.mxu0 %v3946
  %4937 = vmatprep.subr.bf16.mxu0 0
  %4938 = vmatpush1.bf16.msra.mxu0 %v3947
  %4939 = vmatprep.subr.bf16.mxu0 0
  %4940 = vmatpush1.bf16.msra.mxu0 %v3948
  %4941 = vmatprep.subr.bf16.mxu0 0
  %4942 = vmatpush1.bf16.msra.mxu0 %v3949
  %4943 = vmatprep.subr.bf16.mxu0 0
  %4944 = vmatpush1.bf16.msra.mxu0 %v3950
  %4945 = vmatprep.subr.bf16.mxu0 0
  %4946 = vmatpush1.bf16.msra.mxu0 %v3951
  %4947 = vmatprep.mubr.bf16.mxu0 %v4331
  %4948 = vmatmul.mubr.bf16.gmra.mrb[0].mxu0 %v4330
  %v4949 = vpop.f32.mrb[0].mxu0
  %v4950 = vadd.f32 %v4854, %v4949
  %v4951 = vpop.f32.mrb[0].mxu0
  %v4952 = vpop.f32.mrb[0].mxu0
  %v4953 = vadd.f32 %v4857, %v4952
  %v4954 = vpop.f32.mrb[0].mxu0
  %4955 = vmatprep.mubr.bf16.mxu0 %v4343
  %4956 = vmatmul.mubr.bf16.gmra.mrb[0].mxu0 %v4342
  %v4957 = vpop.f32.mrb[0].mxu0
  %v4958 = vadd.f32 %v4862, %v4957
  %v4959 = vpop.f32.mrb[0].mxu0
  %v4960 = vpop.f32.mrb[0].mxu0
  %v4961 = vadd.f32 %v4865, %v4960
  %v4962 = vpop.f32.mrb[0].mxu0
  %4963 = vmatprep.mubr.bf16.mxu0 %v4355
  %4964 = vmatmul.mubr.bf16.gmra.mrb[0].mxu0 %v4354
  %v4965 = vpop.f32.mrb[0].mxu0
  %v4966 = vadd.f32 %v4870, %v4965
  %v4967 = vpop.f32.mrb[0].mxu0
  %v4968 = vpop.f32.mrb[0].mxu0
  %v4969 = vadd.f32 %v4873, %v4968
  %v4970 = vpop.f32.mrb[0].mxu0
  %4971 = vmatprep.mubr.bf16.mxu0 %v4367
  %4972 = vmatmul.mubr.bf16.gmra.mrb[0].mxu0 %v4366
  %v4973 = vpop.f32.mrb[0].mxu0
  %v4974 = vadd.f32 %v4878, %v4973
  %v4975 = vpop.f32.mrb[0].mxu0
  %v4976 = vpop.f32.mrb[0].mxu0
  %v4977 = vadd.f32 %v4881, %v4976
  %v4978 = vpop.f32.mrb[0].mxu0
  %4979 = vmatprep.mubr.bf16.mxu0 %v4379
  %4980 = vmatmul.mubr.bf16.gmra.mrb[0].mxu0 %v4378
  %v4981 = vpop.f32.mrb[0].mxu0
  %v4982 = vadd.f32 %v4886, %v4981
  %v4983 = vpop.f32.mrb[0].mxu0
  %v4984 = vpop.f32.mrb[0].mxu0
  %v4985 = vadd.f32 %v4889, %v4984
  %v4986 = vpop.f32.mrb[0].mxu0
  %4987 = vmatprep.mubr.bf16.mxu0 %v4391
  %4988 = vmatmul.mubr.bf16.gmra.mrb[0].mxu0 %v4390
  %v4989 = vpop.f32.mrb[0].mxu0
  %v4990 = vadd.f32 %v4894, %v4989
  %v4991 = vpop.f32.mrb[0].mxu0
  %v4992 = vpop.f32.mrb[0].mxu0
  %v4993 = vadd.f32 %v4897, %v4992
  %v4994 = vpop.f32.mrb[0].mxu0
  %4995 = vmatprep.mubr.bf16.mxu0 %v4403
  %4996 = vmatmul.mubr.bf16.gmra.mrb[0].mxu0 %v4402
  %v4997 = vpop.f32.mrb[0].mxu0
  %v4998 = vadd.f32 %v4902, %v4997
  %v4999 = vpop.f32.mrb[0].mxu0
  %v5000 = vpop.f32.mrb[0].mxu0
  %v5001 = vadd.f32 %v4905, %v5000
  %v5002 = vpop.f32.mrb[0].mxu0
  %5003 = vmatprep.mubr.bf16.mxu0 %v4415
  %5004 = vmatmul.mubr.bf16.gmra.mrb[0].mxu0 %v4414
  %v5005 = vpop.f32.mrb[0].mxu0
  %v5006 = vadd.f32 %v4910, %v5005
  %v5007 = vpop.f32.mrb[0].mxu0
  %v5008 = vpop.f32.mrb[0].mxu0
  %v5009 = vpop.f32.mrb[0].mxu0
  %5010 = vdwg.mxu0
  %5011 = vmatprep.subr.bf16.mxu0 0
  %5012 = vmatpush1.bf16.msra.mxu0 %v3952
  %5013 = vmatprep.subr.bf16.mxu0 0
  %5014 = vmatpush1.bf16.msra.mxu0 %v3953
  %5015 = vmatprep.subr.bf16.mxu0 0
  %5016 = vmatpush1.bf16.msra.mxu0 %v3954
  %5017 = vmatprep.subr.bf16.mxu0 0
  %5018 = vmatpush1.bf16.msra.mxu0 %v3955
  %5019 = vmatprep.subr.bf16.mxu0 0
  %5020 = vmatpush1.bf16.msra.mxu0 %v3956
  %5021 = vmatprep.subr.bf16.mxu0 0
  %5022 = vmatpush1.bf16.msra.mxu0 %v3957
  %5023 = vmatprep.subr.bf16.mxu0 0
  %5024 = vmatpush1.bf16.msra.mxu0 %v3958
  %5025 = vmatprep.subr.bf16.mxu0 0
  %5026 = vmatpush1.bf16.msra.mxu0 %v3959
  %5027 = vmatprep.subr.bf16.mxu0 0
  %5028 = vmatpush1.bf16.msra.mxu0 %v3960
  %5029 = vmatprep.subr.bf16.mxu0 0
  %5030 = vmatpush1.bf16.msra.mxu0 %v3961
  %5031 = vmatprep.subr.bf16.mxu0 0
  %5032 = vmatpush1.bf16.msra.mxu0 0
  %5033 = vmatprep.subr.bf16.mxu0 0
  %5034 = vmatpush1.bf16.msra.mxu0 0
  %5035 = vmatprep.subr.bf16.mxu0 0
  %5036 = vmatpush1.bf16.msra.mxu0 0
  %5037 = vmatprep.subr.bf16.mxu0 0
  %5038 = vmatpush1.bf16.msra.mxu0 0
  %5039 = vmatprep.subr.bf16.mxu0 0
  %5040 = vmatpush1.bf16.msra.mxu0 0
  %5041 = vmatprep.subr.bf16.mxu0 0
  %5042 = vmatpush1.bf16.msra.mxu0 0
  %5043 = vmatprep.mubr.bf16.mxu0 %v4508
  %5044 = vmatmul.mubr.bf16.gmra.mrb[0].mxu0 %v4332
  %v5045 = vpop.f32.mrb[0].mxu0
  %v5046 = vadd.f32 %v4950, %v5045
  %v5047 = vpop.f32.mrb[0].mxu0
  %v5048 = vpop.f32.mrb[0].mxu0
  %v5049 = vadd.f32 %v4953, %v5048
  %v5050 = vpop.f32.mrb[0].mxu0
  %5051 = vmatprep.mubr.bf16.mxu0 %v4511
  %5052 = vmatmul.mubr.bf16.gmra.mrb[0].mxu0 %v4344
  %v5053 = vpop.f32.mrb[0].mxu0
  %v5054 = vadd.f32 %v4958, %v5053
  %v5055 = vpop.f32.mrb[0].mxu0
  %v5056 = vpop.f32.mrb[0].mxu0
  %v5057 = vadd.f32 %v4961, %v5056
  %v5058 = vpop.f32.mrb[0].mxu0
  %5059 = vmatprep.mubr.bf16.mxu0 %v4514
  %5060 = vmatmul.mubr.bf16.gmra.mrb[0].mxu0 %v4356
  %v5061 = vpop.f32.mrb[0].mxu0
  %v5062 = vadd.f32 %v4966, %v5061
  %v5063 = vpop.f32.mrb[0].mxu0
  %v5064 = vpop.f32.mrb[0].mxu0
  %v5065 = vadd.f32 %v4969, %v5064
  %v5066 = vpop.f32.mrb[0].mxu0
  %5067 = vmatprep.mubr.bf16.mxu0 %v4517
  %5068 = vmatmul.mubr.bf16.gmra.mrb[0].mxu0 %v4368
  %v5069 = vpop.f32.mrb[0].mxu0
  %v5070 = vadd.f32 %v4974, %v5069
  %v5071 = vpop.f32.mrb[0].mxu0
  %v5072 = vpop.f32.mrb[0].mxu0
  %v5073 = vadd.f32 %v4977, %v5072
  %v5074 = vpop.f32.mrb[0].mxu0
  %5075 = vmatprep.mubr.bf16.mxu0 %v4520
  %5076 = vmatmul.mubr.bf16.gmra.mrb[0].mxu0 %v4380
  %v5077 = vpop.f32.mrb[0].mxu0
  %v5078 = vadd.f32 %v4982, %v5077
  %v5079 = vpop.f32.mrb[0].mxu0
  %v5080 = vpop.f32.mrb[0].mxu0
  %v5081 = vadd.f32 %v4985, %v5080
  %v5082 = vpop.f32.mrb[0].mxu0
  %5083 = vmatprep.mubr.bf16.mxu0 %v4523
  %5084 = vmatmul.mubr.bf16.gmra.mrb[0].mxu0 %v4392
  %v5085 = vpop.f32.mrb[0].mxu0
  %v5086 = vadd.f32 %v4990, %v5085
  %v5087 = vpop.f32.mrb[0].mxu0
  %v5088 = vpop.f32.mrb[0].mxu0
  %v5089 = vadd.f32 %v4993, %v5088
  %v5090 = vpop.f32.mrb[0].mxu0
  %5091 = vmatprep.mubr.bf16.mxu0 %v4526
  %5092 = vmatmul.mubr.bf16.gmra.mrb[0].mxu0 %v4404
  %v5093 = vpop.f32.mrb[0].mxu0
  %v5094 = vadd.f32 %v4998, %v5093
  %v5095 = vpop.f32.mrb[0].mxu0
  %v5096 = vpop.f32.mrb[0].mxu0
  %v5097 = vadd.f32 %v5001, %v5096
  %v5098 = vpop.f32.mrb[0].mxu0
  %5099 = vmatprep.mubr.bf16.mxu0 %v4529
  %5100 = vmatmul.mubr.bf16.gmra.mrb[0].mxu0 %v4416
  %v5101 = vpop.f32.mrb[0].mxu0
  %v5102 = vadd.f32 %v5006, %v5101
  %v5103 = vpop.f32.mrb[0].mxu0
  %v5104 = vpop.f32.mrb[0].mxu0
  %v5105 = vpop.f32.mrb[0].mxu0
  %5106 = vdwg.mxu0
  %v5107 = vmax.f32 %v5046, 0.0
  %v5108 = vmax.f32 %v5049, 0.0
  %v5109 = vmax.f32 %v5054, 0.0
  %v5110 = vmax.f32 %v5057, 0.0
  %v5111 = vmax.f32 %v5062, 0.0
  %v5112 = vmax.f32 %v5065, 0.0
  %v5113 = vmax.f32 %v5070, 0.0
  %v5114 = vmax.f32 %v5073, 0.0
  %v5115 = vmax.f32 %v5078, 0.0
  %v5116 = vmax.f32 %v5081, 0.0
  %v5117 = vmax.f32 %v5086, 0.0
  %v5118 = vmax.f32 %v5089, 0.0
  %v5119 = vmax.f32 %v5094, 0.0
  %v5120 = vmax.f32 %v5097, 0.0
  %v5121 = vmax.f32 %v5102, 0.0
  %v5122 = vld [vmem:[%s7] sm:$0xf]
  %v5123 = vld [vmem:[%s7 + $0x4] sm:$0xf]
  %v5124 = vld [vmem:[%s7 + $0x8] sm:$0xf]
  %v5125 = vld [vmem:[%s7 + $0xc] sm:$0xf]
  %v5126 = vld [vmem:[%s7 + $0x10] sm:$0xf]
  %v5127 = vld [vmem:[%s7 + $0x14] sm:$0xf]
  %v5128 = vld [vmem:[%s7 + $0x18] sm:$0xf]
  %v5129 = vld [vmem:[%s7 + $0x1c] sm:$0xf]
  %v5130 = vld [vmem:[%s7 + $0x20] sm:$0xf]
  %v5131 = vld [vmem:[%s7 + $0x24] sm:$0xf]
  %v5132 = vld [vmem:[%s7 + $0x28] sm:$0x3]
  %v5133 = vpack.c.bf16 %v5108, %v5107
  %v5134 = vpack.c.bf16 %v5110, %v5109
  %v5135 = vpack.c.bf16 %v5112, %v5111
  %v5136 = vpack.c.bf16 %v5114, %v5113
  %v5137 = vpack.c.bf16 %v5116, %v5115
  %v5138 = vpack.c.bf16 %v5118, %v5117
  %v5139 = vpack.c.bf16 %v5120, %v5119
  %v5140 = vpack.c.bf16 %v5121, %v5121
  %v5141 = vld [vmem:[%s8] sm:$0xff]
  %v5142 = vld [vmem:[%s8 + $0x8] sm:$0xff]
  %v5143 = vld [vmem:[%s8 + $0x10] sm:$0xff]
  %v5144 = vld [vmem:[%s8 + $0x18] sm:$0xff]
  %v5145 = vld [vmem:[%s8 + $0x20] sm:$0xff]
  %v5146 = vld [vmem:[%s8 + $0x28] sm:$0xff]
  %v5147 = vld [vmem:[%s8 + $0x30] sm:$0xff]
  %v5148 = vld [vmem:[%s8 + $0x38] sm:$0xff]
  %v5149 = vld [vmem:[%s8 + $0x40] sm:$0xff]
  %v5150 = vld [vmem:[%s8 + $0x48] sm:$0xff]
  %v5151 = vld [vmem:[%s8 + $0x50] sm:$0xf]
  %5153 = vset.pattern.permute.xlu0 0
  %5154 = vperm.xlu0 %5153, %v5141
  %v5155 = vpop.permute.xlu0 %5154
  %5158 = vset.pattern.permute.xlu0 0
  %5159 = vperm.xlu0 %5158, %v5142
  %v5160 = vpop.permute.xlu0 %5159
  %5163 = vset.pattern.permute.xlu0 0
  %5164 = vperm.xlu0 %5163, %v5143
  %v5165 = vpop.permute.xlu0 %5164
  %5168 = vset.pattern.permute.xlu0 0
  %5169 = vperm.xlu0 %5168, %v5144
  %v5170 = vpop.permute.xlu0 %5169
  %5173 = vset.pattern.permute.xlu0 0
  %5174 = vperm.xlu0 %5173, %v5145
  %v5175 = vpop.permute.xlu0 %5174
  %5178 = vset.pattern.permute.xlu0 0
  %5179 = vperm.xlu0 %5178, %v5146
  %v5180 = vpop.permute.xlu0 %5179
  %5183 = vset.pattern.permute.xlu0 0
  %5184 = vperm.xlu0 %5183, %v5147
  %v5185 = vpop.permute.xlu0 %5184
  %5188 = vset.pattern.permute.xlu0 0
  %5189 = vperm.xlu0 %5188, %v5148
  %v5190 = vpop.permute.xlu0 %5189
  %5193 = vset.pattern.permute.xlu0 0
  %5194 = vperm.xlu0 %5193, %v5149
  %v5195 = vpop.permute.xlu0 %5194
  %5198 = vset.pattern.permute.xlu0 0
  %5199 = vperm.xlu0 %5198, %v5150
  %v5200 = vpop.permute.xlu0 %5199
  %5203 = vset.pattern.permute.xlu0 0
  %5204 = vperm.xlu0 %5203, %v5151
  %v5205 = vpop.permute.xlu0 %5204
  %v5218 = vunpack.c.l.b16 %v5122
  %v5219 = vunpack.c.l.b16 %v5123
  %v5220 = vunpack.c.l.b16 %v5124
  %v5221 = vunpack.c.l.b16 %v5125
  %v5222 = vunpack.c.l.b16 %v5126
  %v5223 = vunpack.c.l.b16 %v5127
  %v5224 = vunpack.c.l.b16 %v5128
  %v5225 = vunpack.c.l.b16 %v5129
  %v5226 = vunpack.c.l.b16 %v5130
  %v5227 = vunpack.c.l.b16 %v5131
  %v5228 = vunpack.c.l.b16 %v5132
  %v5229 = vpack.c.b16 %v5219, %v5218
  %v5230 = vpack.c.b16 %v5221, %v5220
  %v5231 = vpack.c.b16 %v5223, %v5222
  %v5232 = vpack.c.b16 %v5225, %v5224
  %v5233 = vpack.c.b16 %v5227, %v5226
  %v5234 = vpack.c.b16 %v5228, %v5228
  %vm5235 = vcmask 982016
  %v5237 = vsel %vm5235, %v5229, 0
  %v5240 = vsel %vm5235, %v5230, 0
  %v5243 = vsel %vm5235, %v5231, 0
  %v5246 = vsel %vm5235, %v5232, 0
  %v5249 = vsel %vm5235, %v5233, 0
  %v5252 = vsel %vm5235, %v5234, 0
  %vm5254 = vcmask 1043456
  %v5256 = vsel %vm5254, %v5140, 0
  %5258 = vmatprep.subr.bf16.mxu0 0
  %5259 = vmatpush1.bf16.msra.mxu0 %v5133
  %5260 = vmatprep.subr.bf16.mxu0 0
  %5261 = vmatpush1.bf16.msra.mxu0 %v5134
  %5262 = vmatprep.subr.bf16.mxu0 0
  %5263 = vmatpush1.bf16.msra.mxu0 %v5135
  %5264 = vmatprep.subr.bf16.mxu0 0
  %5265 = vmatpush1.bf16.msra.mxu0 %v5136
  %5266 = vmatprep.subr.bf16.mxu0 0
  %5267 = vmatpush1.bf16.msra.mxu0 %v5137
  %5268 = vmatprep.subr.bf16.mxu0 0
  %5269 = vmatpush1.bf16.msra.mxu0 %v5138
  %5270 = vmatprep.subr.bf16.mxu0 0
  %5271 = vmatpush1.bf16.msra.mxu0 %v5139
  %5272 = vmatprep.subr.bf16.mxu0 0
  %5273 = vmatpush1.bf16.msra.mxu0 %v5256
  %5274 = vmatprep.subr.bf16.mxu0 0
  %5275 = vmatpush1.bf16.msra.mxu0 0
  %5276 = vmatprep.subr.bf16.mxu0 0
  %5277 = vmatpush1.bf16.msra.mxu0 0
  %5278 = vmatprep.subr.bf16.mxu0 0
  %5279 = vmatpush1.bf16.msra.mxu0 0
  %5280 = vmatprep.subr.bf16.mxu0 0
  %5281 = vmatpush1.bf16.msra.mxu0 0
  %5282 = vmatprep.subr.bf16.mxu0 0
  %5283 = vmatpush1.bf16.msra.mxu0 0
  %5284 = vmatprep.subr.bf16.mxu0 0
  %5285 = vmatpush1.bf16.msra.mxu0 0
  %5286 = vmatprep.subr.bf16.mxu0 0
  %5287 = vmatpush1.bf16.msra.mxu0 0
  %5288 = vmatprep.subr.bf16.mxu0 0
  %5289 = vmatpush1.bf16.msra.mxu0 0
  %5290 = vmatprep.mubr.bf16.mxu0 0
  %5291 = vmatmul.mubr.bf16.gmra.mrb[0].mxu0 %v5237
  %v5292 = vpop.f32.mrb[0].mxu0
  %v5293 = vadd.f32 %v5155, %v5292
  %v5294 = vpop.f32.mrb[0].mxu0
  %v5295 = vpop.f32.mrb[0].mxu0
  %v5296 = vadd.f32 %v5160, %v5295
  %v5297 = vpop.f32.mrb[0].mxu0
  %5298 = vmatprep.mubr.bf16.mxu0 0
  %5299 = vmatmul.mubr.bf16.gmra.mrb[0].mxu0 %v5240
  %v5300 = vpop.f32.mrb[0].mxu0
  %v5301 = vadd.f32 %v5165, %v5300
  %v5302 = vpop.f32.mrb[0].mxu0
  %v5303 = vpop.f32.mrb[0].mxu0
  %v5304 = vadd.f32 %v5170, %v5303
  %v5305 = vpop.f32.mrb[0].mxu0
  %5306 = vmatprep.mubr.bf16.mxu0 0
  %5307 = vmatmul.mubr.bf16.gmra.mrb[0].mxu0 %v5243
  %v5308 = vpop.f32.mrb[0].mxu0
  %v5309 = vadd.f32 %v5175, %v5308
  %v5310 = vpop.f32.mrb[0].mxu0
  %v5311 = vpop.f32.mrb[0].mxu0
  %v5312 = vadd.f32 %v5180, %v5311
  %v5313 = vpop.f32.mrb[0].mxu0
  %5314 = vmatprep.mubr.bf16.mxu0 0
  %5315 = vmatmul.mubr.bf16.gmra.mrb[0].mxu0 %v5246
  %v5316 = vpop.f32.mrb[0].mxu0
  %v5317 = vadd.f32 %v5185, %v5316
  %v5318 = vpop.f32.mrb[0].mxu0
  %v5319 = vpop.f32.mrb[0].mxu0
  %v5320 = vadd.f32 %v5190, %v5319
  %v5321 = vpop.f32.mrb[0].mxu0
  %5322 = vmatprep.mubr.bf16.mxu0 0
  %5323 = vmatmul.mubr.bf16.gmra.mrb[0].mxu0 %v5249
  %v5324 = vpop.f32.mrb[0].mxu0
  %v5325 = vadd.f32 %v5195, %v5324
  %v5326 = vpop.f32.mrb[0].mxu0
  %v5327 = vpop.f32.mrb[0].mxu0
  %v5328 = vadd.f32 %v5200, %v5327
  %v5329 = vpop.f32.mrb[0].mxu0
  %5330 = vmatprep.mubr.bf16.mxu0 0
  %5331 = vmatmul.mubr.bf16.gmra.mrb[0].mxu0 %v5252
  %v5332 = vpop.f32.mrb[0].mxu0
  %v5333 = vadd.f32 %v5205, %v5332
  %v5334 = vpop.f32.mrb[0].mxu0
  %v5335 = vpop.f32.mrb[0].mxu0
  %v5336 = vpop.f32.mrb[0].mxu0
  %5337 = vdwg.mxu0
  %v5338 = vmax.f32 %v5293, 0.0
  %v5339 = vmax.f32 %v5296, 0.0
  %v5340 = vmax.f32 %v5301, 0.0
  %v5341 = vmax.f32 %v5304, 0.0
  %v5342 = vmax.f32 %v5309, 0.0
  %v5343 = vmax.f32 %v5312, 0.0
  %v5344 = vmax.f32 %v5317, 0.0
  %v5345 = vmax.f32 %v5320, 0.0
  %v5346 = vmax.f32 %v5325, 0.0
  %v5347 = vmax.f32 %v5328, 0.0
  %v5348 = vmax.f32 %v5333, 0.0
  %v5349 = vld [vmem:[%s9] sm:$0xf]
  %v5350 = vld [vmem:[%s9 + $0x4] sm:$0x1]
  %v5351 = vpack.c.bf16 %v5339, %v5338
  %v5352 = vpack.c.bf16 %v5341, %v5340
  %v5353 = vpack.c.bf16 %v5343, %v5342
  %v5354 = vpack.c.bf16 %v5345, %v5344
  %v5355 = vpack.c.bf16 %v5347, %v5346
  %v5356 = vpack.c.bf16 %v5348, %v5348
  %v5357 = vld [vmem:[%s10] sm:$0xff]
  %v5358 = vld [vmem:[%s10 + $0x8] sm:$0x3]
  %5360 = vset.pattern.permute.xlu0 0
  %5361 = vperm.xlu0 %5360, %v5357
  %v5362 = vpop.permute.xlu0 %5361
  %5365 = vset.pattern.permute.xlu0 0
  %5366 = vperm.xlu0 %5365, %v5358
  %v5367 = vpop.permute.xlu0 %5366
  %v5371 = vunpack.c.l.b16 %v5349
  %v5372 = vunpack.c.l.b16 %v5350
  %v5373 = vpack.c.b16 %v5372, %v5371
  %vm5374 = vcmask 687104
  %v5376 = vsel %vm5374, %v5373, 0
  %vm5378 = vcmask 1041408
  %v5380 = vsel %vm5378, %v5356, 0
  %5382 = vmatprep.subr.bf16.mxu0 0
  %5383 = vmatpush1.bf16.msra.mxu0 %v5351
  %5384 = vmatprep.subr.bf16.mxu0 0
  %5385 = vmatpush1.bf16.msra.mxu0 %v5352
  %5386 = vmatprep.subr.bf16.mxu0 0
  %5387 = vmatpush1.bf16.msra.mxu0 %v5353
  %5388 = vmatprep.subr.bf16.mxu0 0
  %5389 = vmatpush1.bf16.msra.mxu0 %v5354
  %5390 = vmatprep.subr.bf16.mxu0 0
  %5391 = vmatpush1.bf16.msra.mxu0 %v5355
  %5392 = vmatprep.subr.bf16.mxu0 0
  %5393 = vmatpush1.bf16.msra.mxu0 %v5380
  %5394 = vmatprep.subr.bf16.mxu0 0
  %5395 = vmatpush1.bf16.msra.mxu0 0
  %5396 = vmatprep.subr.bf16.mxu0 0
  %5397 = vmatpush1.bf16.msra.mxu0 0
  %5398 = vmatprep.subr.bf16.mxu0 0
  %5399 = vmatpush1.bf16.msra.mxu0 0
  %5400 = vmatprep.subr.bf16.mxu0 0
  %5401 = vmatpush1.bf16.msra.mxu0 0
  %5402 = vmatprep.subr.bf16.mxu0 0
  %5403 = vmatpush1.bf16.msra.mxu0 0
  %5404 = vmatprep.subr.bf16.mxu0 0
  %5405 = vmatpush1.bf16.msra.mxu0 0
  %5406 = vmatprep.subr.bf16.mxu0 0
  %5407 = vmatpush1.bf16.msra.mxu0 0
  %5408 = vmatprep.subr.bf16.mxu0 0
  %5409 = vmatpush1.bf16.msra.mxu0 0
  %5410 = vmatprep.subr.bf16.mxu0 0
  %5411 = vmatpush1.bf16.msra.mxu0 0
  %5412 = vmatprep.subr.bf16.mxu0 0
  %5413 = vmatpush1.bf16.msra.mxu0 0
  %5414 = vmatprep.mubr.bf16.mxu0 0
  %5415 = vmatmul.mubr.bf16.gmra.mrb[0].mxu0 %v5376
  %v5416 = vpop.f32.mrb[0].mxu0
  %v5417 = vadd.f32 %v5362, %v5416
  %v5418 = vpop.f32.mrb[0].mxu0
  %v5419 = vpop.f32.mrb[0].mxu0
  %v5420 = vadd.f32 %v5367, %v5419
  %v5421 = vpop.f32.mrb[0].mxu0
  %5422 = vdwg.mxu0
  %5423 = vst [vmem:[%s11] sm:$0xff] %v5417
  %5424 = vst [vmem:[%s11 + $0x8] sm:$0x3] %v5420
  // Predicated region
  $region74: #{model_forward.1} parent=0 // pred_check
    _
  $region75: #{model_forward.1} parent=0 // pred_check_branch
    %5426 = sbr.rel (0) target = $region77
  $region76: #{model_forward.1} parent=0 // pred_region
    _
  $region77: #{model_forward.1} parent=0 // pred_fallthru
    _
  // Predicated region
  $region78: #{model_forward.1} parent=0 // pred_check
    _
  $region79: #{model_forward.1} parent=0 // pred_check_branch
    %5428 = sbr.rel (0) target = $region81
  $region80: #{model_forward.1} parent=0 // pred_region
    _
  $region81: #{model_forward.1} parent=0 // pred_fallthru
    _

</llo_original>
